<compile_context>
chip_gen: v7x
topology: tpu7x:2x2x1
jax: 0.10.0
libtpu: 0.0.40
codegen_flags: <defaults>
</compile_context>

<pallas_src>
import jax
import jax.numpy as jnp
from jax.experimental import pallas as pl
from jax.experimental.pallas import tpu as pltpu


def _round_up(n, m):
    return ((n + m - 1) // m) * m


def _pick_vmem_limit():
    """Generation-aware scoped-VMEM limit (bytes)."""
    cap = None
    try:
        info = pltpu.get_tpu_info()
        cap = getattr(info, "vmem_capacity_bytes", None)
    except Exception:
        cap = None
    if not cap:
        cap = 64 * 1024 * 1024  # conservative default (v7x physical per-core VMEM)
    return min(int(cap * 3 // 4), 100 * 1024 * 1024)


def _fused_vmem_estimate(H, W, Cp, n_stages):
    """Rough per-grid-step VMEM footprint of the fused kernel (bytes)."""
    Wp = _round_up(W + 2, 8)
    tm = max(1, min(H, 2048 // max(W, 1)))
    slabs = 2 * (H + 2) * Wp * Cp * 2                 # 2 bf16 ping-pong slabs
    act_io = 2 * H * W * Cp * (2 + 4)                 # double-buffered in(bf16)+out(f32)
    weights = 2 * n_stages * 3 * 3 * Cp * Cp * 2      # double-buffered folded weights
    work = 2 * tm * W * Cp * (3 * 2 + 4)              # window (bf16) + f32 accumulator
    return slabs + act_io + weights + work + (1 << 20)


def _fused_stages(y, stage_params, Cp, *, final, vmem_limit):
    """Run a group of consecutive ConvBlock stages inside one pallas_call.

    y:            [B, H, W, Cp] bf16, channel-padded NHWC activation.
    stage_params: list of (w [Cout, Cin, 3, 3] f32, b [Cout] f32).
    final:        True -> emit f32 output; False -> bf16 (consumed by next group).
    Returns [B, H, W, Cp] (f32 if final else bf16).
    """
    B, H, W, _ = y.shape
    ns = len(stage_params)
    Wp = _round_up(W + 2, 8)

    # Fold the kh taps into the contraction: Wf[s][kw, kh*Cp + ci, co].
    w_list, b_list = [], []
    for (w, b) in stage_params:
        Cout, Cin, KH, KW = w.shape
        assert (KH, KW) == (3, 3)
        wt = jnp.transpose(w, (2, 3, 1, 0))                         # [kh, kw, Cin, Cout]
        wt = jnp.pad(wt, ((0, 0), (0, 0), (0, Cp - Cin), (0, Cp - Cout)))
        w_list.append(jnp.transpose(wt, (1, 0, 2, 3)).reshape(3, 3 * Cp, Cp))
        b_list.append(jnp.pad(b, (0, Cp - Cout)).reshape(1, Cp))
    w_f = jnp.stack(w_list).astype(jnp.bfloat16)                    # [ns, 3, 3Cp, Cp]
    b_f = jnp.stack(b_list).astype(jnp.float32)                     # [ns, 1, Cp]

    # Static row chunks: target ~2048 output pixels per matmul group.
    tm = max(1, min(H, 2048 // max(W, 1)))
    chunks, r = [], 0
    while r < H:
        chunks.append((r, min(tm, H - r)))
        r += tm

    out_dtype = jnp.float32 if final else jnp.bfloat16

    def kernel(x_ref, w_ref, b_ref, o_ref, slab_a, slab_b):
        # Zero both slabs once: halo ring, width padding and (for later stages)
        # the padded output channels must be exactly zero.
        slab_a[...] = jnp.zeros_like(slab_a)
        slab_b[...] = jnp.zeros_like(slab_b)
        # Place the (channel-padded, bf16) image into slab A's interior.
        slab_a[1:1 + H, 1:1 + W, :] = x_ref[0]
        slabs = (slab_a, slab_b)

        for s in range(ns):
            src = slabs[s % 2]
            dst = slabs[(s + 1) % 2]
            last = s == ns - 1
            for (r0, t) in chunks:
                # kh taps concatenated along channels: [t, Wp, 3*Cp] bf16.
                rows = jnp.concatenate(
                    [src[r0 + kh:r0 + kh + t, :, :] for kh in range(3)], axis=-1)
                acc = jnp.zeros((t * W, Cp), jnp.float32)
                for kw in range(3):
                    win = rows[:, kw:kw + W, :].reshape(t * W, 3 * Cp)
                    acc = acc + jnp.dot(win, w_ref[s, kw],
                                        preferred_element_type=jnp.float32)
                y_t = jnp.maximum(acc + b_ref[s], 0.0)              # bias + ReLU in f32
                if last:
                    o_ref[0, r0:r0 + t, :, :] = (
                        y_t.reshape(t, W, Cp).astype(o_ref.dtype))
                else:
                    dst[1 + r0:1 + r0 + t, 1:1 + W, :] = (
                        y_t.reshape(t, W, Cp).astype(jnp.bfloat16))

    return pl.pallas_call(
        kernel,
        out_shape=jax.ShapeDtypeStruct((B, H, W, Cp), out_dtype),
        grid_spec=pltpu.PrefetchScalarGridSpec(
            num_scalar_prefetch=0,
            grid=(B,),
            in_specs=[
                pl.BlockSpec((1, H, W, Cp), lambda b: (b, 0, 0, 0)),        # activation
                pl.BlockSpec((ns, 3, 3 * Cp, Cp), lambda b: (0, 0, 0, 0)),  # weights
                pl.BlockSpec((ns, 1, Cp), lambda b: (0, 0, 0)),             # bias
            ],
            out_specs=pl.BlockSpec((1, H, W, Cp), lambda b: (b, 0, 0, 0)),
            scratch_shapes=[
                pltpu.VMEM((H + 2, Wp, Cp), jnp.bfloat16),
                pltpu.VMEM((H + 2, Wp, Cp), jnp.bfloat16),
            ],
        ),
        compiler_params=pltpu.CompilerParams(
            dimension_semantics=("parallel",),
            vmem_limit_bytes=vmem_limit,
        ),
    )(y, w_f, b_f)


def conv_block(x_nchw, params):
    """ConvBlock forward (normalization='none', dropout in eval mode).

    x_nchw: [B, Cin, H, W] float32
    params: list of (conv_w [Cout, Cin, 3, 3], conv_b [Cout]) per stage.
    Returns [B, Cout, H, W] float32.
    """
    B, Cin0, H, W = x_nchw.shape
    Cout = params[-1][0].shape[0]
    cmax = max([Cin0] + [p[0].shape[0] for p in params]
               + [p[0].shape[1] for p in params])
    Cp = _round_up(cmax, 128)

    vmem_limit = _pick_vmem_limit()
    budget = int(vmem_limit * 0.8)

    # Single layout change + channel pad + bf16 cast, once, at the block entry.
    y = jnp.transpose(x_nchw, (0, 2, 3, 1)).astype(jnp.float32)
    y = jnp.pad(y, ((0, 0), (0, 0), (0, 0), (0, Cp - Cin0))).astype(jnp.bfloat16)

    # Greedily fuse as many consecutive stages per pallas_call as fit in VMEM.
    n = len(params)
    i = 0
    while i < n:
        g = 1
        while i + g < n and _fused_vmem_estimate(H, W, Cp, g + 1) <= budget:
            g += 1
        final = (i + g == n)
        y = _fused_stages(y, params[i:i + g], Cp, final=final, vmem_limit=vmem_limit)
        i += g

    # Drop channel padding once and return to NCHW.
    return jnp.transpose(y[..., :Cout], (0, 3, 1, 2))


def _reference_conv_block(x_nchw, params):
    """Pure-JAX reference with the same numerics (bf16 MXU operands, f32 accum)."""
    y = x_nchw.astype(jnp.float32)
    for (w, b) in params:
        yb = y.astype(jnp.bfloat16).astype(jnp.float32)
        wb = w.astype(jnp.bfloat16).astype(jnp.float32)
        y = jax.lax.conv_general_dilated(
            yb, wb, window_strides=(1, 1), padding=((1, 1), (1, 1)),
            dimension_numbers=("NCHW", "OIHW", "NCHW"))
        y = jnp.maximum(y + b[None, :, None, None], 0.0)
    return y


if __name__ == "__main__":
    key = jax.random.PRNGKey(0)

    B, Cin, H, W = 2, 4, 16, 16
    Cout, n_stages = 32, 2

    keys = jax.random.split(key, 1 + 2 * n_stages)
    x = jax.random.normal(keys[0], (B, Cin, H, W), dtype=jnp.float32)

    params = []
    cin = Cin
    for s in range(n_stages):
        w = 0.1 * jax.random.normal(keys[1 + 2 * s], (Cout, cin, 3, 3), dtype=jnp.float32)
        b = 0.1 * jax.random.normal(keys[2 + 2 * s], (Cout,), dtype=jnp.float32)
        params.append((w, b))
        cin = Cout

    fwd = jax.jit(conv_block)
    out = jax.block_until_ready(fwd(x, params))

    ref = _reference_conv_block(x, params)
    assert out.shape == (B, Cout, H, W), out.shape
    max_err = float(jnp.max(jnp.abs(out - ref)))
    assert jnp.allclose(out, ref, atol=1e-2, rtol=1e-2), max_err

    print("KERNEL_OK")
</pallas_src>

<mosaic_0001>
module attributes {stable_mosaic.version = 11 : i64} {
  func.func @kernel(%arg0: i32, %arg1: memref<1x16x16x128xbf16, #tpu.memory_space<vmem>>, %arg2: memref<2x3x384x128xbf16, #tpu.memory_space<vmem>>, %arg3: memref<2x1x128xf32, #tpu.memory_space<vmem>>, %arg4: memref<1x16x16x128xf32, #tpu.memory_space<vmem>>, %arg5: memref<18x24x128xbf16, #tpu.memory_space<vmem>>, %arg6: memref<18x24x128xbf16, #tpu.memory_space<vmem>>) attributes {dimension_semantics = [#tpu.dimension_semantics<parallel>], iteration_bounds = array<i64: 2>, scalar_prefetch = 0 : i64, scratch_operands = 2 : i64, tpu.core_type = #tpu.core_type<tc>, window_params = [{transform_indices = @transform_0, window_bounds = array<i64: 1, 16, 16, 128>}, {pipeline_mode = #tpu.pipeline_mode<synchronous>, transform_indices = @transform_1, window_bounds = array<i64: 2, 3, 384, 128>}, {pipeline_mode = #tpu.pipeline_mode<synchronous>, transform_indices = @transform_2, window_bounds = array<i64: 2, 1, 128>}, {transform_indices = @transform_3, window_bounds = array<i64: 1, 16, 16, 128>}]} {
    %cst = arith.constant 0.000000e+00 : bf16
    %0 = vector.broadcast %cst : bf16 to vector<18x24x128xbf16>
    %c0 = arith.constant 0 : index
    %c0_0 = arith.constant 0 : index
    %c0_1 = arith.constant 0 : index
    %1 = vector.load %arg5[%c0, %c0_0, %c0_1] : memref<18x24x128xbf16, #tpu.memory_space<vmem>>, vector<18x24x128xbf16>
    tpu.vector_store %arg5[%c0, %c0_0, %c0_1], %0 {strides = array<i32>} : memref<18x24x128xbf16, #tpu.memory_space<vmem>>, vector<18x24x128xbf16>,
    %cst_2 = arith.constant 0.000000e+00 : bf16
    %2 = vector.broadcast %cst_2 : bf16 to vector<18x24x128xbf16>
    %c0_3 = arith.constant 0 : index
    %c0_4 = arith.constant 0 : index
    %c0_5 = arith.constant 0 : index
    %3 = vector.load %arg6[%c0_3, %c0_4, %c0_5] : memref<18x24x128xbf16, #tpu.memory_space<vmem>>, vector<18x24x128xbf16>
    tpu.vector_store %arg6[%c0_3, %c0_4, %c0_5], %2 {strides = array<i32>} : memref<18x24x128xbf16, #tpu.memory_space<vmem>>, vector<18x24x128xbf16>,
    %c0_6 = arith.constant 0 : index
    %c0_7 = arith.constant 0 : index
    %c0_8 = arith.constant 0 : index
    %c0_9 = arith.constant 0 : index
    %4 = vector.load %arg1[%c0_6, %c0_7, %c0_8, %c0_9] : memref<1x16x16x128xbf16, #tpu.memory_space<vmem>>, vector<1x16x16x128xbf16>
    %5 = vector.shape_cast %4 : vector<1x16x16x128xbf16> to vector<16x16x128xbf16>
    %c1 = arith.constant 1 : index
    %c1_10 = arith.constant 1 : index
    %c0_11 = arith.constant 0 : index
    %6 = vector.load %arg5[%c1, %c1_10, %c0_11] : memref<18x24x128xbf16, #tpu.memory_space<vmem>>, vector<16x16x128xbf16>
    tpu.vector_store %arg5[%c1, %c1_10, %c0_11], %5 {strides = array<i32>} : memref<18x24x128xbf16, #tpu.memory_space<vmem>>, vector<16x16x128xbf16>,
    %c0_12 = arith.constant 0 : index
    %c0_13 = arith.constant 0 : index
    %c0_14 = arith.constant 0 : index
    %7 = vector.load %arg5[%c0_12, %c0_13, %c0_14] : memref<18x24x128xbf16, #tpu.memory_space<vmem>>, vector<16x24x128xbf16>
    %c1_15 = arith.constant 1 : index
    %c0_16 = arith.constant 0 : index
    %c0_17 = arith.constant 0 : index
    %8 = vector.load %arg5[%c1_15, %c0_16, %c0_17] : memref<18x24x128xbf16, #tpu.memory_space<vmem>>, vector<16x24x128xbf16>
    %c2 = arith.constant 2 : index
    %c0_18 = arith.constant 0 : index
    %c0_19 = arith.constant 0 : index
    %9 = vector.load %arg5[%c2, %c0_18, %c0_19] : memref<18x24x128xbf16, #tpu.memory_space<vmem>>, vector<16x24x128xbf16>
    %10 = tpu.concatenate %7, %8, %9 in 2 : vector<16x24x128xbf16>, vector<16x24x128xbf16>, vector<16x24x128xbf16> -> vector<16x24x384xbf16>
    %cst_20 = arith.constant 0.000000e+00 : f32
    %11 = vector.broadcast %cst_20 : f32 to vector<256x128xf32>
    %12 = vector.extract_strided_slice %10 {offsets = [0, 0, 0], sizes = [16, 16, 384], strides = [1, 1, 1]} : vector<16x24x384xbf16> to vector<16x16x384xbf16>
    %13 = vector.shape_cast %12 : vector<16x16x384xbf16> to vector<256x384xbf16>
    %c0_21 = arith.constant 0 : index
    %c0_22 = arith.constant 0 : index
    %c0_23 = arith.constant 0 : index
    %c0_24 = arith.constant 0 : index
    %14 = vector.load %arg2[%c0_21, %c0_22, %c0_23, %c0_24] : memref<2x3x384x128xbf16, #tpu.memory_space<vmem>>, vector<1x1x384x128xbf16>
    %15 = vector.shape_cast %14 : vector<1x1x384x128xbf16> to vector<384x128xbf16>
    %cst_25 = arith.constant dense<0.000000e+00> : vector<256x128xf32>
    %16 = tpu.matmul %13, %15, %cst_25 {dimension_numbers = #tpu.dot_dimension_numbers<[1], [0], [0], [1], [0, 0, 1, 1], [], []>} : vector<256x384xbf16>, vector<384x128xbf16>, vector<256x128xf32> -> vector<256x128xf32>
    %17 = arith.addf %11, %16 : vector<256x128xf32>
    %18 = vector.extract_strided_slice %10 {offsets = [0, 1, 0], sizes = [16, 16, 384], strides = [1, 1, 1]} : vector<16x24x384xbf16> to vector<16x16x384xbf16>
    %19 = vector.shape_cast %18 : vector<16x16x384xbf16> to vector<256x384xbf16>
    %c0_26 = arith.constant 0 : index
    %c1_27 = arith.constant 1 : index
    %c0_28 = arith.constant 0 : index
    %c0_29 = arith.constant 0 : index
    %20 = vector.load %arg2[%c0_26, %c1_27, %c0_28, %c0_29] : memref<2x3x384x128xbf16, #tpu.memory_space<vmem>>, vector<1x1x384x128xbf16>
    %21 = vector.shape_cast %20 : vector<1x1x384x128xbf16> to vector<384x128xbf16>
    %cst_30 = arith.constant dense<0.000000e+00> : vector<256x128xf32>
    %22 = tpu.matmul %19, %21, %cst_30 {dimension_numbers = #tpu.dot_dimension_numbers<[1], [0], [0], [1], [0, 0, 1, 1], [], []>} : vector<256x384xbf16>, vector<384x128xbf16>, vector<256x128xf32> -> vector<256x128xf32>
    %23 = arith.addf %17, %22 : vector<256x128xf32>
    %24 = vector.extract_strided_slice %10 {offsets = [0, 2, 0], sizes = [16, 16, 384], strides = [1, 1, 1]} : vector<16x24x384xbf16> to vector<16x16x384xbf16>
    %25 = vector.shape_cast %24 : vector<16x16x384xbf16> to vector<256x384xbf16>
    %c0_31 = arith.constant 0 : index
    %c2_32 = arith.constant 2 : index
    %c0_33 = arith.constant 0 : index
    %c0_34 = arith.constant 0 : index
    %26 = vector.load %arg2[%c0_31, %c2_32, %c0_33, %c0_34] : memref<2x3x384x128xbf16, #tpu.memory_space<vmem>>, vector<1x1x384x128xbf16>
    %27 = vector.shape_cast %26 : vector<1x1x384x128xbf16> to vector<384x128xbf16>
    %cst_35 = arith.constant dense<0.000000e+00> : vector<256x128xf32>
    %28 = tpu.matmul %25, %27, %cst_35 {dimension_numbers = #tpu.dot_dimension_numbers<[1], [0], [0], [1], [0, 0, 1, 1], [], []>} : vector<256x384xbf16>, vector<384x128xbf16>, vector<256x128xf32> -> vector<256x128xf32>
    %29 = arith.addf %23, %28 : vector<256x128xf32>
    %c0_36 = arith.constant 0 : index
    %c0_37 = arith.constant 0 : index
    %c0_38 = arith.constant 0 : index
    %30 = vector.load %arg3[%c0_36, %c0_37, %c0_38] : memref<2x1x128xf32, #tpu.memory_space<vmem>>, vector<1x1x128xf32>
    %31 = vector.shape_cast %30 : vector<1x1x128xf32> to vector<1x128xf32>
    %32 = vector.broadcast %31 : vector<1x128xf32> to vector<256x128xf32>
    %33 = arith.addf %29, %32 : vector<256x128xf32>
    %cst_39 = arith.constant 0.000000e+00 : f32
    %34 = vector.broadcast %cst_39 : f32 to vector<256x128xf32>
    %35 = arith.maximumf %33, %34 : vector<256x128xf32>
    %36 = vector.shape_cast %35 : vector<256x128xf32> to vector<16x16x128xf32>
    %37 = arith.truncf %36 : vector<16x16x128xf32> to vector<16x16x128xbf16>
    %c1_40 = arith.constant 1 : index
    %c1_41 = arith.constant 1 : index
    %c0_42 = arith.constant 0 : index
    %38 = vector.load %arg6[%c1_40, %c1_41, %c0_42] : memref<18x24x128xbf16, #tpu.memory_space<vmem>>, vector<16x16x128xbf16>
    tpu.vector_store %arg6[%c1_40, %c1_41, %c0_42], %37 {strides = array<i32>} : memref<18x24x128xbf16, #tpu.memory_space<vmem>>, vector<16x16x128xbf16>,
    %c0_43 = arith.constant 0 : index
    %c0_44 = arith.constant 0 : index
    %c0_45 = arith.constant 0 : index
    %39 = vector.load %arg6[%c0_43, %c0_44, %c0_45] : memref<18x24x128xbf16, #tpu.memory_space<vmem>>, vector<16x24x128xbf16>
    %c1_46 = arith.constant 1 : index
    %c0_47 = arith.constant 0 : index
    %c0_48 = arith.constant 0 : index
    %40 = vector.load %arg6[%c1_46, %c0_47, %c0_48] : memref<18x24x128xbf16, #tpu.memory_space<vmem>>, vector<16x24x128xbf16>
    %c2_49 = arith.constant 2 : index
    %c0_50 = arith.constant 0 : index
    %c0_51 = arith.constant 0 : index
    %41 = vector.load %arg6[%c2_49, %c0_50, %c0_51] : memref<18x24x128xbf16, #tpu.memory_space<vmem>>, vector<16x24x128xbf16>
    %42 = tpu.concatenate %39, %40, %41 in 2 : vector<16x24x128xbf16>, vector<16x24x128xbf16>, vector<16x24x128xbf16> -> vector<16x24x384xbf16>
    %cst_52 = arith.constant 0.000000e+00 : f32
    %43 = vector.broadcast %cst_52 : f32 to vector<256x128xf32>
    %44 = vector.extract_strided_slice %42 {offsets = [0, 0, 0], sizes = [16, 16, 384], strides = [1, 1, 1]} : vector<16x24x384xbf16> to vector<16x16x384xbf16>
    %45 = vector.shape_cast %44 : vector<16x16x384xbf16> to vector<256x384xbf16>
    %c1_53 = arith.constant 1 : index
    %c0_54 = arith.constant 0 : index
    %c0_55 = arith.constant 0 : index
    %c0_56 = arith.constant 0 : index
    %46 = vector.load %arg2[%c1_53, %c0_54, %c0_55, %c0_56] : memref<2x3x384x128xbf16, #tpu.memory_space<vmem>>, vector<1x1x384x128xbf16>
    %47 = vector.shape_cast %46 : vector<1x1x384x128xbf16> to vector<384x128xbf16>
    %cst_57 = arith.constant dense<0.000000e+00> : vector<256x128xf32>
    %48 = tpu.matmul %45, %47, %cst_57 {dimension_numbers = #tpu.dot_dimension_numbers<[1], [0], [0], [1], [0, 0, 1, 1], [], []>} : vector<256x384xbf16>, vector<384x128xbf16>, vector<256x128xf32> -> vector<256x128xf32>
    %49 = arith.addf %43, %48 : vector<256x128xf32>
    %50 = vector.extract_strided_slice %42 {offsets = [0, 1, 0], sizes = [16, 16, 384], strides = [1, 1, 1]} : vector<16x24x384xbf16> to vector<16x16x384xbf16>
    %51 = vector.shape_cast %50 : vector<16x16x384xbf16> to vector<256x384xbf16>
    %c1_58 = arith.constant 1 : index
    %c1_59 = arith.constant 1 : index
    %c0_60 = arith.constant 0 : index
    %c0_61 = arith.constant 0 : index
    %52 = vector.load %arg2[%c1_58, %c1_59, %c0_60, %c0_61] : memref<2x3x384x128xbf16, #tpu.memory_space<vmem>>, vector<1x1x384x128xbf16>
    %53 = vector.shape_cast %52 : vector<1x1x384x128xbf16> to vector<384x128xbf16>
    %cst_62 = arith.constant dense<0.000000e+00> : vector<256x128xf32>
    %54 = tpu.matmul %51, %53, %cst_62 {dimension_numbers = #tpu.dot_dimension_numbers<[1], [0], [0], [1], [0, 0, 1, 1], [], []>} : vector<256x384xbf16>, vector<384x128xbf16>, vector<256x128xf32> -> vector<256x128xf32>
    %55 = arith.addf %49, %54 : vector<256x128xf32>
    %56 = vector.extract_strided_slice %42 {offsets = [0, 2, 0], sizes = [16, 16, 384], strides = [1, 1, 1]} : vector<16x24x384xbf16> to vector<16x16x384xbf16>
    %57 = vector.shape_cast %56 : vector<16x16x384xbf16> to vector<256x384xbf16>
    %c1_63 = arith.constant 1 : index
    %c2_64 = arith.constant 2 : index
    %c0_65 = arith.constant 0 : index
    %c0_66 = arith.constant 0 : index
    %58 = vector.load %arg2[%c1_63, %c2_64, %c0_65, %c0_66] : memref<2x3x384x128xbf16, #tpu.memory_space<vmem>>, vector<1x1x384x128xbf16>
    %59 = vector.shape_cast %58 : vector<1x1x384x128xbf16> to vector<384x128xbf16>
    %cst_67 = arith.constant dense<0.000000e+00> : vector<256x128xf32>
    %60 = tpu.matmul %57, %59, %cst_67 {dimension_numbers = #tpu.dot_dimension_numbers<[1], [0], [0], [1], [0, 0, 1, 1], [], []>} : vector<256x384xbf16>, vector<384x128xbf16>, vector<256x128xf32> -> vector<256x128xf32>
    %61 = arith.addf %55, %60 : vector<256x128xf32>
    %c1_68 = arith.constant 1 : index
    %c0_69 = arith.constant 0 : index
    %c0_70 = arith.constant 0 : index
    %62 = vector.load %arg3[%c1_68, %c0_69, %c0_70] : memref<2x1x128xf32, #tpu.memory_space<vmem>>, vector<1x1x128xf32>
    %63 = vector.shape_cast %62 : vector<1x1x128xf32> to vector<1x128xf32>
    %64 = vector.broadcast %63 : vector<1x128xf32> to vector<256x128xf32>
    %65 = arith.addf %61, %64 : vector<256x128xf32>
    %cst_71 = arith.constant 0.000000e+00 : f32
    %66 = vector.broadcast %cst_71 : f32 to vector<256x128xf32>
    %67 = arith.maximumf %65, %66 : vector<256x128xf32>
    %68 = vector.shape_cast %67 : vector<256x128xf32> to vector<16x16x128xf32>
    %c0_72 = arith.constant 0 : index
    %c0_73 = arith.constant 0 : index
    %c0_74 = arith.constant 0 : index
    %c0_75 = arith.constant 0 : index
    %69 = vector.load %arg4[%c0_72, %c0_73, %c0_74, %c0_75] : memref<1x16x16x128xf32, #tpu.memory_space<vmem>>, vector<1x16x16x128xf32>
    %70 = vector.shape_cast %69 : vector<1x16x16x128xf32> to vector<16x16x128xf32>
    %71 = vector.shape_cast %68 : vector<16x16x128xf32> to vector<1x16x16x128xf32>
    tpu.vector_store %arg4[%c0_72, %c0_73, %c0_74, %c0_75], %71 {strides = array<i32>} : memref<1x16x16x128xf32, #tpu.memory_space<vmem>>, vector<1x16x16x128xf32>,
    return
  }
  func.func @transform_0(%arg0: i32) -> (i32, i32, i32, i32) {
    %c0_i32 = arith.constant 0 : i32
    %c0_i32_0 = arith.constant 0 : i32
    %c0_i32_1 = arith.constant 0 : i32
    %c0_i32_2 = arith.constant 0 : i32
    return %arg0, %c0_i32, %c0_i32_0, %c0_i32_1 : i32, i32, i32, i32
  }
  func.func @transform_1(%arg0: i32) -> (i32, i32, i32, i32) {
    %c0_i32 = arith.constant 0 : i32
    %c0_i32_0 = arith.constant 0 : i32
    %c0_i32_1 = arith.constant 0 : i32
    %c0_i32_2 = arith.constant 0 : i32
    %c0_i32_3 = arith.constant 0 : i32
    return %c0_i32, %c0_i32_0, %c0_i32_1, %c0_i32_2 : i32, i32, i32, i32
  }
  func.func @transform_2(%arg0: i32) -> (i32, i32, i32) {
    %c0_i32 = arith.constant 0 : i32
    %c0_i32_0 = arith.constant 0 : i32
    %c0_i32_1 = arith.constant 0 : i32
    %c0_i32_2 = arith.constant 0 : i32
    return %c0_i32, %c0_i32_0, %c0_i32_1 : i32, i32, i32
  }
  func.func @transform_3(%arg0: i32) -> (i32, i32, i32, i32) {
    %c0_i32 = arith.constant 0 : i32
    %c0_i32_0 = arith.constant 0 : i32
    %c0_i32_1 = arith.constant 0 : i32
    %c0_i32_2 = arith.constant 0 : i32
    return %arg0, %c0_i32, %c0_i32_0, %c0_i32_1 : i32, i32, i32, i32
  }
}

</mosaic_0001>

<llo_original>
// kernel: conv_block.1
$region0: #{conv_block.1}
  #allocation0 [shape = 'u32[]', space=smem, size = 0x4, offset = 0x4, fixed_abs, tag = 'smem constant byte address 0x4 - core index']
  #allocation1 [shape = 'u32[144,128]{1,0:T(1,128)}', space=vmem, size = 0x12000, scoped, tag = 'internal scratch']
  #allocation2 [shape = 'bf16[18,24,128]{2,1,0:T(8,128)(2,1)}', space=vmem, size = 0x1b000, scoped, tag = 'scratch operand']
  #allocation3 [shape = 'bf16[18,24,128]{2,1,0:T(8,128)(2,1)}', space=vmem, size = 0x1b000, scoped, tag = 'scratch operand']
  %s0 = inlined_call_operand.vmem [shape: bf16[2,16,16,128], index: 0, kind: input, shape index: {}]
  %s1 = inlined_call_operand.vmem [shape: bf16[2,3,384,128], index: 1, kind: input, shape index: {}]
  %s2 = inlined_call_operand.vmem [shape: f32[2,1,128], index: 2, kind: input, shape index: {}]
  %s3 = inlined_call_operand.vmem [shape: f32[2,16,16,128], index: 3, kind: output, shape index: {}]
  %s4 = sld [smem:[#allocation0]]
  $region45: #{conv_block.1} parent=0
    _
  %s6 = ssub.s32 1, %s4
  %s7 = scalar_select 0, %s6, %s4
  loop: start=0, step=1, limit=4
  $region2: #{conv_block.1} parent=0 // loop_pre_header
    _
  $region3: #{conv_block.1} parent=0 // loop_header
    %s9 = sphi 0, %s13
    %p10 = scmp.ge.s32.totalorder %s9, 4
    %s19 = sphi 0, %s21
    %s22 = sphi 0, %s19
    %s23 = sphi 0, %s22
    %s39 = sphi 0, %s23
    %s43 = sphi 0, %s43
    %s45 = sphi 0, %s43
    %s46 = sphi 0, %s45
    %s60 = sphi 0, %s46
    %s64 = sphi 0, %s64
    %s66 = sphi 0, %s64
    %s67 = sphi 0, %s66
    %s81 = sphi 0, %s67
    %s87 = sphi 0, %s89
    %s90 = sphi 0, %s87
    %s91 = sphi 0, %s90
    %s107 = sphi 0, %s91
  $region4: #{conv_block.1} parent=0 // loop_header_branch
    %12 = sbr.rel (%p10) target = $region8
  $region5: #{conv_block.1} parent=0 // loop_body
    %s14 = ssub.s32 %s9, 1
    %s15 = ssub.s32 %s9, 2
    %s16 = sadd.s32 %s9, 1
    %s17 = ssub.s32 %s9, %s16
    %p18 = scmp.eq.s32.totalorder %s17, 0
    %s20 = sadd.s32 %s19, 1
    %s21 = scalar_select %p18, %s19, %s20
    %p24 = pneg %p18
    %p25 = scmp.eq.s32.totalorder %s9, 1
    %p26 = por %p24, %p25
    %p27 = scmp.ne.s32.totalorder %s19, %s22
    %p28 = scmp.eq.s32.totalorder %s9, 0
    %p29 = por %p27, %p28
    %p30 = scmp.ne.s32.totalorder %s19, %s22
    %p31 = scmp.eq.s32.totalorder %s14, 1
    %p32 = por %p30, %p31
    %p33 = scmp.ne.s32.totalorder %s22, %s23
    %p34 = scmp.eq.s32.totalorder %s14, 0
    %p35 = por %p33, %p34
    %p36 = scmp.ne.s32.totalorder %s22, %s23
    %p37 = scmp.eq.s32.totalorder %s15, 1
    %p38 = por %p36, %p37
    %p40 = scmp.ne.s32.totalorder %s23, %s39
    %p41 = scmp.eq.s32.totalorder %s15, 0
    %p42 = por %p40, %p41
    %s44 = sadd.s32 %s43, 1
    %p47 = scmp.eq.s32.totalorder %s9, 1
    %p48 = scmp.ne.s32.totalorder %s43, %s45
    %p49 = scmp.eq.s32.totalorder %s9, 0
    %p50 = por %p48, %p49
    %p51 = scmp.ne.s32.totalorder %s43, %s45
    %p52 = scmp.eq.s32.totalorder %s14, 1
    %p53 = por %p51, %p52
    %p54 = scmp.ne.s32.totalorder %s45, %s46
    %p55 = scmp.eq.s32.totalorder %s14, 0
    %p56 = por %p54, %p55
    %p57 = scmp.ne.s32.totalorder %s45, %s46
    %p58 = scmp.eq.s32.totalorder %s15, 1
    %p59 = por %p57, %p58
    %p61 = scmp.ne.s32.totalorder %s46, %s60
    %p62 = scmp.eq.s32.totalorder %s15, 0
    %p63 = por %p61, %p62
    %s65 = sadd.s32 %s64, 1
    %p68 = scmp.eq.s32.totalorder %s9, 1
    %p69 = scmp.ne.s32.totalorder %s64, %s66
    %p70 = scmp.eq.s32.totalorder %s9, 0
    %p71 = por %p69, %p70
    %p72 = scmp.ne.s32.totalorder %s64, %s66
    %p73 = scmp.eq.s32.totalorder %s14, 1
    %p74 = por %p72, %p73
    %p75 = scmp.ne.s32.totalorder %s66, %s67
    %p76 = scmp.eq.s32.totalorder %s14, 0
    %p77 = por %p75, %p76
    %p78 = scmp.ne.s32.totalorder %s66, %s67
    %p79 = scmp.eq.s32.totalorder %s15, 1
    %p80 = por %p78, %p79
    %p82 = scmp.ne.s32.totalorder %s67, %s81
    %p83 = scmp.eq.s32.totalorder %s15, 0
    %p84 = por %p82, %p83
    %s85 = ssub.s32 %s9, %s16
    %p86 = scmp.eq.s32.totalorder %s85, 0
    %s88 = sadd.s32 %s87, 1
    %s89 = scalar_select %p86, %s87, %s88
    %p92 = pneg %p86
    %p93 = scmp.eq.s32.totalorder %s9, 1
    %p94 = por %p92, %p93
    %p95 = scmp.ne.s32.totalorder %s87, %s90
    %p96 = scmp.eq.s32.totalorder %s9, 0
    %p97 = por %p95, %p96
    %p98 = scmp.ne.s32.totalorder %s87, %s90
    %p99 = scmp.eq.s32.totalorder %s14, 1
    %p100 = por %p98, %p99
    %p101 = scmp.ne.s32.totalorder %s90, %s91
    %p102 = scmp.eq.s32.totalorder %s14, 0
    %p103 = por %p101, %p102
    %p104 = scmp.ne.s32.totalorder %s90, %s91
    %p105 = scmp.eq.s32.totalorder %s15, 1
    %p106 = por %p104, %p105
    %p108 = scmp.ne.s32.totalorder %s91, %s107
    %p109 = scmp.eq.s32.totalorder %s15, 0
    %p110 = por %p108, %p109
    %p111 = scmp.le.s32.totalorder 1, %s9
    %p112 = scmp.lt.s32.totalorder %s9, 3
    %p113 = pnand %p111, %p112
    %p114 = pneg %p113
    // Predicated region
    $region9: #{conv_block.1} parent=5 // pred_check
      _
    $region10: #{conv_block.1} parent=5 // pred_check_branch
      %116 = sbr.rel (%p113) target = $region12
    $region11: #{conv_block.1} parent=5 // pred_region
      %s117 = ssub.s32 %s9, 1
      // Predicated region
      $region13: #{conv_block.1} parent=11 // pred_check
        %p118 = pneg %p56
      $region14: #{conv_block.1} parent=11 // pred_check_branch
        %120 = sbr.rel (%p118) target = $region16
      $region15: #{conv_block.1} parent=11 // pred_region
        _
      $region16: #{conv_block.1} parent=11 // pred_fallthru
        _
      // Predicated region
      $region17: #{conv_block.1} parent=11 // pred_check
        %p121 = pneg %p77
      $region18: #{conv_block.1} parent=11 // pred_check_branch
        %123 = sbr.rel (%p121) target = $region20
      $region19: #{conv_block.1} parent=11 // pred_region
        _
      $region20: #{conv_block.1} parent=11 // pred_fallthru
        _
    $region12: #{conv_block.1} parent=5 // pred_fallthru
      _
    %p124 = scmp.lt.s32.totalorder %s9, 2
    // Predicated region
    $region21: #{conv_block.1} parent=5 // pred_check
      %p125 = pneg %p124
    $region22: #{conv_block.1} parent=5 // pred_check_branch
      %127 = sbr.rel (%p125) target = $region24
    $region23: #{conv_block.1} parent=5 // pred_region
      // Predicated region
      $region25: #{conv_block.1} parent=23 // pred_check
        %p128 = pneg %p29
      $region26: #{conv_block.1} parent=23 // pred_check_branch
        %130 = sbr.rel (%p128) target = $region28
      $region27: #{conv_block.1} parent=23 // pred_region
        %p131 = scmp.lt.s32.totalorder %s9, 1
        %s132 = scalar_select %p131, %s9, 1
        %s133 = smul.addr %s132, 32
        %s134 = smul.addr %s133, 4
        %s135 = scalar_lea.vmem %s0, %s134
      $region28: #{conv_block.1} parent=23 // pred_fallthru
        _
    $region24: #{conv_block.1} parent=5 // pred_fallthru
      _
    %p136 = scmp.le.s32.totalorder 1, %s9
    %p137 = scmp.lt.s32.totalorder %s9, 3
    %p138 = pnand %p136, %p137
    %p139 = pneg %p138
    // Predicated region
    $region29: #{conv_block.1} parent=5 // pred_check
      _
    $region30: #{conv_block.1} parent=5 // pred_check_branch
      %141 = sbr.rel (%p138) target = $region32
    $region31: #{conv_block.1} parent=5 // pred_region
      %s142 = ssub.s32 %s9, 1
      %p143 = scmp.lt.s32.totalorder %s14, 1
      %s144 = scalar_select %p143, %s14, 1
      %s145 = smul.addr %s144, 32
      %s146 = smul.addr %s145, 4
      %s147 = scalar_lea.vmem %s0, %s146
      %p148 = pneg %p35
      %p149 = pneg %p32
      %p150 = pneg %p56
      %p151 = pneg %p53
      %p152 = pneg %p77
      %p153 = pneg %p74
      %p154 = pneg %p103
      %p155 = pneg %p100
      %p156 = scmp.lt.s32.totalorder %s14, 1
      %s157 = scalar_select %p156, %s14, 1
      %s158 = smul.addr %s157, 32
      %s159 = smul.addr %s158, 8
      %s160 = scalar_lea.vmem %s3, %s159
      %p161 = scmp.lt.s32.totalorder %s14, 1
      %s162 = scalar_select %p161, %s14, 1
      %s163 = smul.addr %s162, 32
      %s164 = smul.addr %s163, 4
      %s165 = scalar_lea.vmem %s0, %s164
      %p166 = scmp.lt.s32.totalorder %s14, 1
      %s167 = scalar_select %p166, %s14, 1
      %s168 = smul.addr %s167, 32
      %s169 = smul.addr %s168, 8
      %s170 = scalar_lea.vmem %s3, %s169
      %172 = vst [vmem:[#allocation2] sm:$0xf] 0
      %173 = vst [vmem:[#allocation2 + $0x4] sm:$0xf] 0
      %174 = vst [vmem:[#allocation2 + $0x8] sm:$0xf] 0
      %175 = vst [vmem:[#allocation2 + $0xc] sm:$0xf] 0
      %176 = vst [vmem:[#allocation2 + $0x10] sm:$0xf] 0
      %177 = vst [vmem:[#allocation2 + $0x14] sm:$0xf] 0
      %178 = vst [vmem:[#allocation2 + $0x18] sm:$0xf] 0
      %179 = vst [vmem:[#allocation2 + $0x1c] sm:$0xf] 0
      %180 = vst [vmem:[#allocation2 + $0x20] sm:$0xf] 0
      %181 = vst [vmem:[#allocation2 + $0x24] sm:$0xf] 0
      %182 = vst [vmem:[#allocation2 + $0x28] sm:$0xf] 0
      %183 = vst [vmem:[#allocation2 + $0x2c] sm:$0xf] 0
      %184 = vst [vmem:[#allocation2 + $0x30] sm:$0xf] 0
      %185 = vst [vmem:[#allocation2 + $0x34] sm:$0xf] 0
      %186 = vst [vmem:[#allocation2 + $0x38] sm:$0xf] 0
      %187 = vst [vmem:[#allocation2 + $0x3c] sm:$0xf] 0
      %188 = vst [vmem:[#allocation2 + $0x40] sm:$0xf] 0
      %189 = vst [vmem:[#allocation2 + $0x44] sm:$0xf] 0
      %190 = vst [vmem:[#allocation2 + $0x48] sm:$0xf] 0
      %191 = vst [vmem:[#allocation2 + $0x4c] sm:$0xf] 0
      %192 = vst [vmem:[#allocation2 + $0x50] sm:$0xf] 0
      %193 = vst [vmem:[#allocation2 + $0x54] sm:$0xf] 0
      %194 = vst [vmem:[#allocation2 + $0x58] sm:$0xf] 0
      %195 = vst [vmem:[#allocation2 + $0x5c] sm:$0xf] 0
      %196 = vst [vmem:[#allocation2 + $0x60] sm:$0xf] 0
      %197 = vst [vmem:[#allocation2 + $0x64] sm:$0xf] 0
      %198 = vst [vmem:[#allocation2 + $0x68] sm:$0xf] 0
      %199 = vst [vmem:[#allocation2 + $0x6c] sm:$0xf] 0
      %200 = vst [vmem:[#allocation2 + $0x70] sm:$0xf] 0
      %201 = vst [vmem:[#allocation2 + $0x74] sm:$0xf] 0
      %202 = vst [vmem:[#allocation2 + $0x78] sm:$0xf] 0
      %203 = vst [vmem:[#allocation2 + $0x7c] sm:$0xf] 0
      %204 = vst [vmem:[#allocation2 + $0x80] sm:$0xf] 0
      %205 = vst [vmem:[#allocation2 + $0x84] sm:$0xf] 0
      %206 = vst [vmem:[#allocation2 + $0x88] sm:$0xf] 0
      %207 = vst [vmem:[#allocation2 + $0x8c] sm:$0xf] 0
      %208 = vst [vmem:[#allocation2 + $0x90] sm:$0xf] 0
      %209 = vst [vmem:[#allocation2 + $0x94] sm:$0xf] 0
      %210 = vst [vmem:[#allocation2 + $0x98] sm:$0xf] 0
      %211 = vst [vmem:[#allocation2 + $0x9c] sm:$0xf] 0
      %212 = vst [vmem:[#allocation2 + $0xa0] sm:$0xf] 0
      %213 = vst [vmem:[#allocation2 + $0xa4] sm:$0xf] 0
      %214 = vst [vmem:[#allocation2 + $0xa8] sm:$0xf] 0
      %215 = vst [vmem:[#allocation2 + $0xac] sm:$0xf] 0
      %216 = vst [vmem:[#allocation2 + $0xb0] sm:$0xf] 0
      %217 = vst [vmem:[#allocation2 + $0xb4] sm:$0xf] 0
      %218 = vst [vmem:[#allocation2 + $0xb8] sm:$0xf] 0
      %219 = vst [vmem:[#allocation2 + $0xbc] sm:$0xf] 0
      %220 = vst [vmem:[#allocation2 + $0xc0] sm:$0xf] 0
      %221 = vst [vmem:[#allocation2 + $0xc4] sm:$0xf] 0
      %222 = vst [vmem:[#allocation2 + $0xc8] sm:$0xf] 0
      %223 = vst [vmem:[#allocation2 + $0xcc] sm:$0xf] 0
      %224 = vst [vmem:[#allocation2 + $0xd0] sm:$0xf] 0
      %225 = vst [vmem:[#allocation2 + $0xd4] sm:$0xf] 0
      %226 = vst [vmem:[#allocation3] sm:$0xf] 0
      %227 = vst [vmem:[#allocation3 + $0x4] sm:$0xf] 0
      %228 = vst [vmem:[#allocation3 + $0x8] sm:$0xf] 0
      %229 = vst [vmem:[#allocation3 + $0xc] sm:$0xf] 0
      %230 = vst [vmem:[#allocation3 + $0x10] sm:$0xf] 0
      %231 = vst [vmem:[#allocation3 + $0x14] sm:$0xf] 0
      %232 = vst [vmem:[#allocation3 + $0x18] sm:$0xf] 0
      %233 = vst [vmem:[#allocation3 + $0x1c] sm:$0xf] 0
      %234 = vst [vmem:[#allocation3 + $0x20] sm:$0xf] 0
      %235 = vst [vmem:[#allocation3 + $0x24] sm:$0xf] 0
      %236 = vst [vmem:[#allocation3 + $0x28] sm:$0xf] 0
      %237 = vst [vmem:[#allocation3 + $0x2c] sm:$0xf] 0
      %238 = vst [vmem:[#allocation3 + $0x30] sm:$0xf] 0
      %239 = vst [vmem:[#allocation3 + $0x34] sm:$0xf] 0
      %240 = vst [vmem:[#allocation3 + $0x38] sm:$0xf] 0
      %241 = vst [vmem:[#allocation3 + $0x3c] sm:$0xf] 0
      %242 = vst [vmem:[#allocation3 + $0x40] sm:$0xf] 0
      %243 = vst [vmem:[#allocation3 + $0x44] sm:$0xf] 0
      %244 = vst [vmem:[#allocation3 + $0x48] sm:$0xf] 0
      %245 = vst [vmem:[#allocation3 + $0x4c] sm:$0xf] 0
      %246 = vst [vmem:[#allocation3 + $0x50] sm:$0xf] 0
      %247 = vst [vmem:[#allocation3 + $0x54] sm:$0xf] 0
      %248 = vst [vmem:[#allocation3 + $0x58] sm:$0xf] 0
      %249 = vst [vmem:[#allocation3 + $0x5c] sm:$0xf] 0
      %250 = vst [vmem:[#allocation3 + $0x60] sm:$0xf] 0
      %251 = vst [vmem:[#allocation3 + $0x64] sm:$0xf] 0
      %252 = vst [vmem:[#allocation3 + $0x68] sm:$0xf] 0
      %253 = vst [vmem:[#allocation3 + $0x6c] sm:$0xf] 0
      %254 = vst [vmem:[#allocation3 + $0x70] sm:$0xf] 0
      %255 = vst [vmem:[#allocation3 + $0x74] sm:$0xf] 0
      %256 = vst [vmem:[#allocation3 + $0x78] sm:$0xf] 0
      %257 = vst [vmem:[#allocation3 + $0x7c] sm:$0xf] 0
      %258 = vst [vmem:[#allocation3 + $0x80] sm:$0xf] 0
      %259 = vst [vmem:[#allocation3 + $0x84] sm:$0xf] 0
      %260 = vst [vmem:[#allocation3 + $0x88] sm:$0xf] 0
      %261 = vst [vmem:[#allocation3 + $0x8c] sm:$0xf] 0
      %262 = vst [vmem:[#allocation3 + $0x90] sm:$0xf] 0
      %263 = vst [vmem:[#allocation3 + $0x94] sm:$0xf] 0
      %264 = vst [vmem:[#allocation3 + $0x98] sm:$0xf] 0
      %265 = vst [vmem:[#allocation3 + $0x9c] sm:$0xf] 0
      %266 = vst [vmem:[#allocation3 + $0xa0] sm:$0xf] 0
      %267 = vst [vmem:[#allocation3 + $0xa4] sm:$0xf] 0
      %268 = vst [vmem:[#allocation3 + $0xa8] sm:$0xf] 0
      %269 = vst [vmem:[#allocation3 + $0xac] sm:$0xf] 0
      %270 = vst [vmem:[#allocation3 + $0xb0] sm:$0xf] 0
      %271 = vst [vmem:[#allocation3 + $0xb4] sm:$0xf] 0
      %272 = vst [vmem:[#allocation3 + $0xb8] sm:$0xf] 0
      %273 = vst [vmem:[#allocation3 + $0xbc] sm:$0xf] 0
      %274 = vst [vmem:[#allocation3 + $0xc0] sm:$0xf] 0
      %275 = vst [vmem:[#allocation3 + $0xc4] sm:$0xf] 0
      %276 = vst [vmem:[#allocation3 + $0xc8] sm:$0xf] 0
      %277 = vst [vmem:[#allocation3 + $0xcc] sm:$0xf] 0
      %278 = vst [vmem:[#allocation3 + $0xd0] sm:$0xf] 0
      %279 = vst [vmem:[#allocation3 + $0xd4] sm:$0xf] 0
      %v280 = vld [vmem:[%s165] sm:$0xf]
      %v281 = vld [vmem:[%s165 + $0x4] sm:$0xf]
      %v282 = vld [vmem:[%s165 + $0x8] sm:$0xf]
      %v283 = vld [vmem:[%s165 + $0xc] sm:$0xf]
      %v284 = vld [vmem:[%s165 + $0x10] sm:$0xf]
      %v285 = vld [vmem:[%s165 + $0x14] sm:$0xf]
      %v286 = vld [vmem:[%s165 + $0x18] sm:$0xf]
      %v287 = vld [vmem:[%s165 + $0x1c] sm:$0xf]
      %v288 = vld [vmem:[%s165 + $0x20] sm:$0xf]
      %v289 = vld [vmem:[%s165 + $0x24] sm:$0xf]
      %v290 = vld [vmem:[%s165 + $0x28] sm:$0xf]
      %v291 = vld [vmem:[%s165 + $0x2c] sm:$0xf]
      %v292 = vld [vmem:[%s165 + $0x30] sm:$0xf]
      %v293 = vld [vmem:[%s165 + $0x34] sm:$0xf]
      %v294 = vld [vmem:[%s165 + $0x38] sm:$0xf]
      %v295 = vld [vmem:[%s165 + $0x3c] sm:$0xf]
      %v296 = vld [vmem:[%s165 + $0x40] sm:$0xf]
      %v297 = vld [vmem:[%s165 + $0x44] sm:$0xf]
      %v298 = vld [vmem:[%s165 + $0x48] sm:$0xf]
      %v299 = vld [vmem:[%s165 + $0x4c] sm:$0xf]
      %v300 = vld [vmem:[%s165 + $0x50] sm:$0xf]
      %v301 = vld [vmem:[%s165 + $0x54] sm:$0xf]
      %v302 = vld [vmem:[%s165 + $0x58] sm:$0xf]
      %v303 = vld [vmem:[%s165 + $0x5c] sm:$0xf]
      %v304 = vld [vmem:[%s165 + $0x60] sm:$0xf]
      %v305 = vld [vmem:[%s165 + $0x64] sm:$0xf]
      %v306 = vld [vmem:[%s165 + $0x68] sm:$0xf]
      %v307 = vld [vmem:[%s165 + $0x6c] sm:$0xf]
      %v308 = vld [vmem:[%s165 + $0x70] sm:$0xf]
      %v309 = vld [vmem:[%s165 + $0x74] sm:$0xf]
      %v310 = vld [vmem:[%s165 + $0x78] sm:$0xf]
      %v311 = vld [vmem:[%s165 + $0x7c] sm:$0xf]
      %vm312 = vsmask.f32 256
      %vm313 = vsmask.f32 4368
      %vm314 = vmor %vm312, %vm313
      %v316 = vshrl.u32 %v280, 16
      %v318 = vrot.slane %v316, 7
      %v319 = vshll.u32 %v280, 16
      %v321 = vor.u32 %v318, %v319
      %v322 = vrot.slane %v318, 4
      %v324 = vshrl.u32 %v281, 16
      %v326 = vrot.slane %v324, 7
      %v327 = vshll.u32 %v281, 16
      %v329 = vor.u32 %v326, %v327
      %v330 = vsel %vm314, %v322, %v329
      %v331 = vrot.slane %v326, 4
      %v333 = vshrl.u32 %v282, 16
      %v335 = vrot.slane %v333, 7
      %v336 = vshll.u32 %v282, 16
      %v338 = vor.u32 %v335, %v336
      %v339 = vrot.slane %v335, 4
      %v341 = vshrl.u32 %v283, 16
      %v343 = vrot.slane %v341, 7
      %v344 = vshll.u32 %v283, 16
      %v346 = vor.u32 %v343, %v344
      %v347 = vsel %vm314, %v339, %v346
      %v348 = vrot.slane %v343, 4
      %v350 = vshrl.u32 %v284, 16
      %v352 = vrot.slane %v350, 7
      %v353 = vshll.u32 %v284, 16
      %v355 = vor.u32 %v352, %v353
      %v356 = vrot.slane %v352, 4
      %v358 = vshrl.u32 %v285, 16
      %v360 = vrot.slane %v358, 7
      %v361 = vshll.u32 %v285, 16
      %v363 = vor.u32 %v360, %v361
      %v364 = vsel %vm314, %v356, %v363
      %v365 = vrot.slane %v360, 4
      %v367 = vshrl.u32 %v286, 16
      %v369 = vrot.slane %v367, 7
      %v370 = vshll.u32 %v286, 16
      %v372 = vor.u32 %v369, %v370
      %v373 = vrot.slane %v369, 4
      %v375 = vshrl.u32 %v287, 16
      %v377 = vrot.slane %v375, 7
      %v378 = vshll.u32 %v287, 16
      %v380 = vor.u32 %v377, %v378
      %v381 = vsel %vm314, %v373, %v380
      %v382 = vrot.slane %v377, 4
      %v384 = vshrl.u32 %v288, 16
      %v386 = vrot.slane %v384, 7
      %v387 = vshll.u32 %v288, 16
      %v389 = vor.u32 %v386, %v387
      %v390 = vrot.slane %v386, 4
      %v392 = vshrl.u32 %v289, 16
      %v394 = vrot.slane %v392, 7
      %v395 = vshll.u32 %v289, 16
      %v397 = vor.u32 %v394, %v395
      %v398 = vsel %vm314, %v390, %v397
      %v399 = vrot.slane %v394, 4
      %v401 = vshrl.u32 %v290, 16
      %v403 = vrot.slane %v401, 7
      %v404 = vshll.u32 %v290, 16
      %v406 = vor.u32 %v403, %v404
      %v407 = vrot.slane %v403, 4
      %v409 = vshrl.u32 %v291, 16
      %v411 = vrot.slane %v409, 7
      %v412 = vshll.u32 %v291, 16
      %v414 = vor.u32 %v411, %v412
      %v415 = vsel %vm314, %v407, %v414
      %v416 = vrot.slane %v411, 4
      %v418 = vshrl.u32 %v292, 16
      %v420 = vrot.slane %v418, 7
      %v421 = vshll.u32 %v292, 16
      %v423 = vor.u32 %v420, %v421
      %v424 = vrot.slane %v420, 4
      %v426 = vshrl.u32 %v293, 16
      %v428 = vrot.slane %v426, 7
      %v429 = vshll.u32 %v293, 16
      %v431 = vor.u32 %v428, %v429
      %v432 = vsel %vm314, %v424, %v431
      %v433 = vrot.slane %v428, 4
      %v435 = vshrl.u32 %v294, 16
      %v437 = vrot.slane %v435, 7
      %v438 = vshll.u32 %v294, 16
      %v440 = vor.u32 %v437, %v438
      %v441 = vrot.slane %v437, 4
      %v443 = vshrl.u32 %v295, 16
      %v445 = vrot.slane %v443, 7
      %v446 = vshll.u32 %v295, 16
      %v448 = vor.u32 %v445, %v446
      %v449 = vsel %vm314, %v441, %v448
      %v450 = vrot.slane %v445, 4
      %v452 = vshrl.u32 %v296, 16
      %v454 = vrot.slane %v452, 7
      %v455 = vshll.u32 %v296, 16
      %v457 = vor.u32 %v454, %v455
      %v458 = vrot.slane %v454, 4
      %v460 = vshrl.u32 %v297, 16
      %v462 = vrot.slane %v460, 7
      %v463 = vshll.u32 %v297, 16
      %v465 = vor.u32 %v462, %v463
      %v466 = vsel %vm314, %v458, %v465
      %v467 = vrot.slane %v462, 4
      %v469 = vshrl.u32 %v298, 16
      %v471 = vrot.slane %v469, 7
      %v472 = vshll.u32 %v298, 16
      %v474 = vor.u32 %v471, %v472
      %v475 = vrot.slane %v471, 4
      %v477 = vshrl.u32 %v299, 16
      %v479 = vrot.slane %v477, 7
      %v480 = vshll.u32 %v299, 16
      %v482 = vor.u32 %v479, %v480
      %v483 = vsel %vm314, %v475, %v482
      %v484 = vrot.slane %v479, 4
      %v486 = vshrl.u32 %v300, 16
      %v488 = vrot.slane %v486, 7
      %v489 = vshll.u32 %v300, 16
      %v491 = vor.u32 %v488, %v489
      %v492 = vrot.slane %v488, 4
      %v494 = vshrl.u32 %v301, 16
      %v496 = vrot.slane %v494, 7
      %v497 = vshll.u32 %v301, 16
      %v499 = vor.u32 %v496, %v497
      %v500 = vsel %vm314, %v492, %v499
      %v501 = vrot.slane %v496, 4
      %v503 = vshrl.u32 %v302, 16
      %v505 = vrot.slane %v503, 7
      %v506 = vshll.u32 %v302, 16
      %v508 = vor.u32 %v505, %v506
      %v509 = vrot.slane %v505, 4
      %v511 = vshrl.u32 %v303, 16
      %v513 = vrot.slane %v511, 7
      %v514 = vshll.u32 %v303, 16
      %v516 = vor.u32 %v513, %v514
      %v517 = vsel %vm314, %v509, %v516
      %v518 = vrot.slane %v513, 4
      %v520 = vshrl.u32 %v304, 16
      %v522 = vrot.slane %v520, 7
      %v523 = vshll.u32 %v304, 16
      %v525 = vor.u32 %v522, %v523
      %v526 = vrot.slane %v522, 4
      %v528 = vshrl.u32 %v305, 16
      %v530 = vrot.slane %v528, 7
      %v531 = vshll.u32 %v305, 16
      %v533 = vor.u32 %v530, %v531
      %v534 = vsel %vm314, %v526, %v533
      %v535 = vrot.slane %v530, 4
      %v537 = vshrl.u32 %v306, 16
      %v539 = vrot.slane %v537, 7
      %v540 = vshll.u32 %v306, 16
      %v542 = vor.u32 %v539, %v540
      %v543 = vrot.slane %v539, 4
      %v545 = vshrl.u32 %v307, 16
      %v547 = vrot.slane %v545, 7
      %v548 = vshll.u32 %v307, 16
      %v550 = vor.u32 %v547, %v548
      %v551 = vsel %vm314, %v543, %v550
      %v552 = vrot.slane %v547, 4
      %v554 = vshrl.u32 %v308, 16
      %v556 = vrot.slane %v554, 7
      %v557 = vshll.u32 %v308, 16
      %v559 = vor.u32 %v556, %v557
      %v560 = vrot.slane %v556, 4
      %v562 = vshrl.u32 %v309, 16
      %v564 = vrot.slane %v562, 7
      %v565 = vshll.u32 %v309, 16
      %v567 = vor.u32 %v564, %v565
      %v568 = vsel %vm314, %v560, %v567
      %v569 = vrot.slane %v564, 4
      %v571 = vshrl.u32 %v310, 16
      %v573 = vrot.slane %v571, 7
      %v574 = vshll.u32 %v310, 16
      %v576 = vor.u32 %v573, %v574
      %v577 = vrot.slane %v573, 4
      %v579 = vshrl.u32 %v311, 16
      %v581 = vrot.slane %v579, 7
      %v582 = vshll.u32 %v311, 16
      %v584 = vor.u32 %v581, %v582
      %v585 = vsel %vm314, %v577, %v584
      %v586 = vrot.slane %v581, 4
      %s635 = scalar_lea.vmem [#allocation2], 12
      %vm636 = vcmask 1043456
      %vm637 = vsmask.f32 7938
      %vm638 = vmand %vm636, %vm637
      %v639 = vld [vmem:[%s635] sm:$0xf]
      %v640 = vsel %vm638, %v321, %v639
      %641 = vst [vmem:[%s635] sm:$0xf] %v640
      %642 = vst [vmem:[%s635 + $0x4] sm:$0xf] %v330
      %vm643 = vcmask 1040384
      %vm644 = vmand %vm643, %vm312
      %v645 = vld [vmem:[%s635 + $0x8] sm:$0x1]
      %v646 = vsel %vm644, %v331, %v645
      %647 = vst [vmem:[%s635 + $0x8] sm:$0x1] %v646
      %v648 = vld [vmem:[%s635 + $0xc] sm:$0xf]
      %v649 = vsel %vm638, %v338, %v648
      %650 = vst [vmem:[%s635 + $0xc] sm:$0xf] %v649
      %651 = vst [vmem:[%s635 + $0x10] sm:$0xf] %v347
      %v652 = vld [vmem:[%s635 + $0x14] sm:$0x1]
      %v653 = vsel %vm644, %v348, %v652
      %654 = vst [vmem:[%s635 + $0x14] sm:$0x1] %v653
      %v655 = vld [vmem:[%s635 + $0x18] sm:$0xf]
      %v656 = vsel %vm638, %v355, %v655
      %657 = vst [vmem:[%s635 + $0x18] sm:$0xf] %v656
      %658 = vst [vmem:[%s635 + $0x1c] sm:$0xf] %v364
      %v659 = vld [vmem:[%s635 + $0x20] sm:$0x1]
      %v660 = vsel %vm644, %v365, %v659
      %661 = vst [vmem:[%s635 + $0x20] sm:$0x1] %v660
      %v662 = vld [vmem:[%s635 + $0x24] sm:$0xf]
      %v663 = vsel %vm638, %v372, %v662
      %664 = vst [vmem:[%s635 + $0x24] sm:$0xf] %v663
      %665 = vst [vmem:[%s635 + $0x28] sm:$0xf] %v381
      %v666 = vld [vmem:[%s635 + $0x2c] sm:$0x1]
      %v667 = vsel %vm644, %v382, %v666
      %668 = vst [vmem:[%s635 + $0x2c] sm:$0x1] %v667
      %v669 = vld [vmem:[%s635 + $0x30] sm:$0xf]
      %v670 = vsel %vm638, %v389, %v669
      %671 = vst [vmem:[%s635 + $0x30] sm:$0xf] %v670
      %672 = vst [vmem:[%s635 + $0x34] sm:$0xf] %v398
      %v673 = vld [vmem:[%s635 + $0x38] sm:$0x1]
      %v674 = vsel %vm644, %v399, %v673
      %675 = vst [vmem:[%s635 + $0x38] sm:$0x1] %v674
      %v676 = vld [vmem:[%s635 + $0x3c] sm:$0xf]
      %v677 = vsel %vm638, %v406, %v676
      %678 = vst [vmem:[%s635 + $0x3c] sm:$0xf] %v677
      %679 = vst [vmem:[%s635 + $0x40] sm:$0xf] %v415
      %v680 = vld [vmem:[%s635 + $0x44] sm:$0x1]
      %v681 = vsel %vm644, %v416, %v680
      %682 = vst [vmem:[%s635 + $0x44] sm:$0x1] %v681
      %v683 = vld [vmem:[%s635 + $0x48] sm:$0xf]
      %v684 = vsel %vm638, %v423, %v683
      %685 = vst [vmem:[%s635 + $0x48] sm:$0xf] %v684
      %686 = vst [vmem:[%s635 + $0x4c] sm:$0xf] %v432
      %v687 = vld [vmem:[%s635 + $0x50] sm:$0x1]
      %v688 = vsel %vm644, %v433, %v687
      %689 = vst [vmem:[%s635 + $0x50] sm:$0x1] %v688
      %v690 = vld [vmem:[%s635 + $0x54] sm:$0xf]
      %v691 = vsel %vm638, %v440, %v690
      %692 = vst [vmem:[%s635 + $0x54] sm:$0xf] %v691
      %693 = vst [vmem:[%s635 + $0x58] sm:$0xf] %v449
      %v694 = vld [vmem:[%s635 + $0x5c] sm:$0x1]
      %v695 = vsel %vm644, %v450, %v694
      %696 = vst [vmem:[%s635 + $0x5c] sm:$0x1] %v695
      %v697 = vld [vmem:[%s635 + $0x60] sm:$0xf]
      %v698 = vsel %vm638, %v457, %v697
      %699 = vst [vmem:[%s635 + $0x60] sm:$0xf] %v698
      %700 = vst [vmem:[%s635 + $0x64] sm:$0xf] %v466
      %v701 = vld [vmem:[%s635 + $0x68] sm:$0x1]
      %v702 = vsel %vm644, %v467, %v701
      %703 = vst [vmem:[%s635 + $0x68] sm:$0x1] %v702
      %v704 = vld [vmem:[%s635 + $0x6c] sm:$0xf]
      %v705 = vsel %vm638, %v474, %v704
      %706 = vst [vmem:[%s635 + $0x6c] sm:$0xf] %v705
      %707 = vst [vmem:[%s635 + $0x70] sm:$0xf] %v483
      %v708 = vld [vmem:[%s635 + $0x74] sm:$0x1]
      %v709 = vsel %vm644, %v484, %v708
      %710 = vst [vmem:[%s635 + $0x74] sm:$0x1] %v709
      %v711 = vld [vmem:[%s635 + $0x78] sm:$0xf]
      %v712 = vsel %vm638, %v491, %v711
      %713 = vst [vmem:[%s635 + $0x78] sm:$0xf] %v712
      %714 = vst [vmem:[%s635 + $0x7c] sm:$0xf] %v500
      %v715 = vld [vmem:[%s635 + $0x80] sm:$0x1]
      %v716 = vsel %vm644, %v501, %v715
      %717 = vst [vmem:[%s635 + $0x80] sm:$0x1] %v716
      %v718 = vld [vmem:[%s635 + $0x84] sm:$0xf]
      %v719 = vsel %vm638, %v508, %v718
      %720 = vst [vmem:[%s635 + $0x84] sm:$0xf] %v719
      %721 = vst [vmem:[%s635 + $0x88] sm:$0xf] %v517
      %v722 = vld [vmem:[%s635 + $0x8c] sm:$0x1]
      %v723 = vsel %vm644, %v518, %v722
      %724 = vst [vmem:[%s635 + $0x8c] sm:$0x1] %v723
      %v725 = vld [vmem:[%s635 + $0x90] sm:$0xf]
      %v726 = vsel %vm638, %v525, %v725
      %727 = vst [vmem:[%s635 + $0x90] sm:$0xf] %v726
      %728 = vst [vmem:[%s635 + $0x94] sm:$0xf] %v534
      %v729 = vld [vmem:[%s635 + $0x98] sm:$0x1]
      %v730 = vsel %vm644, %v535, %v729
      %731 = vst [vmem:[%s635 + $0x98] sm:$0x1] %v730
      %v732 = vld [vmem:[%s635 + $0x9c] sm:$0xf]
      %v733 = vsel %vm638, %v542, %v732
      %734 = vst [vmem:[%s635 + $0x9c] sm:$0xf] %v733
      %735 = vst [vmem:[%s635 + $0xa0] sm:$0xf] %v551
      %v736 = vld [vmem:[%s635 + $0xa4] sm:$0x1]
      %v737 = vsel %vm644, %v552, %v736
      %738 = vst [vmem:[%s635 + $0xa4] sm:$0x1] %v737
      %v739 = vld [vmem:[%s635 + $0xa8] sm:$0xf]
      %v740 = vsel %vm638, %v559, %v739
      %741 = vst [vmem:[%s635 + $0xa8] sm:$0xf] %v740
      %742 = vst [vmem:[%s635 + $0xac] sm:$0xf] %v568
      %v743 = vld [vmem:[%s635 + $0xb0] sm:$0x1]
      %v744 = vsel %vm644, %v569, %v743
      %745 = vst [vmem:[%s635 + $0xb0] sm:$0x1] %v744
      %v746 = vld [vmem:[%s635 + $0xb4] sm:$0xf]
      %v747 = vsel %vm638, %v576, %v746
      %748 = vst [vmem:[%s635 + $0xb4] sm:$0xf] %v747
      %749 = vst [vmem:[%s635 + $0xb8] sm:$0xf] %v585
      %v750 = vld [vmem:[%s635 + $0xbc] sm:$0x1]
      %v751 = vsel %vm644, %v586, %v750
      %752 = vst [vmem:[%s635 + $0xbc] sm:$0x1] %v751
      %v753 = vld [vmem:[#allocation2] sm:$0xf]
      %v754 = vld [vmem:[#allocation2 + $0x4] sm:$0xf]
      %v755 = vld [vmem:[#allocation2 + $0x8] sm:$0xf]
      %v756 = vld [vmem:[#allocation2 + $0xc] sm:$0xf]
      %v757 = vld [vmem:[#allocation2 + $0x10] sm:$0xf]
      %v758 = vld [vmem:[#allocation2 + $0x14] sm:$0xf]
      %v759 = vld [vmem:[#allocation2 + $0x18] sm:$0xf]
      %v760 = vld [vmem:[#allocation2 + $0x1c] sm:$0xf]
      %v761 = vld [vmem:[#allocation2 + $0x20] sm:$0xf]
      %v762 = vld [vmem:[#allocation2 + $0x24] sm:$0xf]
      %v763 = vld [vmem:[#allocation2 + $0x28] sm:$0xf]
      %v764 = vld [vmem:[#allocation2 + $0x2c] sm:$0xf]
      %v765 = vld [vmem:[#allocation2 + $0x30] sm:$0xf]
      %v766 = vld [vmem:[#allocation2 + $0x34] sm:$0xf]
      %v767 = vld [vmem:[#allocation2 + $0x38] sm:$0xf]
      %v768 = vld [vmem:[#allocation2 + $0x3c] sm:$0xf]
      %v769 = vld [vmem:[#allocation2 + $0x40] sm:$0xf]
      %v770 = vld [vmem:[#allocation2 + $0x44] sm:$0xf]
      %v771 = vld [vmem:[#allocation2 + $0x48] sm:$0xf]
      %v772 = vld [vmem:[#allocation2 + $0x4c] sm:$0xf]
      %v773 = vld [vmem:[#allocation2 + $0x50] sm:$0xf]
      %v774 = vld [vmem:[#allocation2 + $0x54] sm:$0xf]
      %v775 = vld [vmem:[#allocation2 + $0x58] sm:$0xf]
      %v776 = vld [vmem:[#allocation2 + $0x5c] sm:$0xf]
      %v777 = vld [vmem:[#allocation2 + $0x60] sm:$0xf]
      %v778 = vld [vmem:[#allocation2 + $0x64] sm:$0xf]
      %v779 = vld [vmem:[#allocation2 + $0x68] sm:$0xf]
      %v780 = vld [vmem:[#allocation2 + $0x6c] sm:$0xf]
      %v781 = vld [vmem:[#allocation2 + $0x70] sm:$0xf]
      %v782 = vld [vmem:[#allocation2 + $0x74] sm:$0xf]
      %v783 = vld [vmem:[#allocation2 + $0x78] sm:$0xf]
      %v784 = vld [vmem:[#allocation2 + $0x7c] sm:$0xf]
      %v785 = vld [vmem:[#allocation2 + $0x80] sm:$0xf]
      %v786 = vld [vmem:[#allocation2 + $0x84] sm:$0xf]
      %v787 = vld [vmem:[#allocation2 + $0x88] sm:$0xf]
      %v788 = vld [vmem:[#allocation2 + $0x8c] sm:$0xf]
      %v789 = vld [vmem:[#allocation2 + $0x90] sm:$0xf]
      %v790 = vld [vmem:[#allocation2 + $0x94] sm:$0xf]
      %v791 = vld [vmem:[#allocation2 + $0x98] sm:$0xf]
      %v792 = vld [vmem:[#allocation2 + $0x9c] sm:$0xf]
      %v793 = vld [vmem:[#allocation2 + $0xa0] sm:$0xf]
      %v794 = vld [vmem:[#allocation2 + $0xa4] sm:$0xf]
      %v795 = vld [vmem:[#allocation2 + $0xa8] sm:$0xf]
      %v796 = vld [vmem:[#allocation2 + $0xac] sm:$0xf]
      %v797 = vld [vmem:[#allocation2 + $0xb0] sm:$0xf]
      %v798 = vld [vmem:[#allocation2 + $0xb4] sm:$0xf]
      %v799 = vld [vmem:[#allocation2 + $0xb8] sm:$0xf]
      %v800 = vld [vmem:[#allocation2 + $0xbc] sm:$0xf]
      %v801 = vld [vmem:[%s635] sm:$0xf]
      %v802 = vld [vmem:[%s635 + $0x4] sm:$0xf]
      %v803 = vld [vmem:[%s635 + $0x8] sm:$0xf]
      %v804 = vld [vmem:[%s635 + $0xc] sm:$0xf]
      %v805 = vld [vmem:[%s635 + $0x10] sm:$0xf]
      %v806 = vld [vmem:[%s635 + $0x14] sm:$0xf]
      %v807 = vld [vmem:[%s635 + $0x18] sm:$0xf]
      %v808 = vld [vmem:[%s635 + $0x1c] sm:$0xf]
      %v809 = vld [vmem:[%s635 + $0x20] sm:$0xf]
      %v810 = vld [vmem:[%s635 + $0x24] sm:$0xf]
      %v811 = vld [vmem:[%s635 + $0x28] sm:$0xf]
      %v812 = vld [vmem:[%s635 + $0x2c] sm:$0xf]
      %v813 = vld [vmem:[%s635 + $0x30] sm:$0xf]
      %v814 = vld [vmem:[%s635 + $0x34] sm:$0xf]
      %v815 = vld [vmem:[%s635 + $0x38] sm:$0xf]
      %v816 = vld [vmem:[%s635 + $0x3c] sm:$0xf]
      %v817 = vld [vmem:[%s635 + $0x40] sm:$0xf]
      %v818 = vld [vmem:[%s635 + $0x44] sm:$0xf]
      %v819 = vld [vmem:[%s635 + $0x48] sm:$0xf]
      %v820 = vld [vmem:[%s635 + $0x4c] sm:$0xf]
      %v821 = vld [vmem:[%s635 + $0x50] sm:$0xf]
      %v822 = vld [vmem:[%s635 + $0x54] sm:$0xf]
      %v823 = vld [vmem:[%s635 + $0x58] sm:$0xf]
      %v824 = vld [vmem:[%s635 + $0x5c] sm:$0xf]
      %v825 = vld [vmem:[%s635 + $0x60] sm:$0xf]
      %v826 = vld [vmem:[%s635 + $0x64] sm:$0xf]
      %v827 = vld [vmem:[%s635 + $0x68] sm:$0xf]
      %v828 = vld [vmem:[%s635 + $0x6c] sm:$0xf]
      %v829 = vld [vmem:[%s635 + $0x70] sm:$0xf]
      %v830 = vld [vmem:[%s635 + $0x74] sm:$0xf]
      %v831 = vld [vmem:[%s635 + $0x78] sm:$0xf]
      %v832 = vld [vmem:[%s635 + $0x7c] sm:$0xf]
      %v833 = vld [vmem:[%s635 + $0x80] sm:$0xf]
      %v834 = vld [vmem:[%s635 + $0x84] sm:$0xf]
      %v835 = vld [vmem:[%s635 + $0x88] sm:$0xf]
      %v836 = vld [vmem:[%s635 + $0x8c] sm:$0xf]
      %v837 = vld [vmem:[%s635 + $0x90] sm:$0xf]
      %v838 = vld [vmem:[%s635 + $0x94] sm:$0xf]
      %v839 = vld [vmem:[%s635 + $0x98] sm:$0xf]
      %v840 = vld [vmem:[%s635 + $0x9c] sm:$0xf]
      %v841 = vld [vmem:[%s635 + $0xa0] sm:$0xf]
      %v842 = vld [vmem:[%s635 + $0xa4] sm:$0xf]
      %v843 = vld [vmem:[%s635 + $0xa8] sm:$0xf]
      %v844 = vld [vmem:[%s635 + $0xac] sm:$0xf]
      %v845 = vld [vmem:[%s635 + $0xb0] sm:$0xf]
      %v846 = vld [vmem:[%s635 + $0xb4] sm:$0xf]
      %v847 = vld [vmem:[%s635 + $0xb8] sm:$0xf]
      %v848 = vld [vmem:[%s635 + $0xbc] sm:$0xf]
      %s849 = scalar_lea.vmem [#allocation2], 24
      %v850 = vld [vmem:[%s849] sm:$0xf]
      %v851 = vld [vmem:[%s849 + $0x4] sm:$0xf]
      %v852 = vld [vmem:[%s849 + $0x8] sm:$0xf]
      %v853 = vld [vmem:[%s849 + $0xc] sm:$0xf]
      %v854 = vld [vmem:[%s849 + $0x10] sm:$0xf]
      %v855 = vld [vmem:[%s849 + $0x14] sm:$0xf]
      %v856 = vld [vmem:[%s849 + $0x18] sm:$0xf]
      %v857 = vld [vmem:[%s849 + $0x1c] sm:$0xf]
      %v858 = vld [vmem:[%s849 + $0x20] sm:$0xf]
      %v859 = vld [vmem:[%s849 + $0x24] sm:$0xf]
      %v860 = vld [vmem:[%s849 + $0x28] sm:$0xf]
      %v861 = vld [vmem:[%s849 + $0x2c] sm:$0xf]
      %v862 = vld [vmem:[%s849 + $0x30] sm:$0xf]
      %v863 = vld [vmem:[%s849 + $0x34] sm:$0xf]
      %v864 = vld [vmem:[%s849 + $0x38] sm:$0xf]
      %v865 = vld [vmem:[%s849 + $0x3c] sm:$0xf]
      %v866 = vld [vmem:[%s849 + $0x40] sm:$0xf]
      %v867 = vld [vmem:[%s849 + $0x44] sm:$0xf]
      %v868 = vld [vmem:[%s849 + $0x48] sm:$0xf]
      %v869 = vld [vmem:[%s849 + $0x4c] sm:$0xf]
      %v870 = vld [vmem:[%s849 + $0x50] sm:$0xf]
      %v871 = vld [vmem:[%s849 + $0x54] sm:$0xf]
      %v872 = vld [vmem:[%s849 + $0x58] sm:$0xf]
      %v873 = vld [vmem:[%s849 + $0x5c] sm:$0xf]
      %v874 = vld [vmem:[%s849 + $0x60] sm:$0xf]
      %v875 = vld [vmem:[%s849 + $0x64] sm:$0xf]
      %v876 = vld [vmem:[%s849 + $0x68] sm:$0xf]
      %v877 = vld [vmem:[%s849 + $0x6c] sm:$0xf]
      %v878 = vld [vmem:[%s849 + $0x70] sm:$0xf]
      %v879 = vld [vmem:[%s849 + $0x74] sm:$0xf]
      %v880 = vld [vmem:[%s849 + $0x78] sm:$0xf]
      %v881 = vld [vmem:[%s849 + $0x7c] sm:$0xf]
      %v882 = vld [vmem:[%s849 + $0x80] sm:$0xf]
      %v883 = vld [vmem:[%s849 + $0x84] sm:$0xf]
      %v884 = vld [vmem:[%s849 + $0x88] sm:$0xf]
      %v885 = vld [vmem:[%s849 + $0x8c] sm:$0xf]
      %v886 = vld [vmem:[%s849 + $0x90] sm:$0xf]
      %v887 = vld [vmem:[%s849 + $0x94] sm:$0xf]
      %v888 = vld [vmem:[%s849 + $0x98] sm:$0xf]
      %v889 = vld [vmem:[%s849 + $0x9c] sm:$0xf]
      %v890 = vld [vmem:[%s849 + $0xa0] sm:$0xf]
      %v891 = vld [vmem:[%s849 + $0xa4] sm:$0xf]
      %v892 = vld [vmem:[%s849 + $0xa8] sm:$0xf]
      %v893 = vld [vmem:[%s849 + $0xac] sm:$0xf]
      %v894 = vld [vmem:[%s849 + $0xb0] sm:$0xf]
      %v895 = vld [vmem:[%s849 + $0xb4] sm:$0xf]
      %v896 = vld [vmem:[%s849 + $0xb8] sm:$0xf]
      %v897 = vld [vmem:[%s849 + $0xbc] sm:$0xf]
      %v946 = vunpack.c.l.b16 %v753
      %v947 = vunpack.c.l.b16 %v754
      %v948 = vunpack.c.l.b16 %v755
      %v949 = vunpack.c.l.b16 %v756
      %v950 = vunpack.c.l.b16 %v757
      %v951 = vunpack.c.l.b16 %v758
      %v952 = vunpack.c.l.b16 %v759
      %v953 = vunpack.c.l.b16 %v760
      %v954 = vunpack.c.l.b16 %v761
      %v955 = vunpack.c.l.b16 %v762
      %v956 = vunpack.c.l.b16 %v763
      %v957 = vunpack.c.l.b16 %v764
      %v958 = vunpack.c.l.b16 %v765
      %v959 = vunpack.c.l.b16 %v766
      %v960 = vunpack.c.l.b16 %v767
      %v961 = vunpack.c.l.b16 %v768
      %v962 = vunpack.c.l.b16 %v769
      %v963 = vunpack.c.l.b16 %v770
      %v964 = vunpack.c.l.b16 %v771
      %v965 = vunpack.c.l.b16 %v772
      %v966 = vunpack.c.l.b16 %v773
      %v967 = vunpack.c.l.b16 %v774
      %v968 = vunpack.c.l.b16 %v775
      %v969 = vunpack.c.l.b16 %v776
      %v970 = vunpack.c.l.b16 %v777
      %v971 = vunpack.c.l.b16 %v778
      %v972 = vunpack.c.l.b16 %v779
      %v973 = vunpack.c.l.b16 %v780
      %v974 = vunpack.c.l.b16 %v781
      %v975 = vunpack.c.l.b16 %v782
      %v976 = vunpack.c.l.b16 %v783
      %v977 = vunpack.c.l.b16 %v784
      %v978 = vunpack.c.l.b16 %v785
      %v979 = vunpack.c.l.b16 %v786
      %v980 = vunpack.c.l.b16 %v787
      %v981 = vunpack.c.l.b16 %v788
      %v982 = vunpack.c.l.b16 %v789
      %v983 = vunpack.c.l.b16 %v790
      %v984 = vunpack.c.l.b16 %v791
      %v985 = vunpack.c.l.b16 %v792
      %v986 = vunpack.c.l.b16 %v793
      %v987 = vunpack.c.l.b16 %v794
      %v988 = vunpack.c.l.b16 %v795
      %v989 = vunpack.c.l.b16 %v796
      %v990 = vunpack.c.l.b16 %v797
      %v991 = vunpack.c.l.b16 %v798
      %v992 = vunpack.c.l.b16 %v799
      %v993 = vunpack.c.l.b16 %v800
      %v994 = vpack.c.b16 %v947, %v946
      %v995 = vpack.c.b16 %v948, %v948
      %v996 = vpack.c.b16 %v950, %v949
      %v997 = vpack.c.b16 %v951, %v951
      %v998 = vpack.c.b16 %v953, %v952
      %v999 = vpack.c.b16 %v954, %v954
      %v1000 = vpack.c.b16 %v956, %v955
      %v1001 = vpack.c.b16 %v957, %v957
      %v1002 = vpack.c.b16 %v959, %v958
      %v1003 = vpack.c.b16 %v960, %v960
      %v1004 = vpack.c.b16 %v962, %v961
      %v1005 = vpack.c.b16 %v963, %v963
      %v1006 = vpack.c.b16 %v965, %v964
      %v1007 = vpack.c.b16 %v966, %v966
      %v1008 = vpack.c.b16 %v968, %v967
      %v1009 = vpack.c.b16 %v969, %v969
      %v1010 = vpack.c.b16 %v971, %v970
      %v1011 = vpack.c.b16 %v972, %v972
      %v1012 = vpack.c.b16 %v974, %v973
      %v1013 = vpack.c.b16 %v975, %v975
      %v1014 = vpack.c.b16 %v977, %v976
      %v1015 = vpack.c.b16 %v978, %v978
      %v1016 = vpack.c.b16 %v980, %v979
      %v1017 = vpack.c.b16 %v981, %v981
      %v1018 = vpack.c.b16 %v983, %v982
      %v1019 = vpack.c.b16 %v984, %v984
      %v1020 = vpack.c.b16 %v986, %v985
      %v1021 = vpack.c.b16 %v987, %v987
      %v1022 = vpack.c.b16 %v989, %v988
      %v1023 = vpack.c.b16 %v990, %v990
      %v1024 = vpack.c.b16 %v992, %v991
      %v1025 = vpack.c.b16 %v993, %v993
      %v1090 = vunpack.c.l.b16 %v801
      %v1091 = vunpack.c.l.b16 %v802
      %v1092 = vunpack.c.l.b16 %v803
      %v1093 = vunpack.c.l.b16 %v804
      %v1094 = vunpack.c.l.b16 %v805
      %v1095 = vunpack.c.l.b16 %v806
      %v1096 = vunpack.c.l.b16 %v807
      %v1097 = vunpack.c.l.b16 %v808
      %v1098 = vunpack.c.l.b16 %v809
      %v1099 = vunpack.c.l.b16 %v810
      %v1100 = vunpack.c.l.b16 %v811
      %v1101 = vunpack.c.l.b16 %v812
      %v1102 = vunpack.c.l.b16 %v813
      %v1103 = vunpack.c.l.b16 %v814
      %v1104 = vunpack.c.l.b16 %v815
      %v1105 = vunpack.c.l.b16 %v816
      %v1106 = vunpack.c.l.b16 %v817
      %v1107 = vunpack.c.l.b16 %v818
      %v1108 = vunpack.c.l.b16 %v819
      %v1109 = vunpack.c.l.b16 %v820
      %v1110 = vunpack.c.l.b16 %v821
      %v1111 = vunpack.c.l.b16 %v822
      %v1112 = vunpack.c.l.b16 %v823
      %v1113 = vunpack.c.l.b16 %v824
      %v1114 = vunpack.c.l.b16 %v825
      %v1115 = vunpack.c.l.b16 %v826
      %v1116 = vunpack.c.l.b16 %v827
      %v1117 = vunpack.c.l.b16 %v828
      %v1118 = vunpack.c.l.b16 %v829
      %v1119 = vunpack.c.l.b16 %v830
      %v1120 = vunpack.c.l.b16 %v831
      %v1121 = vunpack.c.l.b16 %v832
      %v1122 = vunpack.c.l.b16 %v833
      %v1123 = vunpack.c.l.b16 %v834
      %v1124 = vunpack.c.l.b16 %v835
      %v1125 = vunpack.c.l.b16 %v836
      %v1126 = vunpack.c.l.b16 %v837
      %v1127 = vunpack.c.l.b16 %v838
      %v1128 = vunpack.c.l.b16 %v839
      %v1129 = vunpack.c.l.b16 %v840
      %v1130 = vunpack.c.l.b16 %v841
      %v1131 = vunpack.c.l.b16 %v842
      %v1132 = vunpack.c.l.b16 %v843
      %v1133 = vunpack.c.l.b16 %v844
      %v1134 = vunpack.c.l.b16 %v845
      %v1135 = vunpack.c.l.b16 %v846
      %v1136 = vunpack.c.l.b16 %v847
      %v1137 = vunpack.c.l.b16 %v848
      %v1138 = vpack.c.b16 %v1091, %v1090
      %v1139 = vpack.c.b16 %v1092, %v1092
      %v1140 = vpack.c.b16 %v1094, %v1093
      %v1141 = vpack.c.b16 %v1095, %v1095
      %v1142 = vpack.c.b16 %v1097, %v1096
      %v1143 = vpack.c.b16 %v1098, %v1098
      %v1144 = vpack.c.b16 %v1100, %v1099
      %v1145 = vpack.c.b16 %v1101, %v1101
      %v1146 = vpack.c.b16 %v1103, %v1102
      %v1147 = vpack.c.b16 %v1104, %v1104
      %v1148 = vpack.c.b16 %v1106, %v1105
      %v1149 = vpack.c.b16 %v1107, %v1107
      %v1150 = vpack.c.b16 %v1109, %v1108
      %v1151 = vpack.c.b16 %v1110, %v1110
      %v1152 = vpack.c.b16 %v1112, %v1111
      %v1153 = vpack.c.b16 %v1113, %v1113
      %v1154 = vpack.c.b16 %v1115, %v1114
      %v1155 = vpack.c.b16 %v1116, %v1116
      %v1156 = vpack.c.b16 %v1118, %v1117
      %v1157 = vpack.c.b16 %v1119, %v1119
      %v1158 = vpack.c.b16 %v1121, %v1120
      %v1159 = vpack.c.b16 %v1122, %v1122
      %v1160 = vpack.c.b16 %v1124, %v1123
      %v1161 = vpack.c.b16 %v1125, %v1125
      %v1162 = vpack.c.b16 %v1127, %v1126
      %v1163 = vpack.c.b16 %v1128, %v1128
      %v1164 = vpack.c.b16 %v1130, %v1129
      %v1165 = vpack.c.b16 %v1131, %v1131
      %v1166 = vpack.c.b16 %v1133, %v1132
      %v1167 = vpack.c.b16 %v1134, %v1134
      %v1168 = vpack.c.b16 %v1136, %v1135
      %v1169 = vpack.c.b16 %v1137, %v1137
      %v1234 = vunpack.c.l.b16 %v850
      %v1235 = vunpack.c.l.b16 %v851
      %v1236 = vunpack.c.l.b16 %v852
      %v1237 = vunpack.c.l.b16 %v853
      %v1238 = vunpack.c.l.b16 %v854
      %v1239 = vunpack.c.l.b16 %v855
      %v1240 = vunpack.c.l.b16 %v856
      %v1241 = vunpack.c.l.b16 %v857
      %v1242 = vunpack.c.l.b16 %v858
      %v1243 = vunpack.c.l.b16 %v859
      %v1244 = vunpack.c.l.b16 %v860
      %v1245 = vunpack.c.l.b16 %v861
      %v1246 = vunpack.c.l.b16 %v862
      %v1247 = vunpack.c.l.b16 %v863
      %v1248 = vunpack.c.l.b16 %v864
      %v1249 = vunpack.c.l.b16 %v865
      %v1250 = vunpack.c.l.b16 %v866
      %v1251 = vunpack.c.l.b16 %v867
      %v1252 = vunpack.c.l.b16 %v868
      %v1253 = vunpack.c.l.b16 %v869
      %v1254 = vunpack.c.l.b16 %v870
      %v1255 = vunpack.c.l.b16 %v871
      %v1256 = vunpack.c.l.b16 %v872
      %v1257 = vunpack.c.l.b16 %v873
      %v1258 = vunpack.c.l.b16 %v874
      %v1259 = vunpack.c.l.b16 %v875
      %v1260 = vunpack.c.l.b16 %v876
      %v1261 = vunpack.c.l.b16 %v877
      %v1262 = vunpack.c.l.b16 %v878
      %v1263 = vunpack.c.l.b16 %v879
      %v1264 = vunpack.c.l.b16 %v880
      %v1265 = vunpack.c.l.b16 %v881
      %v1266 = vunpack.c.l.b16 %v882
      %v1267 = vunpack.c.l.b16 %v883
      %v1268 = vunpack.c.l.b16 %v884
      %v1269 = vunpack.c.l.b16 %v885
      %v1270 = vunpack.c.l.b16 %v886
      %v1271 = vunpack.c.l.b16 %v887
      %v1272 = vunpack.c.l.b16 %v888
      %v1273 = vunpack.c.l.b16 %v889
      %v1274 = vunpack.c.l.b16 %v890
      %v1275 = vunpack.c.l.b16 %v891
      %v1276 = vunpack.c.l.b16 %v892
      %v1277 = vunpack.c.l.b16 %v893
      %v1278 = vunpack.c.l.b16 %v894
      %v1279 = vunpack.c.l.b16 %v895
      %v1280 = vunpack.c.l.b16 %v896
      %v1281 = vunpack.c.l.b16 %v897
      %v1282 = vpack.c.b16 %v1235, %v1234
      %v1283 = vpack.c.b16 %v1236, %v1236
      %v1284 = vpack.c.b16 %v1238, %v1237
      %v1285 = vpack.c.b16 %v1239, %v1239
      %v1286 = vpack.c.b16 %v1241, %v1240
      %v1287 = vpack.c.b16 %v1242, %v1242
      %v1288 = vpack.c.b16 %v1244, %v1243
      %v1289 = vpack.c.b16 %v1245, %v1245
      %v1290 = vpack.c.b16 %v1247, %v1246
      %v1291 = vpack.c.b16 %v1248, %v1248
      %v1292 = vpack.c.b16 %v1250, %v1249
      %v1293 = vpack.c.b16 %v1251, %v1251
      %v1294 = vpack.c.b16 %v1253, %v1252
      %v1295 = vpack.c.b16 %v1254, %v1254
      %v1296 = vpack.c.b16 %v1256, %v1255
      %v1297 = vpack.c.b16 %v1257, %v1257
      %v1298 = vpack.c.b16 %v1259, %v1258
      %v1299 = vpack.c.b16 %v1260, %v1260
      %v1300 = vpack.c.b16 %v1262, %v1261
      %v1301 = vpack.c.b16 %v1263, %v1263
      %v1302 = vpack.c.b16 %v1265, %v1264
      %v1303 = vpack.c.b16 %v1266, %v1266
      %v1304 = vpack.c.b16 %v1268, %v1267
      %v1305 = vpack.c.b16 %v1269, %v1269
      %v1306 = vpack.c.b16 %v1271, %v1270
      %v1307 = vpack.c.b16 %v1272, %v1272
      %v1308 = vpack.c.b16 %v1274, %v1273
      %v1309 = vpack.c.b16 %v1275, %v1275
      %v1310 = vpack.c.b16 %v1277, %v1276
      %v1311 = vpack.c.b16 %v1278, %v1278
      %v1312 = vpack.c.b16 %v1280, %v1279
      %v1313 = vpack.c.b16 %v1281, %v1281
      %v1330 = vld [vmem:[%s1] sm:$0xf]
      %v1331 = vld [vmem:[%s1 + $0x4] sm:$0xf]
      %v1332 = vld [vmem:[%s1 + $0x8] sm:$0xf]
      %v1333 = vld [vmem:[%s1 + $0xc] sm:$0xf]
      %v1334 = vld [vmem:[%s1 + $0x10] sm:$0xf]
      %v1335 = vld [vmem:[%s1 + $0x14] sm:$0xf]
      %v1336 = vld [vmem:[%s1 + $0x18] sm:$0xf]
      %v1337 = vld [vmem:[%s1 + $0x1c] sm:$0xf]
      %v1338 = vld [vmem:[%s1 + $0x20] sm:$0xf]
      %v1339 = vld [vmem:[%s1 + $0x24] sm:$0xf]
      %v1340 = vld [vmem:[%s1 + $0x28] sm:$0xf]
      %v1341 = vld [vmem:[%s1 + $0x2c] sm:$0xf]
      %v1342 = vld [vmem:[%s1 + $0x30] sm:$0xf]
      %v1343 = vld [vmem:[%s1 + $0x34] sm:$0xf]
      %v1344 = vld [vmem:[%s1 + $0x38] sm:$0xf]
      %v1345 = vld [vmem:[%s1 + $0x3c] sm:$0xf]
      %v1346 = vld [vmem:[%s1 + $0x40] sm:$0xf]
      %v1347 = vld [vmem:[%s1 + $0x44] sm:$0xf]
      %v1348 = vld [vmem:[%s1 + $0x48] sm:$0xf]
      %v1349 = vld [vmem:[%s1 + $0x4c] sm:$0xf]
      %v1350 = vld [vmem:[%s1 + $0x50] sm:$0xf]
      %v1351 = vld [vmem:[%s1 + $0x54] sm:$0xf]
      %v1352 = vld [vmem:[%s1 + $0x58] sm:$0xf]
      %v1353 = vld [vmem:[%s1 + $0x5c] sm:$0xf]
      %v1354 = vld [vmem:[%s1 + $0x60] sm:$0xf]
      %v1355 = vld [vmem:[%s1 + $0x64] sm:$0xf]
      %v1356 = vld [vmem:[%s1 + $0x68] sm:$0xf]
      %v1357 = vld [vmem:[%s1 + $0x6c] sm:$0xf]
      %v1358 = vld [vmem:[%s1 + $0x70] sm:$0xf]
      %v1359 = vld [vmem:[%s1 + $0x74] sm:$0xf]
      %v1360 = vld [vmem:[%s1 + $0x78] sm:$0xf]
      %v1361 = vld [vmem:[%s1 + $0x7c] sm:$0xf]
      %v1362 = vld [vmem:[%s1 + $0x80] sm:$0xf]
      %v1363 = vld [vmem:[%s1 + $0x84] sm:$0xf]
      %v1364 = vld [vmem:[%s1 + $0x88] sm:$0xf]
      %v1365 = vld [vmem:[%s1 + $0x8c] sm:$0xf]
      %v1366 = vld [vmem:[%s1 + $0x90] sm:$0xf]
      %v1367 = vld [vmem:[%s1 + $0x94] sm:$0xf]
      %v1368 = vld [vmem:[%s1 + $0x98] sm:$0xf]
      %v1369 = vld [vmem:[%s1 + $0x9c] sm:$0xf]
      %v1370 = vld [vmem:[%s1 + $0xa0] sm:$0xf]
      %v1371 = vld [vmem:[%s1 + $0xa4] sm:$0xf]
      %v1372 = vld [vmem:[%s1 + $0xa8] sm:$0xf]
      %v1373 = vld [vmem:[%s1 + $0xac] sm:$0xf]
      %v1374 = vld [vmem:[%s1 + $0xb0] sm:$0xf]
      %v1375 = vld [vmem:[%s1 + $0xb4] sm:$0xf]
      %v1376 = vld [vmem:[%s1 + $0xb8] sm:$0xf]
      %v1377 = vld [vmem:[%s1 + $0xbc] sm:$0xf]
      %vm1378 = vsmask.f32 7424
      %v1380 = vshrl.u32 %v994, 16
      %v1382 = vshll.u32 %v994, 16
      %v1384 = vrot.slane %v1382, 1
      %v1385 = vor.u32 %v1380, %v1384
      %v1387 = vshll.u32 %v995, 16
      %v1389 = vrot.slane %v1387, 1
      %v1390 = vsel %vm1378, %v1385, %v1389
      %v1392 = vshrl.u32 %v1138, 16
      %v1394 = vshll.u32 %v1138, 16
      %v1396 = vrot.slane %v1394, 1
      %v1397 = vor.u32 %v1392, %v1396
      %v1399 = vshll.u32 %v1139, 16
      %v1401 = vrot.slane %v1399, 1
      %v1402 = vsel %vm1378, %v1397, %v1401
      %v1404 = vshrl.u32 %v1282, 16
      %v1406 = vshll.u32 %v1282, 16
      %v1408 = vrot.slane %v1406, 1
      %v1409 = vor.u32 %v1404, %v1408
      %v1411 = vshll.u32 %v1283, 16
      %v1413 = vrot.slane %v1411, 1
      %v1414 = vsel %vm1378, %v1409, %v1413
      %v1416 = vshrl.u32 %v996, 16
      %v1418 = vshll.u32 %v996, 16
      %v1420 = vrot.slane %v1418, 1
      %v1421 = vor.u32 %v1416, %v1420
      %v1423 = vshll.u32 %v997, 16
      %v1425 = vrot.slane %v1423, 1
      %v1426 = vsel %vm1378, %v1421, %v1425
      %v1428 = vshrl.u32 %v1140, 16
      %v1430 = vshll.u32 %v1140, 16
      %v1432 = vrot.slane %v1430, 1
      %v1433 = vor.u32 %v1428, %v1432
      %v1435 = vshll.u32 %v1141, 16
      %v1437 = vrot.slane %v1435, 1
      %v1438 = vsel %vm1378, %v1433, %v1437
      %v1440 = vshrl.u32 %v1284, 16
      %v1442 = vshll.u32 %v1284, 16
      %v1444 = vrot.slane %v1442, 1
      %v1445 = vor.u32 %v1440, %v1444
      %v1447 = vshll.u32 %v1285, 16
      %v1449 = vrot.slane %v1447, 1
      %v1450 = vsel %vm1378, %v1445, %v1449
      %v1452 = vshrl.u32 %v998, 16
      %v1454 = vshll.u32 %v998, 16
      %v1456 = vrot.slane %v1454, 1
      %v1457 = vor.u32 %v1452, %v1456
      %v1459 = vshll.u32 %v999, 16
      %v1461 = vrot.slane %v1459, 1
      %v1462 = vsel %vm1378, %v1457, %v1461
      %v1464 = vshrl.u32 %v1142, 16
      %v1466 = vshll.u32 %v1142, 16
      %v1468 = vrot.slane %v1466, 1
      %v1469 = vor.u32 %v1464, %v1468
      %v1471 = vshll.u32 %v1143, 16
      %v1473 = vrot.slane %v1471, 1
      %v1474 = vsel %vm1378, %v1469, %v1473
      %v1476 = vshrl.u32 %v1286, 16
      %v1478 = vshll.u32 %v1286, 16
      %v1480 = vrot.slane %v1478, 1
      %v1481 = vor.u32 %v1476, %v1480
      %v1483 = vshll.u32 %v1287, 16
      %v1485 = vrot.slane %v1483, 1
      %v1486 = vsel %vm1378, %v1481, %v1485
      %v1488 = vshrl.u32 %v1000, 16
      %v1490 = vshll.u32 %v1000, 16
      %v1492 = vrot.slane %v1490, 1
      %v1493 = vor.u32 %v1488, %v1492
      %v1495 = vshll.u32 %v1001, 16
      %v1497 = vrot.slane %v1495, 1
      %v1498 = vsel %vm1378, %v1493, %v1497
      %v1500 = vshrl.u32 %v1144, 16
      %v1502 = vshll.u32 %v1144, 16
      %v1504 = vrot.slane %v1502, 1
      %v1505 = vor.u32 %v1500, %v1504
      %v1507 = vshll.u32 %v1145, 16
      %v1509 = vrot.slane %v1507, 1
      %v1510 = vsel %vm1378, %v1505, %v1509
      %v1512 = vshrl.u32 %v1288, 16
      %v1514 = vshll.u32 %v1288, 16
      %v1516 = vrot.slane %v1514, 1
      %v1517 = vor.u32 %v1512, %v1516
      %v1519 = vshll.u32 %v1289, 16
      %v1521 = vrot.slane %v1519, 1
      %v1522 = vsel %vm1378, %v1517, %v1521
      %v1524 = vshrl.u32 %v1002, 16
      %v1526 = vshll.u32 %v1002, 16
      %v1528 = vrot.slane %v1526, 1
      %v1529 = vor.u32 %v1524, %v1528
      %v1531 = vshll.u32 %v1003, 16
      %v1533 = vrot.slane %v1531, 1
      %v1534 = vsel %vm1378, %v1529, %v1533
      %v1536 = vshrl.u32 %v1146, 16
      %v1538 = vshll.u32 %v1146, 16
      %v1540 = vrot.slane %v1538, 1
      %v1541 = vor.u32 %v1536, %v1540
      %v1543 = vshll.u32 %v1147, 16
      %v1545 = vrot.slane %v1543, 1
      %v1546 = vsel %vm1378, %v1541, %v1545
      %v1548 = vshrl.u32 %v1290, 16
      %v1550 = vshll.u32 %v1290, 16
      %v1552 = vrot.slane %v1550, 1
      %v1553 = vor.u32 %v1548, %v1552
      %v1555 = vshll.u32 %v1291, 16
      %v1557 = vrot.slane %v1555, 1
      %v1558 = vsel %vm1378, %v1553, %v1557
      %v1560 = vshrl.u32 %v1004, 16
      %v1562 = vshll.u32 %v1004, 16
      %v1564 = vrot.slane %v1562, 1
      %v1565 = vor.u32 %v1560, %v1564
      %v1567 = vshll.u32 %v1005, 16
      %v1569 = vrot.slane %v1567, 1
      %v1570 = vsel %vm1378, %v1565, %v1569
      %v1572 = vshrl.u32 %v1148, 16
      %v1574 = vshll.u32 %v1148, 16
      %v1576 = vrot.slane %v1574, 1
      %v1577 = vor.u32 %v1572, %v1576
      %v1579 = vshll.u32 %v1149, 16
      %v1581 = vrot.slane %v1579, 1
      %v1582 = vsel %vm1378, %v1577, %v1581
      %v1584 = vshrl.u32 %v1292, 16
      %v1586 = vshll.u32 %v1292, 16
      %v1588 = vrot.slane %v1586, 1
      %v1589 = vor.u32 %v1584, %v1588
      %v1591 = vshll.u32 %v1293, 16
      %v1593 = vrot.slane %v1591, 1
      %v1594 = vsel %vm1378, %v1589, %v1593
      %v1596 = vshrl.u32 %v1006, 16
      %v1598 = vshll.u32 %v1006, 16
      %v1600 = vrot.slane %v1598, 1
      %v1601 = vor.u32 %v1596, %v1600
      %v1603 = vshll.u32 %v1007, 16
      %v1605 = vrot.slane %v1603, 1
      %v1606 = vsel %vm1378, %v1601, %v1605
      %v1608 = vshrl.u32 %v1150, 16
      %v1610 = vshll.u32 %v1150, 16
      %v1612 = vrot.slane %v1610, 1
      %v1613 = vor.u32 %v1608, %v1612
      %v1615 = vshll.u32 %v1151, 16
      %v1617 = vrot.slane %v1615, 1
      %v1618 = vsel %vm1378, %v1613, %v1617
      %v1620 = vshrl.u32 %v1294, 16
      %v1622 = vshll.u32 %v1294, 16
      %v1624 = vrot.slane %v1622, 1
      %v1625 = vor.u32 %v1620, %v1624
      %v1627 = vshll.u32 %v1295, 16
      %v1629 = vrot.slane %v1627, 1
      %v1630 = vsel %vm1378, %v1625, %v1629
      %v1632 = vshrl.u32 %v1008, 16
      %v1634 = vshll.u32 %v1008, 16
      %v1636 = vrot.slane %v1634, 1
      %v1637 = vor.u32 %v1632, %v1636
      %v1639 = vshll.u32 %v1009, 16
      %v1641 = vrot.slane %v1639, 1
      %v1642 = vsel %vm1378, %v1637, %v1641
      %v1644 = vshrl.u32 %v1152, 16
      %v1646 = vshll.u32 %v1152, 16
      %v1648 = vrot.slane %v1646, 1
      %v1649 = vor.u32 %v1644, %v1648
      %v1651 = vshll.u32 %v1153, 16
      %v1653 = vrot.slane %v1651, 1
      %v1654 = vsel %vm1378, %v1649, %v1653
      %v1656 = vshrl.u32 %v1296, 16
      %v1658 = vshll.u32 %v1296, 16
      %v1660 = vrot.slane %v1658, 1
      %v1661 = vor.u32 %v1656, %v1660
      %v1663 = vshll.u32 %v1297, 16
      %v1665 = vrot.slane %v1663, 1
      %v1666 = vsel %vm1378, %v1661, %v1665
      %v1668 = vshrl.u32 %v1010, 16
      %v1670 = vshll.u32 %v1010, 16
      %v1672 = vrot.slane %v1670, 1
      %v1673 = vor.u32 %v1668, %v1672
      %v1675 = vshll.u32 %v1011, 16
      %v1677 = vrot.slane %v1675, 1
      %v1678 = vsel %vm1378, %v1673, %v1677
      %v1680 = vshrl.u32 %v1154, 16
      %v1682 = vshll.u32 %v1154, 16
      %v1684 = vrot.slane %v1682, 1
      %v1685 = vor.u32 %v1680, %v1684
      %v1687 = vshll.u32 %v1155, 16
      %v1689 = vrot.slane %v1687, 1
      %v1690 = vsel %vm1378, %v1685, %v1689
      %v1692 = vshrl.u32 %v1298, 16
      %v1694 = vshll.u32 %v1298, 16
      %v1696 = vrot.slane %v1694, 1
      %v1697 = vor.u32 %v1692, %v1696
      %v1699 = vshll.u32 %v1299, 16
      %v1701 = vrot.slane %v1699, 1
      %v1702 = vsel %vm1378, %v1697, %v1701
      %v1704 = vshrl.u32 %v1012, 16
      %v1706 = vshll.u32 %v1012, 16
      %v1708 = vrot.slane %v1706, 1
      %v1709 = vor.u32 %v1704, %v1708
      %v1711 = vshll.u32 %v1013, 16
      %v1713 = vrot.slane %v1711, 1
      %v1714 = vsel %vm1378, %v1709, %v1713
      %v1716 = vshrl.u32 %v1156, 16
      %v1718 = vshll.u32 %v1156, 16
      %v1720 = vrot.slane %v1718, 1
      %v1721 = vor.u32 %v1716, %v1720
      %v1723 = vshll.u32 %v1157, 16
      %v1725 = vrot.slane %v1723, 1
      %v1726 = vsel %vm1378, %v1721, %v1725
      %v1728 = vshrl.u32 %v1300, 16
      %v1730 = vshll.u32 %v1300, 16
      %v1732 = vrot.slane %v1730, 1
      %v1733 = vor.u32 %v1728, %v1732
      %v1735 = vshll.u32 %v1301, 16
      %v1737 = vrot.slane %v1735, 1
      %v1738 = vsel %vm1378, %v1733, %v1737
      %v1740 = vshrl.u32 %v1014, 16
      %v1742 = vshll.u32 %v1014, 16
      %v1744 = vrot.slane %v1742, 1
      %v1745 = vor.u32 %v1740, %v1744
      %v1747 = vshll.u32 %v1015, 16
      %v1749 = vrot.slane %v1747, 1
      %v1750 = vsel %vm1378, %v1745, %v1749
      %v1752 = vshrl.u32 %v1158, 16
      %v1754 = vshll.u32 %v1158, 16
      %v1756 = vrot.slane %v1754, 1
      %v1757 = vor.u32 %v1752, %v1756
      %v1759 = vshll.u32 %v1159, 16
      %v1761 = vrot.slane %v1759, 1
      %v1762 = vsel %vm1378, %v1757, %v1761
      %v1764 = vshrl.u32 %v1302, 16
      %v1766 = vshll.u32 %v1302, 16
      %v1768 = vrot.slane %v1766, 1
      %v1769 = vor.u32 %v1764, %v1768
      %v1771 = vshll.u32 %v1303, 16
      %v1773 = vrot.slane %v1771, 1
      %v1774 = vsel %vm1378, %v1769, %v1773
      %v1776 = vshrl.u32 %v1016, 16
      %v1778 = vshll.u32 %v1016, 16
      %v1780 = vrot.slane %v1778, 1
      %v1781 = vor.u32 %v1776, %v1780
      %v1783 = vshll.u32 %v1017, 16
      %v1785 = vrot.slane %v1783, 1
      %v1786 = vsel %vm1378, %v1781, %v1785
      %v1788 = vshrl.u32 %v1160, 16
      %v1790 = vshll.u32 %v1160, 16
      %v1792 = vrot.slane %v1790, 1
      %v1793 = vor.u32 %v1788, %v1792
      %v1795 = vshll.u32 %v1161, 16
      %v1797 = vrot.slane %v1795, 1
      %v1798 = vsel %vm1378, %v1793, %v1797
      %v1800 = vshrl.u32 %v1304, 16
      %v1802 = vshll.u32 %v1304, 16
      %v1804 = vrot.slane %v1802, 1
      %v1805 = vor.u32 %v1800, %v1804
      %v1807 = vshll.u32 %v1305, 16
      %v1809 = vrot.slane %v1807, 1
      %v1810 = vsel %vm1378, %v1805, %v1809
      %v1812 = vshrl.u32 %v1018, 16
      %v1814 = vshll.u32 %v1018, 16
      %v1816 = vrot.slane %v1814, 1
      %v1817 = vor.u32 %v1812, %v1816
      %v1819 = vshll.u32 %v1019, 16
      %v1821 = vrot.slane %v1819, 1
      %v1822 = vsel %vm1378, %v1817, %v1821
      %v1824 = vshrl.u32 %v1162, 16
      %v1826 = vshll.u32 %v1162, 16
      %v1828 = vrot.slane %v1826, 1
      %v1829 = vor.u32 %v1824, %v1828
      %v1831 = vshll.u32 %v1163, 16
      %v1833 = vrot.slane %v1831, 1
      %v1834 = vsel %vm1378, %v1829, %v1833
      %v1836 = vshrl.u32 %v1306, 16
      %v1838 = vshll.u32 %v1306, 16
      %v1840 = vrot.slane %v1838, 1
      %v1841 = vor.u32 %v1836, %v1840
      %v1843 = vshll.u32 %v1307, 16
      %v1845 = vrot.slane %v1843, 1
      %v1846 = vsel %vm1378, %v1841, %v1845
      %v1848 = vshrl.u32 %v1020, 16
      %v1850 = vshll.u32 %v1020, 16
      %v1852 = vrot.slane %v1850, 1
      %v1853 = vor.u32 %v1848, %v1852
      %v1855 = vshll.u32 %v1021, 16
      %v1857 = vrot.slane %v1855, 1
      %v1858 = vsel %vm1378, %v1853, %v1857
      %v1860 = vshrl.u32 %v1164, 16
      %v1862 = vshll.u32 %v1164, 16
      %v1864 = vrot.slane %v1862, 1
      %v1865 = vor.u32 %v1860, %v1864
      %v1867 = vshll.u32 %v1165, 16
      %v1869 = vrot.slane %v1867, 1
      %v1870 = vsel %vm1378, %v1865, %v1869
      %v1872 = vshrl.u32 %v1308, 16
      %v1874 = vshll.u32 %v1308, 16
      %v1876 = vrot.slane %v1874, 1
      %v1877 = vor.u32 %v1872, %v1876
      %v1879 = vshll.u32 %v1309, 16
      %v1881 = vrot.slane %v1879, 1
      %v1882 = vsel %vm1378, %v1877, %v1881
      %v1884 = vshrl.u32 %v1022, 16
      %v1886 = vshll.u32 %v1022, 16
      %v1888 = vrot.slane %v1886, 1
      %v1889 = vor.u32 %v1884, %v1888
      %v1891 = vshll.u32 %v1023, 16
      %v1893 = vrot.slane %v1891, 1
      %v1894 = vsel %vm1378, %v1889, %v1893
      %v1896 = vshrl.u32 %v1166, 16
      %v1898 = vshll.u32 %v1166, 16
      %v1900 = vrot.slane %v1898, 1
      %v1901 = vor.u32 %v1896, %v1900
      %v1903 = vshll.u32 %v1167, 16
      %v1905 = vrot.slane %v1903, 1
      %v1906 = vsel %vm1378, %v1901, %v1905
      %v1908 = vshrl.u32 %v1310, 16
      %v1910 = vshll.u32 %v1310, 16
      %v1912 = vrot.slane %v1910, 1
      %v1913 = vor.u32 %v1908, %v1912
      %v1915 = vshll.u32 %v1311, 16
      %v1917 = vrot.slane %v1915, 1
      %v1918 = vsel %vm1378, %v1913, %v1917
      %v1920 = vshrl.u32 %v1024, 16
      %v1922 = vshll.u32 %v1024, 16
      %v1924 = vrot.slane %v1922, 1
      %v1925 = vor.u32 %v1920, %v1924
      %v1927 = vshll.u32 %v1025, 16
      %v1929 = vrot.slane %v1927, 1
      %v1930 = vsel %vm1378, %v1925, %v1929
      %v1932 = vshrl.u32 %v1168, 16
      %v1934 = vshll.u32 %v1168, 16
      %v1936 = vrot.slane %v1934, 1
      %v1937 = vor.u32 %v1932, %v1936
      %v1939 = vshll.u32 %v1169, 16
      %v1941 = vrot.slane %v1939, 1
      %v1942 = vsel %vm1378, %v1937, %v1941
      %v1944 = vshrl.u32 %v1312, 16
      %v1946 = vshll.u32 %v1312, 16
      %v1948 = vrot.slane %v1946, 1
      %v1949 = vor.u32 %v1944, %v1948
      %v1951 = vshll.u32 %v1313, 16
      %v1953 = vrot.slane %v1951, 1
      %v1954 = vsel %vm1378, %v1949, %v1953
      %s2003 = scalar_lea.vmem %s1, 192
      %v2004 = vld [vmem:[%s2003] sm:$0xf]
      %v2005 = vld [vmem:[%s2003 + $0x4] sm:$0xf]
      %v2006 = vld [vmem:[%s2003 + $0x8] sm:$0xf]
      %v2007 = vld [vmem:[%s2003 + $0xc] sm:$0xf]
      %v2008 = vld [vmem:[%s2003 + $0x10] sm:$0xf]
      %v2009 = vld [vmem:[%s2003 + $0x14] sm:$0xf]
      %v2010 = vld [vmem:[%s2003 + $0x18] sm:$0xf]
      %v2011 = vld [vmem:[%s2003 + $0x1c] sm:$0xf]
      %v2012 = vld [vmem:[%s2003 + $0x20] sm:$0xf]
      %v2013 = vld [vmem:[%s2003 + $0x24] sm:$0xf]
      %v2014 = vld [vmem:[%s2003 + $0x28] sm:$0xf]
      %v2015 = vld [vmem:[%s2003 + $0x2c] sm:$0xf]
      %v2016 = vld [vmem:[%s2003 + $0x30] sm:$0xf]
      %v2017 = vld [vmem:[%s2003 + $0x34] sm:$0xf]
      %v2018 = vld [vmem:[%s2003 + $0x38] sm:$0xf]
      %v2019 = vld [vmem:[%s2003 + $0x3c] sm:$0xf]
      %v2020 = vld [vmem:[%s2003 + $0x40] sm:$0xf]
      %v2021 = vld [vmem:[%s2003 + $0x44] sm:$0xf]
      %v2022 = vld [vmem:[%s2003 + $0x48] sm:$0xf]
      %v2023 = vld [vmem:[%s2003 + $0x4c] sm:$0xf]
      %v2024 = vld [vmem:[%s2003 + $0x50] sm:$0xf]
      %v2025 = vld [vmem:[%s2003 + $0x54] sm:$0xf]
      %v2026 = vld [vmem:[%s2003 + $0x58] sm:$0xf]
      %v2027 = vld [vmem:[%s2003 + $0x5c] sm:$0xf]
      %v2028 = vld [vmem:[%s2003 + $0x60] sm:$0xf]
      %v2029 = vld [vmem:[%s2003 + $0x64] sm:$0xf]
      %v2030 = vld [vmem:[%s2003 + $0x68] sm:$0xf]
      %v2031 = vld [vmem:[%s2003 + $0x6c] sm:$0xf]
      %v2032 = vld [vmem:[%s2003 + $0x70] sm:$0xf]
      %v2033 = vld [vmem:[%s2003 + $0x74] sm:$0xf]
      %v2034 = vld [vmem:[%s2003 + $0x78] sm:$0xf]
      %v2035 = vld [vmem:[%s2003 + $0x7c] sm:$0xf]
      %v2036 = vld [vmem:[%s2003 + $0x80] sm:$0xf]
      %v2037 = vld [vmem:[%s2003 + $0x84] sm:$0xf]
      %v2038 = vld [vmem:[%s2003 + $0x88] sm:$0xf]
      %v2039 = vld [vmem:[%s2003 + $0x8c] sm:$0xf]
      %v2040 = vld [vmem:[%s2003 + $0x90] sm:$0xf]
      %v2041 = vld [vmem:[%s2003 + $0x94] sm:$0xf]
      %v2042 = vld [vmem:[%s2003 + $0x98] sm:$0xf]
      %v2043 = vld [vmem:[%s2003 + $0x9c] sm:$0xf]
      %v2044 = vld [vmem:[%s2003 + $0xa0] sm:$0xf]
      %v2045 = vld [vmem:[%s2003 + $0xa4] sm:$0xf]
      %v2046 = vld [vmem:[%s2003 + $0xa8] sm:$0xf]
      %v2047 = vld [vmem:[%s2003 + $0xac] sm:$0xf]
      %v2048 = vld [vmem:[%s2003 + $0xb0] sm:$0xf]
      %v2049 = vld [vmem:[%s2003 + $0xb4] sm:$0xf]
      %v2050 = vld [vmem:[%s2003 + $0xb8] sm:$0xf]
      %v2051 = vld [vmem:[%s2003 + $0xbc] sm:$0xf]
      %v2100 = vunpack.c.l.b16 %v2004
      %v2101 = vunpack.c.l.b16 %v2005
      %v2102 = vunpack.c.l.b16 %v2006
      %v2103 = vunpack.c.l.b16 %v2007
      %v2104 = vunpack.c.l.b16 %v2008
      %v2105 = vunpack.c.l.b16 %v2009
      %v2106 = vunpack.c.l.b16 %v2010
      %v2107 = vunpack.c.l.b16 %v2011
      %v2108 = vunpack.c.l.b16 %v2012
      %v2109 = vunpack.c.l.b16 %v2013
      %v2110 = vunpack.c.l.b16 %v2014
      %v2111 = vunpack.c.l.b16 %v2015
      %v2112 = vunpack.c.l.b16 %v2016
      %v2113 = vunpack.c.l.b16 %v2017
      %v2114 = vunpack.c.l.b16 %v2018
      %v2115 = vunpack.c.l.b16 %v2019
      %v2116 = vunpack.c.l.b16 %v2020
      %v2117 = vunpack.c.l.b16 %v2021
      %v2118 = vunpack.c.l.b16 %v2022
      %v2119 = vunpack.c.l.b16 %v2023
      %v2120 = vunpack.c.l.b16 %v2024
      %v2121 = vunpack.c.l.b16 %v2025
      %v2122 = vunpack.c.l.b16 %v2026
      %v2123 = vunpack.c.l.b16 %v2027
      %v2124 = vunpack.c.l.b16 %v2028
      %v2125 = vunpack.c.l.b16 %v2029
      %v2126 = vunpack.c.l.b16 %v2030
      %v2127 = vunpack.c.l.b16 %v2031
      %v2128 = vunpack.c.l.b16 %v2032
      %v2129 = vunpack.c.l.b16 %v2033
      %v2130 = vunpack.c.l.b16 %v2034
      %v2131 = vunpack.c.l.b16 %v2035
      %v2132 = vunpack.c.l.b16 %v2036
      %v2133 = vunpack.c.l.b16 %v2037
      %v2134 = vunpack.c.l.b16 %v2038
      %v2135 = vunpack.c.l.b16 %v2039
      %v2136 = vunpack.c.l.b16 %v2040
      %v2137 = vunpack.c.l.b16 %v2041
      %v2138 = vunpack.c.l.b16 %v2042
      %v2139 = vunpack.c.l.b16 %v2043
      %v2140 = vunpack.c.l.b16 %v2044
      %v2141 = vunpack.c.l.b16 %v2045
      %v2142 = vunpack.c.l.b16 %v2046
      %v2143 = vunpack.c.l.b16 %v2047
      %v2144 = vunpack.c.l.b16 %v2048
      %v2145 = vunpack.c.l.b16 %v2049
      %v2146 = vunpack.c.l.b16 %v2050
      %v2147 = vunpack.c.l.b16 %v2051
      %v2148 = vpack.c.b16 %v2101, %v2100
      %v2149 = vpack.c.b16 %v2103, %v2102
      %v2150 = vpack.c.b16 %v2105, %v2104
      %v2151 = vpack.c.b16 %v2107, %v2106
      %v2152 = vpack.c.b16 %v2109, %v2108
      %v2153 = vpack.c.b16 %v2111, %v2110
      %v2154 = vpack.c.b16 %v2113, %v2112
      %v2155 = vpack.c.b16 %v2115, %v2114
      %v2156 = vpack.c.b16 %v2117, %v2116
      %v2157 = vpack.c.b16 %v2119, %v2118
      %v2158 = vpack.c.b16 %v2121, %v2120
      %v2159 = vpack.c.b16 %v2123, %v2122
      %v2160 = vpack.c.b16 %v2125, %v2124
      %v2161 = vpack.c.b16 %v2127, %v2126
      %v2162 = vpack.c.b16 %v2129, %v2128
      %v2163 = vpack.c.b16 %v2131, %v2130
      %v2164 = vpack.c.b16 %v2133, %v2132
      %v2165 = vpack.c.b16 %v2135, %v2134
      %v2166 = vpack.c.b16 %v2137, %v2136
      %v2167 = vpack.c.b16 %v2139, %v2138
      %v2168 = vpack.c.b16 %v2141, %v2140
      %v2169 = vpack.c.b16 %v2143, %v2142
      %v2170 = vpack.c.b16 %v2145, %v2144
      %v2171 = vpack.c.b16 %v2147, %v2146
      %2196 = vmatprep.subr.bf16.mxu0 0
      %2197 = vmatpush1.bf16.msra.mxu0 %v2148
      %2198 = vmatprep.subr.bf16.mxu0 0
      %2199 = vmatpush1.bf16.msra.mxu0 %v2149
      %2200 = vmatprep.subr.bf16.mxu0 0
      %2201 = vmatpush1.bf16.msra.mxu0 %v2150
      %2202 = vmatprep.subr.bf16.mxu0 0
      %2203 = vmatpush1.bf16.msra.mxu0 %v2151
      %2204 = vmatprep.subr.bf16.mxu0 0
      %2205 = vmatpush1.bf16.msra.mxu0 %v2152
      %2206 = vmatprep.subr.bf16.mxu0 0
      %2207 = vmatpush1.bf16.msra.mxu0 %v2153
      %2208 = vmatprep.subr.bf16.mxu0 0
      %2209 = vmatpush1.bf16.msra.mxu0 %v2154
      %2210 = vmatprep.subr.bf16.mxu0 0
      %2211 = vmatpush1.bf16.msra.mxu0 %v2155
      %2212 = vmatprep.subr.bf16.mxu0 0
      %2213 = vmatpush1.bf16.msra.mxu0 %v2156
      %2214 = vmatprep.subr.bf16.mxu0 0
      %2215 = vmatpush1.bf16.msra.mxu0 %v2157
      %2216 = vmatprep.subr.bf16.mxu0 0
      %2217 = vmatpush1.bf16.msra.mxu0 %v2158
      %2218 = vmatprep.subr.bf16.mxu0 0
      %2219 = vmatpush1.bf16.msra.mxu0 %v2159
      %2220 = vmatprep.subr.bf16.mxu0 0
      %2221 = vmatpush1.bf16.msra.mxu0 %v2160
      %2222 = vmatprep.subr.bf16.mxu0 0
      %2223 = vmatpush1.bf16.msra.mxu0 %v2161
      %2224 = vmatprep.subr.bf16.mxu0 0
      %2225 = vmatpush1.bf16.msra.mxu0 %v2162
      %2226 = vmatprep.subr.bf16.mxu0 0
      %2227 = vmatpush1.bf16.msra.mxu0 %v2163
      %2228 = vmatprep.mubr.bf16.mxu0 %v1402
      %2229 = vmatmul.mubr.bf16.gmra.mrb[0].mxu0 %v1390
      %v2230 = vpop.f32.mrb[0].mxu0
      %v2231 = vadd.f32 0.0, %v2230
      %v2232 = vpop.f32.mrb[0].mxu0
      %v2233 = vpop.f32.mrb[0].mxu0
      %v2234 = vadd.f32 0.0, %v2233
      %v2235 = vpop.f32.mrb[0].mxu0
      %2236 = vmatprep.mubr.bf16.mxu0 %v1438
      %2237 = vmatmul.mubr.bf16.gmra.mrb[0].mxu0 %v1426
      %v2238 = vpop.f32.mrb[0].mxu0
      %v2239 = vadd.f32 0.0, %v2238
      %v2240 = vpop.f32.mrb[0].mxu0
      %v2241 = vpop.f32.mrb[0].mxu0
      %v2242 = vadd.f32 0.0, %v2241
      %v2243 = vpop.f32.mrb[0].mxu0
      %2244 = vmatprep.mubr.bf16.mxu0 %v1474
      %2245 = vmatmul.mubr.bf16.gmra.mrb[0].mxu0 %v1462
      %v2246 = vpop.f32.mrb[0].mxu0
      %v2247 = vadd.f32 0.0, %v2246
      %v2248 = vpop.f32.mrb[0].mxu0
      %v2249 = vpop.f32.mrb[0].mxu0
      %v2250 = vadd.f32 0.0, %v2249
      %v2251 = vpop.f32.mrb[0].mxu0
      %2252 = vmatprep.mubr.bf16.mxu0 %v1510
      %2253 = vmatmul.mubr.bf16.gmra.mrb[0].mxu0 %v1498
      %v2254 = vpop.f32.mrb[0].mxu0
      %v2255 = vadd.f32 0.0, %v2254
      %v2256 = vpop.f32.mrb[0].mxu0
      %v2257 = vpop.f32.mrb[0].mxu0
      %v2258 = vadd.f32 0.0, %v2257
      %v2259 = vpop.f32.mrb[0].mxu0
      %2260 = vmatprep.mubr.bf16.mxu0 %v1546
      %2261 = vmatmul.mubr.bf16.gmra.mrb[0].mxu0 %v1534
      %v2262 = vpop.f32.mrb[0].mxu0
      %v2263 = vadd.f32 0.0, %v2262
      %v2264 = vpop.f32.mrb[0].mxu0
      %v2265 = vpop.f32.mrb[0].mxu0
      %v2266 = vadd.f32 0.0, %v2265
      %v2267 = vpop.f32.mrb[0].mxu0
      %2268 = vmatprep.mubr.bf16.mxu0 %v1582
      %2269 = vmatmul.mubr.bf16.gmra.mrb[0].mxu0 %v1570
      %v2270 = vpop.f32.mrb[0].mxu0
      %v2271 = vadd.f32 0.0, %v2270
      %v2272 = vpop.f32.mrb[0].mxu0
      %v2273 = vpop.f32.mrb[0].mxu0
      %v2274 = vadd.f32 0.0, %v2273
      %v2275 = vpop.f32.mrb[0].mxu0
      %2276 = vmatprep.mubr.bf16.mxu0 %v1618
      %2277 = vmatmul.mubr.bf16.gmra.mrb[0].mxu0 %v1606
      %v2278 = vpop.f32.mrb[0].mxu0
      %v2279 = vadd.f32 0.0, %v2278
      %v2280 = vpop.f32.mrb[0].mxu0
      %v2281 = vpop.f32.mrb[0].mxu0
      %v2282 = vadd.f32 0.0, %v2281
      %v2283 = vpop.f32.mrb[0].mxu0
      %2284 = vmatprep.mubr.bf16.mxu0 %v1654
      %2285 = vmatmul.mubr.bf16.gmra.mrb[0].mxu0 %v1642
      %v2286 = vpop.f32.mrb[0].mxu0
      %v2287 = vadd.f32 0.0, %v2286
      %v2288 = vpop.f32.mrb[0].mxu0
      %v2289 = vpop.f32.mrb[0].mxu0
      %v2290 = vadd.f32 0.0, %v2289
      %v2291 = vpop.f32.mrb[0].mxu0
      %2292 = vmatprep.mubr.bf16.mxu0 %v1690
      %2293 = vmatmul.mubr.bf16.gmra.mrb[0].mxu0 %v1678
      %v2294 = vpop.f32.mrb[0].mxu0
      %v2295 = vadd.f32 0.0, %v2294
      %v2296 = vpop.f32.mrb[0].mxu0
      %v2297 = vpop.f32.mrb[0].mxu0
      %v2298 = vadd.f32 0.0, %v2297
      %v2299 = vpop.f32.mrb[0].mxu0
      %2300 = vmatprep.mubr.bf16.mxu0 %v1726
      %2301 = vmatmul.mubr.bf16.gmra.mrb[0].mxu0 %v1714
      %v2302 = vpop.f32.mrb[0].mxu0
      %v2303 = vadd.f32 0.0, %v2302
      %v2304 = vpop.f32.mrb[0].mxu0
      %v2305 = vpop.f32.mrb[0].mxu0
      %v2306 = vadd.f32 0.0, %v2305
      %v2307 = vpop.f32.mrb[0].mxu0
      %2308 = vmatprep.mubr.bf16.mxu0 %v1762
      %2309 = vmatmul.mubr.bf16.gmra.mrb[0].mxu0 %v1750
      %v2310 = vpop.f32.mrb[0].mxu0
      %v2311 = vadd.f32 0.0, %v2310
      %v2312 = vpop.f32.mrb[0].mxu0
      %v2313 = vpop.f32.mrb[0].mxu0
      %v2314 = vadd.f32 0.0, %v2313
      %v2315 = vpop.f32.mrb[0].mxu0
      %2316 = vmatprep.mubr.bf16.mxu0 %v1798
      %2317 = vmatmul.mubr.bf16.gmra.mrb[0].mxu0 %v1786
      %v2318 = vpop.f32.mrb[0].mxu0
      %v2319 = vadd.f32 0.0, %v2318
      %v2320 = vpop.f32.mrb[0].mxu0
      %v2321 = vpop.f32.mrb[0].mxu0
      %v2322 = vadd.f32 0.0, %v2321
      %v2323 = vpop.f32.mrb[0].mxu0
      %2324 = vmatprep.mubr.bf16.mxu0 %v1834
      %2325 = vmatmul.mubr.bf16.gmra.mrb[0].mxu0 %v1822
      %v2326 = vpop.f32.mrb[0].mxu0
      %v2327 = vadd.f32 0.0, %v2326
      %v2328 = vpop.f32.mrb[0].mxu0
      %v2329 = vpop.f32.mrb[0].mxu0
      %v2330 = vadd.f32 0.0, %v2329
      %v2331 = vpop.f32.mrb[0].mxu0
      %2332 = vmatprep.mubr.bf16.mxu0 %v1870
      %2333 = vmatmul.mubr.bf16.gmra.mrb[0].mxu0 %v1858
      %v2334 = vpop.f32.mrb[0].mxu0
      %v2335 = vadd.f32 0.0, %v2334
      %v2336 = vpop.f32.mrb[0].mxu0
      %v2337 = vpop.f32.mrb[0].mxu0
      %v2338 = vadd.f32 0.0, %v2337
      %v2339 = vpop.f32.mrb[0].mxu0
      %2340 = vmatprep.mubr.bf16.mxu0 %v1906
      %2341 = vmatmul.mubr.bf16.gmra.mrb[0].mxu0 %v1894
      %v2342 = vpop.f32.mrb[0].mxu0
      %v2343 = vadd.f32 0.0, %v2342
      %v2344 = vpop.f32.mrb[0].mxu0
      %v2345 = vpop.f32.mrb[0].mxu0
      %v2346 = vadd.f32 0.0, %v2345
      %v2347 = vpop.f32.mrb[0].mxu0
      %2348 = vmatprep.mubr.bf16.mxu0 %v1942
      %2349 = vmatmul.mubr.bf16.gmra.mrb[0].mxu0 %v1930
      %v2350 = vpop.f32.mrb[0].mxu0
      %v2351 = vadd.f32 0.0, %v2350
      %v2352 = vpop.f32.mrb[0].mxu0
      %v2353 = vpop.f32.mrb[0].mxu0
      %v2354 = vadd.f32 0.0, %v2353
      %v2355 = vpop.f32.mrb[0].mxu0
      %2356 = vdwg.mxu0
      %2357 = vmatprep.subr.bf16.mxu0 0
      %2358 = vmatpush1.bf16.msra.mxu0 %v2164
      %2359 = vmatprep.subr.bf16.mxu0 0
      %2360 = vmatpush1.bf16.msra.mxu0 %v2165
      %2361 = vmatprep.subr.bf16.mxu0 0
      %2362 = vmatpush1.bf16.msra.mxu0 %v2166
      %2363 = vmatprep.subr.bf16.mxu0 0
      %2364 = vmatpush1.bf16.msra.mxu0 %v2167
      %2365 = vmatprep.subr.bf16.mxu0 0
      %2366 = vmatpush1.bf16.msra.mxu0 %v2168
      %2367 = vmatprep.subr.bf16.mxu0 0
      %2368 = vmatpush1.bf16.msra.mxu0 %v2169
      %2369 = vmatprep.subr.bf16.mxu0 0
      %2370 = vmatpush1.bf16.msra.mxu0 %v2170
      %2371 = vmatprep.subr.bf16.mxu0 0
      %2372 = vmatpush1.bf16.msra.mxu0 %v2171
      %2373 = vmatprep.subr.bf16.mxu0 0
      %2374 = vmatpush1.bf16.msra.mxu0 0
      %2375 = vmatprep.subr.bf16.mxu0 0
      %2376 = vmatpush1.bf16.msra.mxu0 0
      %2377 = vmatprep.subr.bf16.mxu0 0
      %2378 = vmatpush1.bf16.msra.mxu0 0
      %2379 = vmatprep.subr.bf16.mxu0 0
      %2380 = vmatpush1.bf16.msra.mxu0 0
      %2381 = vmatprep.subr.bf16.mxu0 0
      %2382 = vmatpush1.bf16.msra.mxu0 0
      %2383 = vmatprep.subr.bf16.mxu0 0
      %2384 = vmatpush1.bf16.msra.mxu0 0
      %2385 = vmatprep.subr.bf16.mxu0 0
      %2386 = vmatpush1.bf16.msra.mxu0 0
      %2387 = vmatprep.subr.bf16.mxu0 0
      %2388 = vmatpush1.bf16.msra.mxu0 0
      %2389 = vmatprep.mubr.bf16.mxu0 0
      %2390 = vmatmul.mubr.bf16.gmra.mrb[0].mxu0 %v1414
      %v2391 = vpop.f32.mrb[0].mxu0
      %v2392 = vadd.f32 %v2231, %v2391
      %v2393 = vpop.f32.mrb[0].mxu0
      %v2394 = vpop.f32.mrb[0].mxu0
      %v2395 = vadd.f32 %v2234, %v2394
      %v2396 = vpop.f32.mrb[0].mxu0
      %2397 = vmatprep.mubr.bf16.mxu0 0
      %2398 = vmatmul.mubr.bf16.gmra.mrb[0].mxu0 %v1450
      %v2399 = vpop.f32.mrb[0].mxu0
      %v2400 = vadd.f32 %v2239, %v2399
      %v2401 = vpop.f32.mrb[0].mxu0
      %v2402 = vpop.f32.mrb[0].mxu0
      %v2403 = vadd.f32 %v2242, %v2402
      %v2404 = vpop.f32.mrb[0].mxu0
      %2405 = vmatprep.mubr.bf16.mxu0 0
      %2406 = vmatmul.mubr.bf16.gmra.mrb[0].mxu0 %v1486
      %v2407 = vpop.f32.mrb[0].mxu0
      %v2408 = vadd.f32 %v2247, %v2407
      %v2409 = vpop.f32.mrb[0].mxu0
      %v2410 = vpop.f32.mrb[0].mxu0
      %v2411 = vadd.f32 %v2250, %v2410
      %v2412 = vpop.f32.mrb[0].mxu0
      %2413 = vmatprep.mubr.bf16.mxu0 0
      %2414 = vmatmul.mubr.bf16.gmra.mrb[0].mxu0 %v1522
      %v2415 = vpop.f32.mrb[0].mxu0
      %v2416 = vadd.f32 %v2255, %v2415
      %v2417 = vpop.f32.mrb[0].mxu0
      %v2418 = vpop.f32.mrb[0].mxu0
      %v2419 = vadd.f32 %v2258, %v2418
      %v2420 = vpop.f32.mrb[0].mxu0
      %2421 = vmatprep.mubr.bf16.mxu0 0
      %2422 = vmatmul.mubr.bf16.gmra.mrb[0].mxu0 %v1558
      %v2423 = vpop.f32.mrb[0].mxu0
      %v2424 = vadd.f32 %v2263, %v2423
      %v2425 = vpop.f32.mrb[0].mxu0
      %v2426 = vpop.f32.mrb[0].mxu0
      %v2427 = vadd.f32 %v2266, %v2426
      %v2428 = vpop.f32.mrb[0].mxu0
      %2429 = vmatprep.mubr.bf16.mxu0 0
      %2430 = vmatmul.mubr.bf16.gmra.mrb[0].mxu0 %v1594
      %v2431 = vpop.f32.mrb[0].mxu0
      %v2432 = vadd.f32 %v2271, %v2431
      %v2433 = vpop.f32.mrb[0].mxu0
      %v2434 = vpop.f32.mrb[0].mxu0
      %v2435 = vadd.f32 %v2274, %v2434
      %v2436 = vpop.f32.mrb[0].mxu0
      %2437 = vmatprep.mubr.bf16.mxu0 0
      %2438 = vmatmul.mubr.bf16.gmra.mrb[0].mxu0 %v1630
      %v2439 = vpop.f32.mrb[0].mxu0
      %v2440 = vadd.f32 %v2279, %v2439
      %v2441 = vpop.f32.mrb[0].mxu0
      %v2442 = vpop.f32.mrb[0].mxu0
      %v2443 = vadd.f32 %v2282, %v2442
      %v2444 = vpop.f32.mrb[0].mxu0
      %2445 = vmatprep.mubr.bf16.mxu0 0
      %2446 = vmatmul.mubr.bf16.gmra.mrb[0].mxu0 %v1666
      %v2447 = vpop.f32.mrb[0].mxu0
      %v2448 = vadd.f32 %v2287, %v2447
      %v2449 = vpop.f32.mrb[0].mxu0
      %v2450 = vpop.f32.mrb[0].mxu0
      %v2451 = vadd.f32 %v2290, %v2450
      %v2452 = vpop.f32.mrb[0].mxu0
      %2453 = vmatprep.mubr.bf16.mxu0 0
      %2454 = vmatmul.mubr.bf16.gmra.mrb[0].mxu0 %v1702
      %v2455 = vpop.f32.mrb[0].mxu0
      %v2456 = vadd.f32 %v2295, %v2455
      %v2457 = vpop.f32.mrb[0].mxu0
      %v2458 = vpop.f32.mrb[0].mxu0
      %v2459 = vadd.f32 %v2298, %v2458
      %v2460 = vpop.f32.mrb[0].mxu0
      %2461 = vmatprep.mubr.bf16.mxu0 0
      %2462 = vmatmul.mubr.bf16.gmra.mrb[0].mxu0 %v1738
      %v2463 = vpop.f32.mrb[0].mxu0
      %v2464 = vadd.f32 %v2303, %v2463
      %v2465 = vpop.f32.mrb[0].mxu0
      %v2466 = vpop.f32.mrb[0].mxu0
      %v2467 = vadd.f32 %v2306, %v2466
      %v2468 = vpop.f32.mrb[0].mxu0
      %2469 = vmatprep.mubr.bf16.mxu0 0
      %2470 = vmatmul.mubr.bf16.gmra.mrb[0].mxu0 %v1774
      %v2471 = vpop.f32.mrb[0].mxu0
      %v2472 = vadd.f32 %v2311, %v2471
      %v2473 = vpop.f32.mrb[0].mxu0
      %v2474 = vpop.f32.mrb[0].mxu0
      %v2475 = vadd.f32 %v2314, %v2474
      %v2476 = vpop.f32.mrb[0].mxu0
      %2477 = vmatprep.mubr.bf16.mxu0 0
      %2478 = vmatmul.mubr.bf16.gmra.mrb[0].mxu0 %v1810
      %v2479 = vpop.f32.mrb[0].mxu0
      %v2480 = vadd.f32 %v2319, %v2479
      %v2481 = vpop.f32.mrb[0].mxu0
      %v2482 = vpop.f32.mrb[0].mxu0
      %v2483 = vadd.f32 %v2322, %v2482
      %v2484 = vpop.f32.mrb[0].mxu0
      %2485 = vmatprep.mubr.bf16.mxu0 0
      %2486 = vmatmul.mubr.bf16.gmra.mrb[0].mxu0 %v1846
      %v2487 = vpop.f32.mrb[0].mxu0
      %v2488 = vadd.f32 %v2327, %v2487
      %v2489 = vpop.f32.mrb[0].mxu0
      %v2490 = vpop.f32.mrb[0].mxu0
      %v2491 = vadd.f32 %v2330, %v2490
      %v2492 = vpop.f32.mrb[0].mxu0
      %2493 = vmatprep.mubr.bf16.mxu0 0
      %2494 = vmatmul.mubr.bf16.gmra.mrb[0].mxu0 %v1882
      %v2495 = vpop.f32.mrb[0].mxu0
      %v2496 = vadd.f32 %v2335, %v2495
      %v2497 = vpop.f32.mrb[0].mxu0
      %v2498 = vpop.f32.mrb[0].mxu0
      %v2499 = vadd.f32 %v2338, %v2498
      %v2500 = vpop.f32.mrb[0].mxu0
      %2501 = vmatprep.mubr.bf16.mxu0 0
      %2502 = vmatmul.mubr.bf16.gmra.mrb[0].mxu0 %v1918
      %v2503 = vpop.f32.mrb[0].mxu0
      %v2504 = vadd.f32 %v2343, %v2503
      %v2505 = vpop.f32.mrb[0].mxu0
      %v2506 = vpop.f32.mrb[0].mxu0
      %v2507 = vadd.f32 %v2346, %v2506
      %v2508 = vpop.f32.mrb[0].mxu0
      %2509 = vmatprep.mubr.bf16.mxu0 0
      %2510 = vmatmul.mubr.bf16.gmra.mrb[0].mxu0 %v1954
      %v2511 = vpop.f32.mrb[0].mxu0
      %v2512 = vadd.f32 %v2351, %v2511
      %v2513 = vpop.f32.mrb[0].mxu0
      %v2514 = vpop.f32.mrb[0].mxu0
      %v2515 = vadd.f32 %v2354, %v2514
      %v2516 = vpop.f32.mrb[0].mxu0
      %2517 = vdwg.mxu0
      %v2566 = vunpack.c.l.b16 %v1330
      %v2567 = vunpack.c.l.b16 %v1331
      %v2568 = vunpack.c.l.b16 %v1332
      %v2569 = vunpack.c.l.b16 %v1333
      %v2570 = vunpack.c.l.b16 %v1334
      %v2571 = vunpack.c.l.b16 %v1335
      %v2572 = vunpack.c.l.b16 %v1336
      %v2573 = vunpack.c.l.b16 %v1337
      %v2574 = vunpack.c.l.b16 %v1338
      %v2575 = vunpack.c.l.b16 %v1339
      %v2576 = vunpack.c.l.b16 %v1340
      %v2577 = vunpack.c.l.b16 %v1341
      %v2578 = vunpack.c.l.b16 %v1342
      %v2579 = vunpack.c.l.b16 %v1343
      %v2580 = vunpack.c.l.b16 %v1344
      %v2581 = vunpack.c.l.b16 %v1345
      %v2582 = vunpack.c.l.b16 %v1346
      %v2583 = vunpack.c.l.b16 %v1347
      %v2584 = vunpack.c.l.b16 %v1348
      %v2585 = vunpack.c.l.b16 %v1349
      %v2586 = vunpack.c.l.b16 %v1350
      %v2587 = vunpack.c.l.b16 %v1351
      %v2588 = vunpack.c.l.b16 %v1352
      %v2589 = vunpack.c.l.b16 %v1353
      %v2590 = vunpack.c.l.b16 %v1354
      %v2591 = vunpack.c.l.b16 %v1355
      %v2592 = vunpack.c.l.b16 %v1356
      %v2593 = vunpack.c.l.b16 %v1357
      %v2594 = vunpack.c.l.b16 %v1358
      %v2595 = vunpack.c.l.b16 %v1359
      %v2596 = vunpack.c.l.b16 %v1360
      %v2597 = vunpack.c.l.b16 %v1361
      %v2598 = vunpack.c.l.b16 %v1362
      %v2599 = vunpack.c.l.b16 %v1363
      %v2600 = vunpack.c.l.b16 %v1364
      %v2601 = vunpack.c.l.b16 %v1365
      %v2602 = vunpack.c.l.b16 %v1366
      %v2603 = vunpack.c.l.b16 %v1367
      %v2604 = vunpack.c.l.b16 %v1368
      %v2605 = vunpack.c.l.b16 %v1369
      %v2606 = vunpack.c.l.b16 %v1370
      %v2607 = vunpack.c.l.b16 %v1371
      %v2608 = vunpack.c.l.b16 %v1372
      %v2609 = vunpack.c.l.b16 %v1373
      %v2610 = vunpack.c.l.b16 %v1374
      %v2611 = vunpack.c.l.b16 %v1375
      %v2612 = vunpack.c.l.b16 %v1376
      %v2613 = vunpack.c.l.b16 %v1377
      %v2614 = vpack.c.b16 %v2567, %v2566
      %v2615 = vpack.c.b16 %v2569, %v2568
      %v2616 = vpack.c.b16 %v2571, %v2570
      %v2617 = vpack.c.b16 %v2573, %v2572
      %v2618 = vpack.c.b16 %v2575, %v2574
      %v2619 = vpack.c.b16 %v2577, %v2576
      %v2620 = vpack.c.b16 %v2579, %v2578
      %v2621 = vpack.c.b16 %v2581, %v2580
      %v2622 = vpack.c.b16 %v2583, %v2582
      %v2623 = vpack.c.b16 %v2585, %v2584
      %v2624 = vpack.c.b16 %v2587, %v2586
      %v2625 = vpack.c.b16 %v2589, %v2588
      %v2626 = vpack.c.b16 %v2591, %v2590
      %v2627 = vpack.c.b16 %v2593, %v2592
      %v2628 = vpack.c.b16 %v2595, %v2594
      %v2629 = vpack.c.b16 %v2597, %v2596
      %v2630 = vpack.c.b16 %v2599, %v2598
      %v2631 = vpack.c.b16 %v2601, %v2600
      %v2632 = vpack.c.b16 %v2603, %v2602
      %v2633 = vpack.c.b16 %v2605, %v2604
      %v2634 = vpack.c.b16 %v2607, %v2606
      %v2635 = vpack.c.b16 %v2609, %v2608
      %v2636 = vpack.c.b16 %v2611, %v2610
      %v2637 = vpack.c.b16 %v2613, %v2612
      %2662 = vmatprep.subr.bf16.mxu0 0
      %2663 = vmatpush1.bf16.msra.mxu0 %v2614
      %2664 = vmatprep.subr.bf16.mxu0 0
      %2665 = vmatpush1.bf16.msra.mxu0 %v2615
      %2666 = vmatprep.subr.bf16.mxu0 0
      %2667 = vmatpush1.bf16.msra.mxu0 %v2616
      %2668 = vmatprep.subr.bf16.mxu0 0
      %2669 = vmatpush1.bf16.msra.mxu0 %v2617
      %2670 = vmatprep.subr.bf16.mxu0 0
      %2671 = vmatpush1.bf16.msra.mxu0 %v2618
      %2672 = vmatprep.subr.bf16.mxu0 0
      %2673 = vmatpush1.bf16.msra.mxu0 %v2619
      %2674 = vmatprep.subr.bf16.mxu0 0
      %2675 = vmatpush1.bf16.msra.mxu0 %v2620
      %2676 = vmatprep.subr.bf16.mxu0 0
      %2677 = vmatpush1.bf16.msra.mxu0 %v2621
      %2678 = vmatprep.subr.bf16.mxu0 0
      %2679 = vmatpush1.bf16.msra.mxu0 %v2622
      %2680 = vmatprep.subr.bf16.mxu0 0
      %2681 = vmatpush1.bf16.msra.mxu0 %v2623
      %2682 = vmatprep.subr.bf16.mxu0 0
      %2683 = vmatpush1.bf16.msra.mxu0 %v2624
      %2684 = vmatprep.subr.bf16.mxu0 0
      %2685 = vmatpush1.bf16.msra.mxu0 %v2625
      %2686 = vmatprep.subr.bf16.mxu0 0
      %2687 = vmatpush1.bf16.msra.mxu0 %v2626
      %2688 = vmatprep.subr.bf16.mxu0 0
      %2689 = vmatpush1.bf16.msra.mxu0 %v2627
      %2690 = vmatprep.subr.bf16.mxu0 0
      %2691 = vmatpush1.bf16.msra.mxu0 %v2628
      %2692 = vmatprep.subr.bf16.mxu0 0
      %2693 = vmatpush1.bf16.msra.mxu0 %v2629
      %2694 = vmatprep.mubr.bf16.mxu0 %v1138
      %2695 = vmatmul.mubr.bf16.gmra.mrb[0].mxu0 %v994
      %v2696 = vpop.f32.mrb[0].mxu0
      %v2697 = vadd.f32 %v2392, %v2696
      %v2698 = vpop.f32.mrb[0].mxu0
      %v2699 = vpop.f32.mrb[0].mxu0
      %v2700 = vadd.f32 %v2395, %v2699
      %v2701 = vpop.f32.mrb[0].mxu0
      %2702 = vmatprep.mubr.bf16.mxu0 %v1140
      %2703 = vmatmul.mubr.bf16.gmra.mrb[0].mxu0 %v996
      %v2704 = vpop.f32.mrb[0].mxu0
      %v2705 = vadd.f32 %v2400, %v2704
      %v2706 = vpop.f32.mrb[0].mxu0
      %v2707 = vpop.f32.mrb[0].mxu0
      %v2708 = vadd.f32 %v2403, %v2707
      %v2709 = vpop.f32.mrb[0].mxu0
      %2710 = vmatprep.mubr.bf16.mxu0 %v1142
      %2711 = vmatmul.mubr.bf16.gmra.mrb[0].mxu0 %v998
      %v2712 = vpop.f32.mrb[0].mxu0
      %v2713 = vadd.f32 %v2408, %v2712
      %v2714 = vpop.f32.mrb[0].mxu0
      %v2715 = vpop.f32.mrb[0].mxu0
      %v2716 = vadd.f32 %v2411, %v2715
      %v2717 = vpop.f32.mrb[0].mxu0
      %2718 = vmatprep.mubr.bf16.mxu0 %v1144
      %2719 = vmatmul.mubr.bf16.gmra.mrb[0].mxu0 %v1000
      %v2720 = vpop.f32.mrb[0].mxu0
      %v2721 = vadd.f32 %v2416, %v2720
      %v2722 = vpop.f32.mrb[0].mxu0
      %v2723 = vpop.f32.mrb[0].mxu0
      %v2724 = vadd.f32 %v2419, %v2723
      %v2725 = vpop.f32.mrb[0].mxu0
      %2726 = vmatprep.mubr.bf16.mxu0 %v1146
      %2727 = vmatmul.mubr.bf16.gmra.mrb[0].mxu0 %v1002
      %v2728 = vpop.f32.mrb[0].mxu0
      %v2729 = vadd.f32 %v2424, %v2728
      %v2730 = vpop.f32.mrb[0].mxu0
      %v2731 = vpop.f32.mrb[0].mxu0
      %v2732 = vadd.f32 %v2427, %v2731
      %v2733 = vpop.f32.mrb[0].mxu0
      %2734 = vmatprep.mubr.bf16.mxu0 %v1148
      %2735 = vmatmul.mubr.bf16.gmra.mrb[0].mxu0 %v1004
      %v2736 = vpop.f32.mrb[0].mxu0
      %v2737 = vadd.f32 %v2432, %v2736
      %v2738 = vpop.f32.mrb[0].mxu0
      %v2739 = vpop.f32.mrb[0].mxu0
      %v2740 = vadd.f32 %v2435, %v2739
      %v2741 = vpop.f32.mrb[0].mxu0
      %2742 = vmatprep.mubr.bf16.mxu0 %v1150
      %2743 = vmatmul.mubr.bf16.gmra.mrb[0].mxu0 %v1006
      %v2744 = vpop.f32.mrb[0].mxu0
      %v2745 = vadd.f32 %v2440, %v2744
      %v2746 = vpop.f32.mrb[0].mxu0
      %v2747 = vpop.f32.mrb[0].mxu0
      %v2748 = vadd.f32 %v2443, %v2747
      %v2749 = vpop.f32.mrb[0].mxu0
      %2750 = vmatprep.mubr.bf16.mxu0 %v1152
      %2751 = vmatmul.mubr.bf16.gmra.mrb[0].mxu0 %v1008
      %v2752 = vpop.f32.mrb[0].mxu0
      %v2753 = vadd.f32 %v2448, %v2752
      %v2754 = vpop.f32.mrb[0].mxu0
      %v2755 = vpop.f32.mrb[0].mxu0
      %v2756 = vadd.f32 %v2451, %v2755
      %v2757 = vpop.f32.mrb[0].mxu0
      %2758 = vmatprep.mubr.bf16.mxu0 %v1154
      %2759 = vmatmul.mubr.bf16.gmra.mrb[0].mxu0 %v1010
      %v2760 = vpop.f32.mrb[0].mxu0
      %v2761 = vadd.f32 %v2456, %v2760
      %v2762 = vpop.f32.mrb[0].mxu0
      %v2763 = vpop.f32.mrb[0].mxu0
      %v2764 = vadd.f32 %v2459, %v2763
      %v2765 = vpop.f32.mrb[0].mxu0
      %2766 = vmatprep.mubr.bf16.mxu0 %v1156
      %2767 = vmatmul.mubr.bf16.gmra.mrb[0].mxu0 %v1012
      %v2768 = vpop.f32.mrb[0].mxu0
      %v2769 = vadd.f32 %v2464, %v2768
      %v2770 = vpop.f32.mrb[0].mxu0
      %v2771 = vpop.f32.mrb[0].mxu0
      %v2772 = vadd.f32 %v2467, %v2771
      %v2773 = vpop.f32.mrb[0].mxu0
      %2774 = vmatprep.mubr.bf16.mxu0 %v1158
      %2775 = vmatmul.mubr.bf16.gmra.mrb[0].mxu0 %v1014
      %v2776 = vpop.f32.mrb[0].mxu0
      %v2777 = vadd.f32 %v2472, %v2776
      %v2778 = vpop.f32.mrb[0].mxu0
      %v2779 = vpop.f32.mrb[0].mxu0
      %v2780 = vadd.f32 %v2475, %v2779
      %v2781 = vpop.f32.mrb[0].mxu0
      %2782 = vmatprep.mubr.bf16.mxu0 %v1160
      %2783 = vmatmul.mubr.bf16.gmra.mrb[0].mxu0 %v1016
      %v2784 = vpop.f32.mrb[0].mxu0
      %v2785 = vadd.f32 %v2480, %v2784
      %v2786 = vpop.f32.mrb[0].mxu0
      %v2787 = vpop.f32.mrb[0].mxu0
      %v2788 = vadd.f32 %v2483, %v2787
      %v2789 = vpop.f32.mrb[0].mxu0
      %2790 = vmatprep.mubr.bf16.mxu0 %v1162
      %2791 = vmatmul.mubr.bf16.gmra.mrb[0].mxu0 %v1018
      %v2792 = vpop.f32.mrb[0].mxu0
      %v2793 = vadd.f32 %v2488, %v2792
      %v2794 = vpop.f32.mrb[0].mxu0
      %v2795 = vpop.f32.mrb[0].mxu0
      %v2796 = vadd.f32 %v2491, %v2795
      %v2797 = vpop.f32.mrb[0].mxu0
      %2798 = vmatprep.mubr.bf16.mxu0 %v1164
      %2799 = vmatmul.mubr.bf16.gmra.mrb[0].mxu0 %v1020
      %v2800 = vpop.f32.mrb[0].mxu0
      %v2801 = vadd.f32 %v2496, %v2800
      %v2802 = vpop.f32.mrb[0].mxu0
      %v2803 = vpop.f32.mrb[0].mxu0
      %v2804 = vadd.f32 %v2499, %v2803
      %v2805 = vpop.f32.mrb[0].mxu0
      %2806 = vmatprep.mubr.bf16.mxu0 %v1166
      %2807 = vmatmul.mubr.bf16.gmra.mrb[0].mxu0 %v1022
      %v2808 = vpop.f32.mrb[0].mxu0
      %v2809 = vadd.f32 %v2504, %v2808
      %v2810 = vpop.f32.mrb[0].mxu0
      %v2811 = vpop.f32.mrb[0].mxu0
      %v2812 = vadd.f32 %v2507, %v2811
      %v2813 = vpop.f32.mrb[0].mxu0
      %2814 = vmatprep.mubr.bf16.mxu0 %v1168
      %2815 = vmatmul.mubr.bf16.gmra.mrb[0].mxu0 %v1024
      %v2816 = vpop.f32.mrb[0].mxu0
      %v2817 = vadd.f32 %v2512, %v2816
      %v2818 = vpop.f32.mrb[0].mxu0
      %v2819 = vpop.f32.mrb[0].mxu0
      %v2820 = vadd.f32 %v2515, %v2819
      %v2821 = vpop.f32.mrb[0].mxu0
      %2822 = vdwg.mxu0
      %2823 = vmatprep.subr.bf16.mxu0 0
      %2824 = vmatpush1.bf16.msra.mxu0 %v2630
      %2825 = vmatprep.subr.bf16.mxu0 0
      %2826 = vmatpush1.bf16.msra.mxu0 %v2631
      %2827 = vmatprep.subr.bf16.mxu0 0
      %2828 = vmatpush1.bf16.msra.mxu0 %v2632
      %2829 = vmatprep.subr.bf16.mxu0 0
      %2830 = vmatpush1.bf16.msra.mxu0 %v2633
      %2831 = vmatprep.subr.bf16.mxu0 0
      %2832 = vmatpush1.bf16.msra.mxu0 %v2634
      %2833 = vmatprep.subr.bf16.mxu0 0
      %2834 = vmatpush1.bf16.msra.mxu0 %v2635
      %2835 = vmatprep.subr.bf16.mxu0 0
      %2836 = vmatpush1.bf16.msra.mxu0 %v2636
      %2837 = vmatprep.subr.bf16.mxu0 0
      %2838 = vmatpush1.bf16.msra.mxu0 %v2637
      %2839 = vmatprep.subr.bf16.mxu0 0
      %2840 = vmatpush1.bf16.msra.mxu0 0
      %2841 = vmatprep.subr.bf16.mxu0 0
      %2842 = vmatpush1.bf16.msra.mxu0 0
      %2843 = vmatprep.subr.bf16.mxu0 0
      %2844 = vmatpush1.bf16.msra.mxu0 0
      %2845 = vmatprep.subr.bf16.mxu0 0
      %2846 = vmatpush1.bf16.msra.mxu0 0
      %2847 = vmatprep.subr.bf16.mxu0 0
      %2848 = vmatpush1.bf16.msra.mxu0 0
      %2849 = vmatprep.subr.bf16.mxu0 0
      %2850 = vmatpush1.bf16.msra.mxu0 0
      %2851 = vmatprep.subr.bf16.mxu0 0
      %2852 = vmatpush1.bf16.msra.mxu0 0
      %2853 = vmatprep.subr.bf16.mxu0 0
      %2854 = vmatpush1.bf16.msra.mxu0 0
      %2855 = vmatprep.mubr.bf16.mxu0 0
      %2856 = vmatmul.mubr.bf16.gmra.mrb[0].mxu0 %v1282
      %v2857 = vpop.f32.mrb[0].mxu0
      %v2858 = vadd.f32 %v2697, %v2857
      %v2859 = vpop.f32.mrb[0].mxu0
      %v2860 = vpop.f32.mrb[0].mxu0
      %v2861 = vadd.f32 %v2700, %v2860
      %v2862 = vpop.f32.mrb[0].mxu0
      %2863 = vmatprep.mubr.bf16.mxu0 0
      %2864 = vmatmul.mubr.bf16.gmra.mrb[0].mxu0 %v1284
      %v2865 = vpop.f32.mrb[0].mxu0
      %v2866 = vadd.f32 %v2705, %v2865
      %v2867 = vpop.f32.mrb[0].mxu0
      %v2868 = vpop.f32.mrb[0].mxu0
      %v2869 = vadd.f32 %v2708, %v2868
      %v2870 = vpop.f32.mrb[0].mxu0
      %2871 = vmatprep.mubr.bf16.mxu0 0
      %2872 = vmatmul.mubr.bf16.gmra.mrb[0].mxu0 %v1286
      %v2873 = vpop.f32.mrb[0].mxu0
      %v2874 = vadd.f32 %v2713, %v2873
      %v2875 = vpop.f32.mrb[0].mxu0
      %v2876 = vpop.f32.mrb[0].mxu0
      %v2877 = vadd.f32 %v2716, %v2876
      %v2878 = vpop.f32.mrb[0].mxu0
      %2879 = vmatprep.mubr.bf16.mxu0 0
      %2880 = vmatmul.mubr.bf16.gmra.mrb[0].mxu0 %v1288
      %v2881 = vpop.f32.mrb[0].mxu0
      %v2882 = vadd.f32 %v2721, %v2881
      %v2883 = vpop.f32.mrb[0].mxu0
      %v2884 = vpop.f32.mrb[0].mxu0
      %v2885 = vadd.f32 %v2724, %v2884
      %v2886 = vpop.f32.mrb[0].mxu0
      %2887 = vmatprep.mubr.bf16.mxu0 0
      %2888 = vmatmul.mubr.bf16.gmra.mrb[0].mxu0 %v1290
      %v2889 = vpop.f32.mrb[0].mxu0
      %v2890 = vadd.f32 %v2729, %v2889
      %v2891 = vpop.f32.mrb[0].mxu0
      %v2892 = vpop.f32.mrb[0].mxu0
      %v2893 = vadd.f32 %v2732, %v2892
      %v2894 = vpop.f32.mrb[0].mxu0
      %2895 = vmatprep.mubr.bf16.mxu0 0
      %2896 = vmatmul.mubr.bf16.gmra.mrb[0].mxu0 %v1292
      %v2897 = vpop.f32.mrb[0].mxu0
      %v2898 = vadd.f32 %v2737, %v2897
      %v2899 = vpop.f32.mrb[0].mxu0
      %v2900 = vpop.f32.mrb[0].mxu0
      %v2901 = vadd.f32 %v2740, %v2900
      %v2902 = vpop.f32.mrb[0].mxu0
      %2903 = vmatprep.mubr.bf16.mxu0 0
      %2904 = vmatmul.mubr.bf16.gmra.mrb[0].mxu0 %v1294
      %v2905 = vpop.f32.mrb[0].mxu0
      %v2906 = vadd.f32 %v2745, %v2905
      %v2907 = vpop.f32.mrb[0].mxu0
      %v2908 = vpop.f32.mrb[0].mxu0
      %v2909 = vadd.f32 %v2748, %v2908
      %v2910 = vpop.f32.mrb[0].mxu0
      %2911 = vmatprep.mubr.bf16.mxu0 0
      %2912 = vmatmul.mubr.bf16.gmra.mrb[0].mxu0 %v1296
      %v2913 = vpop.f32.mrb[0].mxu0
      %v2914 = vadd.f32 %v2753, %v2913
      %v2915 = vpop.f32.mrb[0].mxu0
      %v2916 = vpop.f32.mrb[0].mxu0
      %v2917 = vadd.f32 %v2756, %v2916
      %v2918 = vpop.f32.mrb[0].mxu0
      %2919 = vmatprep.mubr.bf16.mxu0 0
      %2920 = vmatmul.mubr.bf16.gmra.mrb[0].mxu0 %v1298
      %v2921 = vpop.f32.mrb[0].mxu0
      %v2922 = vadd.f32 %v2761, %v2921
      %v2923 = vpop.f32.mrb[0].mxu0
      %v2924 = vpop.f32.mrb[0].mxu0
      %v2925 = vadd.f32 %v2764, %v2924
      %v2926 = vpop.f32.mrb[0].mxu0
      %2927 = vmatprep.mubr.bf16.mxu0 0
      %2928 = vmatmul.mubr.bf16.gmra.mrb[0].mxu0 %v1300
      %v2929 = vpop.f32.mrb[0].mxu0
      %v2930 = vadd.f32 %v2769, %v2929
      %v2931 = vpop.f32.mrb[0].mxu0
      %v2932 = vpop.f32.mrb[0].mxu0
      %v2933 = vadd.f32 %v2772, %v2932
      %v2934 = vpop.f32.mrb[0].mxu0
      %2935 = vmatprep.mubr.bf16.mxu0 0
      %2936 = vmatmul.mubr.bf16.gmra.mrb[0].mxu0 %v1302
      %v2937 = vpop.f32.mrb[0].mxu0
      %v2938 = vadd.f32 %v2777, %v2937
      %v2939 = vpop.f32.mrb[0].mxu0
      %v2940 = vpop.f32.mrb[0].mxu0
      %v2941 = vadd.f32 %v2780, %v2940
      %v2942 = vpop.f32.mrb[0].mxu0
      %2943 = vmatprep.mubr.bf16.mxu0 0
      %2944 = vmatmul.mubr.bf16.gmra.mrb[0].mxu0 %v1304
      %v2945 = vpop.f32.mrb[0].mxu0
      %v2946 = vadd.f32 %v2785, %v2945
      %v2947 = vpop.f32.mrb[0].mxu0
      %v2948 = vpop.f32.mrb[0].mxu0
      %v2949 = vadd.f32 %v2788, %v2948
      %v2950 = vpop.f32.mrb[0].mxu0
      %2951 = vmatprep.mubr.bf16.mxu0 0
      %2952 = vmatmul.mubr.bf16.gmra.mrb[0].mxu0 %v1306
      %v2953 = vpop.f32.mrb[0].mxu0
      %v2954 = vadd.f32 %v2793, %v2953
      %v2955 = vpop.f32.mrb[0].mxu0
      %v2956 = vpop.f32.mrb[0].mxu0
      %v2957 = vadd.f32 %v2796, %v2956
      %v2958 = vpop.f32.mrb[0].mxu0
      %2959 = vmatprep.mubr.bf16.mxu0 0
      %2960 = vmatmul.mubr.bf16.gmra.mrb[0].mxu0 %v1308
      %v2961 = vpop.f32.mrb[0].mxu0
      %v2962 = vadd.f32 %v2801, %v2961
      %v2963 = vpop.f32.mrb[0].mxu0
      %v2964 = vpop.f32.mrb[0].mxu0
      %v2965 = vadd.f32 %v2804, %v2964
      %v2966 = vpop.f32.mrb[0].mxu0
      %2967 = vmatprep.mubr.bf16.mxu0 0
      %2968 = vmatmul.mubr.bf16.gmra.mrb[0].mxu0 %v1310
      %v2969 = vpop.f32.mrb[0].mxu0
      %v2970 = vadd.f32 %v2809, %v2969
      %v2971 = vpop.f32.mrb[0].mxu0
      %v2972 = vpop.f32.mrb[0].mxu0
      %v2973 = vadd.f32 %v2812, %v2972
      %v2974 = vpop.f32.mrb[0].mxu0
      %2975 = vmatprep.mubr.bf16.mxu0 0
      %2976 = vmatmul.mubr.bf16.gmra.mrb[0].mxu0 %v1312
      %v2977 = vpop.f32.mrb[0].mxu0
      %v2978 = vadd.f32 %v2817, %v2977
      %v2979 = vpop.f32.mrb[0].mxu0
      %v2980 = vpop.f32.mrb[0].mxu0
      %v2981 = vadd.f32 %v2820, %v2980
      %v2982 = vpop.f32.mrb[0].mxu0
      %2983 = vdwg.mxu0
      %vm2984 = vcmask 1046528
      %v2985 = vrot.slane %v994, 1
      %v2986 = vrot.slane %v995, 1
      %v2987 = vsel %vm2984, %v2985, %v2986
      %v2988 = vrot.slane %v1138, 1
      %v2989 = vrot.slane %v1139, 1
      %v2990 = vsel %vm2984, %v2988, %v2989
      %v2991 = vrot.slane %v1282, 1
      %v2992 = vrot.slane %v1283, 1
      %v2993 = vsel %vm2984, %v2991, %v2992
      %v2994 = vrot.slane %v996, 1
      %v2995 = vrot.slane %v997, 1
      %v2996 = vsel %vm2984, %v2994, %v2995
      %v2997 = vrot.slane %v1140, 1
      %v2998 = vrot.slane %v1141, 1
      %v2999 = vsel %vm2984, %v2997, %v2998
      %v3000 = vrot.slane %v1284, 1
      %v3001 = vrot.slane %v1285, 1
      %v3002 = vsel %vm2984, %v3000, %v3001
      %v3003 = vrot.slane %v998, 1
      %v3004 = vrot.slane %v999, 1
      %v3005 = vsel %vm2984, %v3003, %v3004
      %v3006 = vrot.slane %v1142, 1
      %v3007 = vrot.slane %v1143, 1
      %v3008 = vsel %vm2984, %v3006, %v3007
      %v3009 = vrot.slane %v1286, 1
      %v3010 = vrot.slane %v1287, 1
      %v3011 = vsel %vm2984, %v3009, %v3010
      %v3012 = vrot.slane %v1000, 1
      %v3013 = vrot.slane %v1001, 1
      %v3014 = vsel %vm2984, %v3012, %v3013
      %v3015 = vrot.slane %v1144, 1
      %v3016 = vrot.slane %v1145, 1
      %v3017 = vsel %vm2984, %v3015, %v3016
      %v3018 = vrot.slane %v1288, 1
      %v3019 = vrot.slane %v1289, 1
      %v3020 = vsel %vm2984, %v3018, %v3019
      %v3021 = vrot.slane %v1002, 1
      %v3022 = vrot.slane %v1003, 1
      %v3023 = vsel %vm2984, %v3021, %v3022
      %v3024 = vrot.slane %v1146, 1
      %v3025 = vrot.slane %v1147, 1
      %v3026 = vsel %vm2984, %v3024, %v3025
      %v3027 = vrot.slane %v1290, 1
      %v3028 = vrot.slane %v1291, 1
      %v3029 = vsel %vm2984, %v3027, %v3028
      %v3030 = vrot.slane %v1004, 1
      %v3031 = vrot.slane %v1005, 1
      %v3032 = vsel %vm2984, %v3030, %v3031
      %v3033 = vrot.slane %v1148, 1
      %v3034 = vrot.slane %v1149, 1
      %v3035 = vsel %vm2984, %v3033, %v3034
      %v3036 = vrot.slane %v1292, 1
      %v3037 = vrot.slane %v1293, 1
      %v3038 = vsel %vm2984, %v3036, %v3037
      %v3039 = vrot.slane %v1006, 1
      %v3040 = vrot.slane %v1007, 1
      %v3041 = vsel %vm2984, %v3039, %v3040
      %v3042 = vrot.slane %v1150, 1
      %v3043 = vrot.slane %v1151, 1
      %v3044 = vsel %vm2984, %v3042, %v3043
      %v3045 = vrot.slane %v1294, 1
      %v3046 = vrot.slane %v1295, 1
      %v3047 = vsel %vm2984, %v3045, %v3046
      %v3048 = vrot.slane %v1008, 1
      %v3049 = vrot.slane %v1009, 1
      %v3050 = vsel %vm2984, %v3048, %v3049
      %v3051 = vrot.slane %v1152, 1
      %v3052 = vrot.slane %v1153, 1
      %v3053 = vsel %vm2984, %v3051, %v3052
      %v3054 = vrot.slane %v1296, 1
      %v3055 = vrot.slane %v1297, 1
      %v3056 = vsel %vm2984, %v3054, %v3055
      %v3057 = vrot.slane %v1010, 1
      %v3058 = vrot.slane %v1011, 1
      %v3059 = vsel %vm2984, %v3057, %v3058
      %v3060 = vrot.slane %v1154, 1
      %v3061 = vrot.slane %v1155, 1
      %v3062 = vsel %vm2984, %v3060, %v3061
      %v3063 = vrot.slane %v1298, 1
      %v3064 = vrot.slane %v1299, 1
      %v3065 = vsel %vm2984, %v3063, %v3064
      %v3066 = vrot.slane %v1012, 1
      %v3067 = vrot.slane %v1013, 1
      %v3068 = vsel %vm2984, %v3066, %v3067
      %v3069 = vrot.slane %v1156, 1
      %v3070 = vrot.slane %v1157, 1
      %v3071 = vsel %vm2984, %v3069, %v3070
      %v3072 = vrot.slane %v1300, 1
      %v3073 = vrot.slane %v1301, 1
      %v3074 = vsel %vm2984, %v3072, %v3073
      %v3075 = vrot.slane %v1014, 1
      %v3076 = vrot.slane %v1015, 1
      %v3077 = vsel %vm2984, %v3075, %v3076
      %v3078 = vrot.slane %v1158, 1
      %v3079 = vrot.slane %v1159, 1
      %v3080 = vsel %vm2984, %v3078, %v3079
      %v3081 = vrot.slane %v1302, 1
      %v3082 = vrot.slane %v1303, 1
      %v3083 = vsel %vm2984, %v3081, %v3082
      %v3084 = vrot.slane %v1016, 1
      %v3085 = vrot.slane %v1017, 1
      %v3086 = vsel %vm2984, %v3084, %v3085
      %v3087 = vrot.slane %v1160, 1
      %v3088 = vrot.slane %v1161, 1
      %v3089 = vsel %vm2984, %v3087, %v3088
      %v3090 = vrot.slane %v1304, 1
      %v3091 = vrot.slane %v1305, 1
      %v3092 = vsel %vm2984, %v3090, %v3091
      %v3093 = vrot.slane %v1018, 1
      %v3094 = vrot.slane %v1019, 1
      %v3095 = vsel %vm2984, %v3093, %v3094
      %v3096 = vrot.slane %v1162, 1
      %v3097 = vrot.slane %v1163, 1
      %v3098 = vsel %vm2984, %v3096, %v3097
      %v3099 = vrot.slane %v1306, 1
      %v3100 = vrot.slane %v1307, 1
      %v3101 = vsel %vm2984, %v3099, %v3100
      %v3102 = vrot.slane %v1020, 1
      %v3103 = vrot.slane %v1021, 1
      %v3104 = vsel %vm2984, %v3102, %v3103
      %v3105 = vrot.slane %v1164, 1
      %v3106 = vrot.slane %v1165, 1
      %v3107 = vsel %vm2984, %v3105, %v3106
      %v3108 = vrot.slane %v1308, 1
      %v3109 = vrot.slane %v1309, 1
      %v3110 = vsel %vm2984, %v3108, %v3109
      %v3111 = vrot.slane %v1022, 1
      %v3112 = vrot.slane %v1023, 1
      %v3113 = vsel %vm2984, %v3111, %v3112
      %v3114 = vrot.slane %v1166, 1
      %v3115 = vrot.slane %v1167, 1
      %v3116 = vsel %vm2984, %v3114, %v3115
      %v3117 = vrot.slane %v1310, 1
      %v3118 = vrot.slane %v1311, 1
      %v3119 = vsel %vm2984, %v3117, %v3118
      %v3120 = vrot.slane %v1024, 1
      %v3121 = vrot.slane %v1025, 1
      %v3122 = vsel %vm2984, %v3120, %v3121
      %v3123 = vrot.slane %v1168, 1
      %v3124 = vrot.slane %v1169, 1
      %v3125 = vsel %vm2984, %v3123, %v3124
      %v3126 = vrot.slane %v1312, 1
      %v3127 = vrot.slane %v1313, 1
      %v3128 = vsel %vm2984, %v3126, %v3127
      %s3177 = scalar_lea.vmem %s1, 384
      %v3178 = vld [vmem:[%s3177] sm:$0xf]
      %v3179 = vld [vmem:[%s3177 + $0x4] sm:$0xf]
      %v3180 = vld [vmem:[%s3177 + $0x8] sm:$0xf]
      %v3181 = vld [vmem:[%s3177 + $0xc] sm:$0xf]
      %v3182 = vld [vmem:[%s3177 + $0x10] sm:$0xf]
      %v3183 = vld [vmem:[%s3177 + $0x14] sm:$0xf]
      %v3184 = vld [vmem:[%s3177 + $0x18] sm:$0xf]
      %v3185 = vld [vmem:[%s3177 + $0x1c] sm:$0xf]
      %v3186 = vld [vmem:[%s3177 + $0x20] sm:$0xf]
      %v3187 = vld [vmem:[%s3177 + $0x24] sm:$0xf]
      %v3188 = vld [vmem:[%s3177 + $0x28] sm:$0xf]
      %v3189 = vld [vmem:[%s3177 + $0x2c] sm:$0xf]
      %v3190 = vld [vmem:[%s3177 + $0x30] sm:$0xf]
      %v3191 = vld [vmem:[%s3177 + $0x34] sm:$0xf]
      %v3192 = vld [vmem:[%s3177 + $0x38] sm:$0xf]
      %v3193 = vld [vmem:[%s3177 + $0x3c] sm:$0xf]
      %v3194 = vld [vmem:[%s3177 + $0x40] sm:$0xf]
      %v3195 = vld [vmem:[%s3177 + $0x44] sm:$0xf]
      %v3196 = vld [vmem:[%s3177 + $0x48] sm:$0xf]
      %v3197 = vld [vmem:[%s3177 + $0x4c] sm:$0xf]
      %v3198 = vld [vmem:[%s3177 + $0x50] sm:$0xf]
      %v3199 = vld [vmem:[%s3177 + $0x54] sm:$0xf]
      %v3200 = vld [vmem:[%s3177 + $0x58] sm:$0xf]
      %v3201 = vld [vmem:[%s3177 + $0x5c] sm:$0xf]
      %v3202 = vld [vmem:[%s3177 + $0x60] sm:$0xf]
      %v3203 = vld [vmem:[%s3177 + $0x64] sm:$0xf]
      %v3204 = vld [vmem:[%s3177 + $0x68] sm:$0xf]
      %v3205 = vld [vmem:[%s3177 + $0x6c] sm:$0xf]
      %v3206 = vld [vmem:[%s3177 + $0x70] sm:$0xf]
      %v3207 = vld [vmem:[%s3177 + $0x74] sm:$0xf]
      %v3208 = vld [vmem:[%s3177 + $0x78] sm:$0xf]
      %v3209 = vld [vmem:[%s3177 + $0x7c] sm:$0xf]
      %v3210 = vld [vmem:[%s3177 + $0x80] sm:$0xf]
      %v3211 = vld [vmem:[%s3177 + $0x84] sm:$0xf]
      %v3212 = vld [vmem:[%s3177 + $0x88] sm:$0xf]
      %v3213 = vld [vmem:[%s3177 + $0x8c] sm:$0xf]
      %v3214 = vld [vmem:[%s3177 + $0x90] sm:$0xf]
      %v3215 = vld [vmem:[%s3177 + $0x94] sm:$0xf]
      %v3216 = vld [vmem:[%s3177 + $0x98] sm:$0xf]
      %v3217 = vld [vmem:[%s3177 + $0x9c] sm:$0xf]
      %v3218 = vld [vmem:[%s3177 + $0xa0] sm:$0xf]
      %v3219 = vld [vmem:[%s3177 + $0xa4] sm:$0xf]
      %v3220 = vld [vmem:[%s3177 + $0xa8] sm:$0xf]
      %v3221 = vld [vmem:[%s3177 + $0xac] sm:$0xf]
      %v3222 = vld [vmem:[%s3177 + $0xb0] sm:$0xf]
      %v3223 = vld [vmem:[%s3177 + $0xb4] sm:$0xf]
      %v3224 = vld [vmem:[%s3177 + $0xb8] sm:$0xf]
      %v3225 = vld [vmem:[%s3177 + $0xbc] sm:$0xf]
      %v3274 = vunpack.c.l.b16 %v3178
      %v3275 = vunpack.c.l.b16 %v3179
      %v3276 = vunpack.c.l.b16 %v3180
      %v3277 = vunpack.c.l.b16 %v3181
      %v3278 = vunpack.c.l.b16 %v3182
      %v3279 = vunpack.c.l.b16 %v3183
      %v3280 = vunpack.c.l.b16 %v3184
      %v3281 = vunpack.c.l.b16 %v3185
      %v3282 = vunpack.c.l.b16 %v3186
      %v3283 = vunpack.c.l.b16 %v3187
      %v3284 = vunpack.c.l.b16 %v3188
      %v3285 = vunpack.c.l.b16 %v3189
      %v3286 = vunpack.c.l.b16 %v3190
      %v3287 = vunpack.c.l.b16 %v3191
      %v3288 = vunpack.c.l.b16 %v3192
      %v3289 = vunpack.c.l.b16 %v3193
      %v3290 = vunpack.c.l.b16 %v3194
      %v3291 = vunpack.c.l.b16 %v3195
      %v3292 = vunpack.c.l.b16 %v3196
      %v3293 = vunpack.c.l.b16 %v3197
      %v3294 = vunpack.c.l.b16 %v3198
      %v3295 = vunpack.c.l.b16 %v3199
      %v3296 = vunpack.c.l.b16 %v3200
      %v3297 = vunpack.c.l.b16 %v3201
      %v3298 = vunpack.c.l.b16 %v3202
      %v3299 = vunpack.c.l.b16 %v3203
      %v3300 = vunpack.c.l.b16 %v3204
      %v3301 = vunpack.c.l.b16 %v3205
      %v3302 = vunpack.c.l.b16 %v3206
      %v3303 = vunpack.c.l.b16 %v3207
      %v3304 = vunpack.c.l.b16 %v3208
      %v3305 = vunpack.c.l.b16 %v3209
      %v3306 = vunpack.c.l.b16 %v3210
      %v3307 = vunpack.c.l.b16 %v3211
      %v3308 = vunpack.c.l.b16 %v3212
      %v3309 = vunpack.c.l.b16 %v3213
      %v3310 = vunpack.c.l.b16 %v3214
      %v3311 = vunpack.c.l.b16 %v3215
      %v3312 = vunpack.c.l.b16 %v3216
      %v3313 = vunpack.c.l.b16 %v3217
      %v3314 = vunpack.c.l.b16 %v3218
      %v3315 = vunpack.c.l.b16 %v3219
      %v3316 = vunpack.c.l.b16 %v3220
      %v3317 = vunpack.c.l.b16 %v3221
      %v3318 = vunpack.c.l.b16 %v3222
      %v3319 = vunpack.c.l.b16 %v3223
      %v3320 = vunpack.c.l.b16 %v3224
      %v3321 = vunpack.c.l.b16 %v3225
      %v3322 = vpack.c.b16 %v3275, %v3274
      %v3323 = vpack.c.b16 %v3277, %v3276
      %v3324 = vpack.c.b16 %v3279, %v3278
      %v3325 = vpack.c.b16 %v3281, %v3280
      %v3326 = vpack.c.b16 %v3283, %v3282
      %v3327 = vpack.c.b16 %v3285, %v3284
      %v3328 = vpack.c.b16 %v3287, %v3286
      %v3329 = vpack.c.b16 %v3289, %v3288
      %v3330 = vpack.c.b16 %v3291, %v3290
      %v3331 = vpack.c.b16 %v3293, %v3292
      %v3332 = vpack.c.b16 %v3295, %v3294
      %v3333 = vpack.c.b16 %v3297, %v3296
      %v3334 = vpack.c.b16 %v3299, %v3298
      %v3335 = vpack.c.b16 %v3301, %v3300
      %v3336 = vpack.c.b16 %v3303, %v3302
      %v3337 = vpack.c.b16 %v3305, %v3304
      %v3338 = vpack.c.b16 %v3307, %v3306
      %v3339 = vpack.c.b16 %v3309, %v3308
      %v3340 = vpack.c.b16 %v3311, %v3310
      %v3341 = vpack.c.b16 %v3313, %v3312
      %v3342 = vpack.c.b16 %v3315, %v3314
      %v3343 = vpack.c.b16 %v3317, %v3316
      %v3344 = vpack.c.b16 %v3319, %v3318
      %v3345 = vpack.c.b16 %v3321, %v3320
      %3370 = vmatprep.subr.bf16.mxu0 0
      %3371 = vmatpush1.bf16.msra.mxu0 %v3322
      %3372 = vmatprep.subr.bf16.mxu0 0
      %3373 = vmatpush1.bf16.msra.mxu0 %v3323
      %3374 = vmatprep.subr.bf16.mxu0 0
      %3375 = vmatpush1.bf16.msra.mxu0 %v3324
      %3376 = vmatprep.subr.bf16.mxu0 0
      %3377 = vmatpush1.bf16.msra.mxu0 %v3325
      %3378 = vmatprep.subr.bf16.mxu0 0
      %3379 = vmatpush1.bf16.msra.mxu0 %v3326
      %3380 = vmatprep.subr.bf16.mxu0 0
      %3381 = vmatpush1.bf16.msra.mxu0 %v3327
      %3382 = vmatprep.subr.bf16.mxu0 0
      %3383 = vmatpush1.bf16.msra.mxu0 %v3328
      %3384 = vmatprep.subr.bf16.mxu0 0
      %3385 = vmatpush1.bf16.msra.mxu0 %v3329
      %3386 = vmatprep.subr.bf16.mxu0 0
      %3387 = vmatpush1.bf16.msra.mxu0 %v3330
      %3388 = vmatprep.subr.bf16.mxu0 0
      %3389 = vmatpush1.bf16.msra.mxu0 %v3331
      %3390 = vmatprep.subr.bf16.mxu0 0
      %3391 = vmatpush1.bf16.msra.mxu0 %v3332
      %3392 = vmatprep.subr.bf16.mxu0 0
      %3393 = vmatpush1.bf16.msra.mxu0 %v3333
      %3394 = vmatprep.subr.bf16.mxu0 0
      %3395 = vmatpush1.bf16.msra.mxu0 %v3334
      %3396 = vmatprep.subr.bf16.mxu0 0
      %3397 = vmatpush1.bf16.msra.mxu0 %v3335
      %3398 = vmatprep.subr.bf16.mxu0 0
      %3399 = vmatpush1.bf16.msra.mxu0 %v3336
      %3400 = vmatprep.subr.bf16.mxu0 0
      %3401 = vmatpush1.bf16.msra.mxu0 %v3337
      %3402 = vmatprep.mubr.bf16.mxu0 %v2990
      %3403 = vmatmul.mubr.bf16.gmra.mrb[0].mxu0 %v2987
      %v3404 = vpop.f32.mrb[0].mxu0
      %v3405 = vadd.f32 0.0, %v3404
      %v3406 = vpop.f32.mrb[0].mxu0
      %v3407 = vpop.f32.mrb[0].mxu0
      %v3408 = vadd.f32 0.0, %v3407
      %v3409 = vpop.f32.mrb[0].mxu0
      %3410 = vmatprep.mubr.bf16.mxu0 %v2999
      %3411 = vmatmul.mubr.bf16.gmra.mrb[0].mxu0 %v2996
      %v3412 = vpop.f32.mrb[0].mxu0
      %v3413 = vadd.f32 0.0, %v3412
      %v3414 = vpop.f32.mrb[0].mxu0
      %v3415 = vpop.f32.mrb[0].mxu0
      %v3416 = vadd.f32 0.0, %v3415
      %v3417 = vpop.f32.mrb[0].mxu0
      %3418 = vmatprep.mubr.bf16.mxu0 %v3008
      %3419 = vmatmul.mubr.bf16.gmra.mrb[0].mxu0 %v3005
      %v3420 = vpop.f32.mrb[0].mxu0
      %v3421 = vadd.f32 0.0, %v3420
      %v3422 = vpop.f32.mrb[0].mxu0
      %v3423 = vpop.f32.mrb[0].mxu0
      %v3424 = vadd.f32 0.0, %v3423
      %v3425 = vpop.f32.mrb[0].mxu0
      %3426 = vmatprep.mubr.bf16.mxu0 %v3017
      %3427 = vmatmul.mubr.bf16.gmra.mrb[0].mxu0 %v3014
      %v3428 = vpop.f32.mrb[0].mxu0
      %v3429 = vadd.f32 0.0, %v3428
      %v3430 = vpop.f32.mrb[0].mxu0
      %v3431 = vpop.f32.mrb[0].mxu0
      %v3432 = vadd.f32 0.0, %v3431
      %v3433 = vpop.f32.mrb[0].mxu0
      %3434 = vmatprep.mubr.bf16.mxu0 %v3026
      %3435 = vmatmul.mubr.bf16.gmra.mrb[0].mxu0 %v3023
      %v3436 = vpop.f32.mrb[0].mxu0
      %v3437 = vadd.f32 0.0, %v3436
      %v3438 = vpop.f32.mrb[0].mxu0
      %v3439 = vpop.f32.mrb[0].mxu0
      %v3440 = vadd.f32 0.0, %v3439
      %v3441 = vpop.f32.mrb[0].mxu0
      %3442 = vmatprep.mubr.bf16.mxu0 %v3035
      %3443 = vmatmul.mubr.bf16.gmra.mrb[0].mxu0 %v3032
      %v3444 = vpop.f32.mrb[0].mxu0
      %v3445 = vadd.f32 0.0, %v3444
      %v3446 = vpop.f32.mrb[0].mxu0
      %v3447 = vpop.f32.mrb[0].mxu0
      %v3448 = vadd.f32 0.0, %v3447
      %v3449 = vpop.f32.mrb[0].mxu0
      %3450 = vmatprep.mubr.bf16.mxu0 %v3044
      %3451 = vmatmul.mubr.bf16.gmra.mrb[0].mxu0 %v3041
      %v3452 = vpop.f32.mrb[0].mxu0
      %v3453 = vadd.f32 0.0, %v3452
      %v3454 = vpop.f32.mrb[0].mxu0
      %v3455 = vpop.f32.mrb[0].mxu0
      %v3456 = vadd.f32 0.0, %v3455
      %v3457 = vpop.f32.mrb[0].mxu0
      %3458 = vmatprep.mubr.bf16.mxu0 %v3053
      %3459 = vmatmul.mubr.bf16.gmra.mrb[0].mxu0 %v3050
      %v3460 = vpop.f32.mrb[0].mxu0
      %v3461 = vadd.f32 0.0, %v3460
      %v3462 = vpop.f32.mrb[0].mxu0
      %v3463 = vpop.f32.mrb[0].mxu0
      %v3464 = vadd.f32 0.0, %v3463
      %v3465 = vpop.f32.mrb[0].mxu0
      %3466 = vmatprep.mubr.bf16.mxu0 %v3062
      %3467 = vmatmul.mubr.bf16.gmra.mrb[0].mxu0 %v3059
      %v3468 = vpop.f32.mrb[0].mxu0
      %v3469 = vadd.f32 0.0, %v3468
      %v3470 = vpop.f32.mrb[0].mxu0
      %v3471 = vpop.f32.mrb[0].mxu0
      %v3472 = vadd.f32 0.0, %v3471
      %v3473 = vpop.f32.mrb[0].mxu0
      %3474 = vmatprep.mubr.bf16.mxu0 %v3071
      %3475 = vmatmul.mubr.bf16.gmra.mrb[0].mxu0 %v3068
      %v3476 = vpop.f32.mrb[0].mxu0
      %v3477 = vadd.f32 0.0, %v3476
      %v3478 = vpop.f32.mrb[0].mxu0
      %v3479 = vpop.f32.mrb[0].mxu0
      %v3480 = vadd.f32 0.0, %v3479
      %v3481 = vpop.f32.mrb[0].mxu0
      %3482 = vmatprep.mubr.bf16.mxu0 %v3080
      %3483 = vmatmul.mubr.bf16.gmra.mrb[0].mxu0 %v3077
      %v3484 = vpop.f32.mrb[0].mxu0
      %v3485 = vadd.f32 0.0, %v3484
      %v3486 = vpop.f32.mrb[0].mxu0
      %v3487 = vpop.f32.mrb[0].mxu0
      %v3488 = vadd.f32 0.0, %v3487
      %v3489 = vpop.f32.mrb[0].mxu0
      %3490 = vmatprep.mubr.bf16.mxu0 %v3089
      %3491 = vmatmul.mubr.bf16.gmra.mrb[0].mxu0 %v3086
      %v3492 = vpop.f32.mrb[0].mxu0
      %v3493 = vadd.f32 0.0, %v3492
      %v3494 = vpop.f32.mrb[0].mxu0
      %v3495 = vpop.f32.mrb[0].mxu0
      %v3496 = vadd.f32 0.0, %v3495
      %v3497 = vpop.f32.mrb[0].mxu0
      %3498 = vmatprep.mubr.bf16.mxu0 %v3098
      %3499 = vmatmul.mubr.bf16.gmra.mrb[0].mxu0 %v3095
      %v3500 = vpop.f32.mrb[0].mxu0
      %v3501 = vadd.f32 0.0, %v3500
      %v3502 = vpop.f32.mrb[0].mxu0
      %v3503 = vpop.f32.mrb[0].mxu0
      %v3504 = vadd.f32 0.0, %v3503
      %v3505 = vpop.f32.mrb[0].mxu0
      %3506 = vmatprep.mubr.bf16.mxu0 %v3107
      %3507 = vmatmul.mubr.bf16.gmra.mrb[0].mxu0 %v3104
      %v3508 = vpop.f32.mrb[0].mxu0
      %v3509 = vadd.f32 0.0, %v3508
      %v3510 = vpop.f32.mrb[0].mxu0
      %v3511 = vpop.f32.mrb[0].mxu0
      %v3512 = vadd.f32 0.0, %v3511
      %v3513 = vpop.f32.mrb[0].mxu0
      %3514 = vmatprep.mubr.bf16.mxu0 %v3116
      %3515 = vmatmul.mubr.bf16.gmra.mrb[0].mxu0 %v3113
      %v3516 = vpop.f32.mrb[0].mxu0
      %v3517 = vadd.f32 0.0, %v3516
      %v3518 = vpop.f32.mrb[0].mxu0
      %v3519 = vpop.f32.mrb[0].mxu0
      %v3520 = vadd.f32 0.0, %v3519
      %v3521 = vpop.f32.mrb[0].mxu0
      %3522 = vmatprep.mubr.bf16.mxu0 %v3125
      %3523 = vmatmul.mubr.bf16.gmra.mrb[0].mxu0 %v3122
      %v3524 = vpop.f32.mrb[0].mxu0
      %v3525 = vadd.f32 0.0, %v3524
      %v3526 = vpop.f32.mrb[0].mxu0
      %v3527 = vpop.f32.mrb[0].mxu0
      %v3528 = vadd.f32 0.0, %v3527
      %v3529 = vpop.f32.mrb[0].mxu0
      %3530 = vdwg.mxu0
      %3531 = vmatprep.subr.bf16.mxu0 0
      %3532 = vmatpush1.bf16.msra.mxu0 %v3338
      %3533 = vmatprep.subr.bf16.mxu0 0
      %3534 = vmatpush1.bf16.msra.mxu0 %v3339
      %3535 = vmatprep.subr.bf16.mxu0 0
      %3536 = vmatpush1.bf16.msra.mxu0 %v3340
      %3537 = vmatprep.subr.bf16.mxu0 0
      %3538 = vmatpush1.bf16.msra.mxu0 %v3341
      %3539 = vmatprep.subr.bf16.mxu0 0
      %3540 = vmatpush1.bf16.msra.mxu0 %v3342
      %3541 = vmatprep.subr.bf16.mxu0 0
      %3542 = vmatpush1.bf16.msra.mxu0 %v3343
      %3543 = vmatprep.subr.bf16.mxu0 0
      %3544 = vmatpush1.bf16.msra.mxu0 %v3344
      %3545 = vmatprep.subr.bf16.mxu0 0
      %3546 = vmatpush1.bf16.msra.mxu0 %v3345
      %3547 = vmatprep.subr.bf16.mxu0 0
      %3548 = vmatpush1.bf16.msra.mxu0 0
      %3549 = vmatprep.subr.bf16.mxu0 0
      %3550 = vmatpush1.bf16.msra.mxu0 0
      %3551 = vmatprep.subr.bf16.mxu0 0
      %3552 = vmatpush1.bf16.msra.mxu0 0
      %3553 = vmatprep.subr.bf16.mxu0 0
      %3554 = vmatpush1.bf16.msra.mxu0 0
      %3555 = vmatprep.subr.bf16.mxu0 0
      %3556 = vmatpush1.bf16.msra.mxu0 0
      %3557 = vmatprep.subr.bf16.mxu0 0
      %3558 = vmatpush1.bf16.msra.mxu0 0
      %3559 = vmatprep.subr.bf16.mxu0 0
      %3560 = vmatpush1.bf16.msra.mxu0 0
      %3561 = vmatprep.subr.bf16.mxu0 0
      %3562 = vmatpush1.bf16.msra.mxu0 0
      %3563 = vmatprep.mubr.bf16.mxu0 0
      %3564 = vmatmul.mubr.bf16.gmra.mrb[0].mxu0 %v2993
      %v3565 = vpop.f32.mrb[0].mxu0
      %v3566 = vadd.f32 %v3405, %v3565
      %v3567 = vpop.f32.mrb[0].mxu0
      %v3568 = vpop.f32.mrb[0].mxu0
      %v3569 = vadd.f32 %v3408, %v3568
      %v3570 = vpop.f32.mrb[0].mxu0
      %3571 = vmatprep.mubr.bf16.mxu0 0
      %3572 = vmatmul.mubr.bf16.gmra.mrb[0].mxu0 %v3002
      %v3573 = vpop.f32.mrb[0].mxu0
      %v3574 = vadd.f32 %v3413, %v3573
      %v3575 = vpop.f32.mrb[0].mxu0
      %v3576 = vpop.f32.mrb[0].mxu0
      %v3577 = vadd.f32 %v3416, %v3576
      %v3578 = vpop.f32.mrb[0].mxu0
      %3579 = vmatprep.mubr.bf16.mxu0 0
      %3580 = vmatmul.mubr.bf16.gmra.mrb[0].mxu0 %v3011
      %v3581 = vpop.f32.mrb[0].mxu0
      %v3582 = vadd.f32 %v3421, %v3581
      %v3583 = vpop.f32.mrb[0].mxu0
      %v3584 = vpop.f32.mrb[0].mxu0
      %v3585 = vadd.f32 %v3424, %v3584
      %v3586 = vpop.f32.mrb[0].mxu0
      %3587 = vmatprep.mubr.bf16.mxu0 0
      %3588 = vmatmul.mubr.bf16.gmra.mrb[0].mxu0 %v3020
      %v3589 = vpop.f32.mrb[0].mxu0
      %v3590 = vadd.f32 %v3429, %v3589
      %v3591 = vpop.f32.mrb[0].mxu0
      %v3592 = vpop.f32.mrb[0].mxu0
      %v3593 = vadd.f32 %v3432, %v3592
      %v3594 = vpop.f32.mrb[0].mxu0
      %3595 = vmatprep.mubr.bf16.mxu0 0
      %3596 = vmatmul.mubr.bf16.gmra.mrb[0].mxu0 %v3029
      %v3597 = vpop.f32.mrb[0].mxu0
      %v3598 = vadd.f32 %v3437, %v3597
      %v3599 = vpop.f32.mrb[0].mxu0
      %v3600 = vpop.f32.mrb[0].mxu0
      %v3601 = vadd.f32 %v3440, %v3600
      %v3602 = vpop.f32.mrb[0].mxu0
      %3603 = vmatprep.mubr.bf16.mxu0 0
      %3604 = vmatmul.mubr.bf16.gmra.mrb[0].mxu0 %v3038
      %v3605 = vpop.f32.mrb[0].mxu0
      %v3606 = vadd.f32 %v3445, %v3605
      %v3607 = vpop.f32.mrb[0].mxu0
      %v3608 = vpop.f32.mrb[0].mxu0
      %v3609 = vadd.f32 %v3448, %v3608
      %v3610 = vpop.f32.mrb[0].mxu0
      %3611 = vmatprep.mubr.bf16.mxu0 0
      %3612 = vmatmul.mubr.bf16.gmra.mrb[0].mxu0 %v3047
      %v3613 = vpop.f32.mrb[0].mxu0
      %v3614 = vadd.f32 %v3453, %v3613
      %v3615 = vpop.f32.mrb[0].mxu0
      %v3616 = vpop.f32.mrb[0].mxu0
      %v3617 = vadd.f32 %v3456, %v3616
      %v3618 = vpop.f32.mrb[0].mxu0
      %3619 = vmatprep.mubr.bf16.mxu0 0
      %3620 = vmatmul.mubr.bf16.gmra.mrb[0].mxu0 %v3056
      %v3621 = vpop.f32.mrb[0].mxu0
      %v3622 = vadd.f32 %v3461, %v3621
      %v3623 = vpop.f32.mrb[0].mxu0
      %v3624 = vpop.f32.mrb[0].mxu0
      %v3625 = vadd.f32 %v3464, %v3624
      %v3626 = vpop.f32.mrb[0].mxu0
      %3627 = vmatprep.mubr.bf16.mxu0 0
      %3628 = vmatmul.mubr.bf16.gmra.mrb[0].mxu0 %v3065
      %v3629 = vpop.f32.mrb[0].mxu0
      %v3630 = vadd.f32 %v3469, %v3629
      %v3631 = vpop.f32.mrb[0].mxu0
      %v3632 = vpop.f32.mrb[0].mxu0
      %v3633 = vadd.f32 %v3472, %v3632
      %v3634 = vpop.f32.mrb[0].mxu0
      %3635 = vmatprep.mubr.bf16.mxu0 0
      %3636 = vmatmul.mubr.bf16.gmra.mrb[0].mxu0 %v3074
      %v3637 = vpop.f32.mrb[0].mxu0
      %v3638 = vadd.f32 %v3477, %v3637
      %v3639 = vpop.f32.mrb[0].mxu0
      %v3640 = vpop.f32.mrb[0].mxu0
      %v3641 = vadd.f32 %v3480, %v3640
      %v3642 = vpop.f32.mrb[0].mxu0
      %3643 = vmatprep.mubr.bf16.mxu0 0
      %3644 = vmatmul.mubr.bf16.gmra.mrb[0].mxu0 %v3083
      %v3645 = vpop.f32.mrb[0].mxu0
      %v3646 = vadd.f32 %v3485, %v3645
      %v3647 = vpop.f32.mrb[0].mxu0
      %v3648 = vpop.f32.mrb[0].mxu0
      %v3649 = vadd.f32 %v3488, %v3648
      %v3650 = vpop.f32.mrb[0].mxu0
      %3651 = vmatprep.mubr.bf16.mxu0 0
      %3652 = vmatmul.mubr.bf16.gmra.mrb[0].mxu0 %v3092
      %v3653 = vpop.f32.mrb[0].mxu0
      %v3654 = vadd.f32 %v3493, %v3653
      %v3655 = vpop.f32.mrb[0].mxu0
      %v3656 = vpop.f32.mrb[0].mxu0
      %v3657 = vadd.f32 %v3496, %v3656
      %v3658 = vpop.f32.mrb[0].mxu0
      %3659 = vmatprep.mubr.bf16.mxu0 0
      %3660 = vmatmul.mubr.bf16.gmra.mrb[0].mxu0 %v3101
      %v3661 = vpop.f32.mrb[0].mxu0
      %v3662 = vadd.f32 %v3501, %v3661
      %v3663 = vpop.f32.mrb[0].mxu0
      %v3664 = vpop.f32.mrb[0].mxu0
      %v3665 = vadd.f32 %v3504, %v3664
      %v3666 = vpop.f32.mrb[0].mxu0
      %3667 = vmatprep.mubr.bf16.mxu0 0
      %3668 = vmatmul.mubr.bf16.gmra.mrb[0].mxu0 %v3110
      %v3669 = vpop.f32.mrb[0].mxu0
      %v3670 = vadd.f32 %v3509, %v3669
      %v3671 = vpop.f32.mrb[0].mxu0
      %v3672 = vpop.f32.mrb[0].mxu0
      %v3673 = vadd.f32 %v3512, %v3672
      %v3674 = vpop.f32.mrb[0].mxu0
      %3675 = vmatprep.mubr.bf16.mxu0 0
      %3676 = vmatmul.mubr.bf16.gmra.mrb[0].mxu0 %v3119
      %v3677 = vpop.f32.mrb[0].mxu0
      %v3678 = vadd.f32 %v3517, %v3677
      %v3679 = vpop.f32.mrb[0].mxu0
      %v3680 = vpop.f32.mrb[0].mxu0
      %v3681 = vadd.f32 %v3520, %v3680
      %v3682 = vpop.f32.mrb[0].mxu0
      %3683 = vmatprep.mubr.bf16.mxu0 0
      %3684 = vmatmul.mubr.bf16.gmra.mrb[0].mxu0 %v3128
      %v3685 = vpop.f32.mrb[0].mxu0
      %v3686 = vadd.f32 %v3525, %v3685
      %v3687 = vpop.f32.mrb[0].mxu0
      %v3688 = vpop.f32.mrb[0].mxu0
      %v3689 = vadd.f32 %v3528, %v3688
      %v3690 = vpop.f32.mrb[0].mxu0
      %3691 = vdwg.mxu0
      %v3692 = vadd.f32 %v2858, %v3566
      %v3693 = vadd.f32 %v2861, %v3569
      %v3694 = vadd.f32 %v2866, %v3574
      %v3695 = vadd.f32 %v2869, %v3577
      %v3696 = vadd.f32 %v2874, %v3582
      %v3697 = vadd.f32 %v2877, %v3585
      %v3698 = vadd.f32 %v2882, %v3590
      %v3699 = vadd.f32 %v2885, %v3593
      %v3700 = vadd.f32 %v2890, %v3598
      %v3701 = vadd.f32 %v2893, %v3601
      %v3702 = vadd.f32 %v2898, %v3606
      %v3703 = vadd.f32 %v2901, %v3609
      %v3704 = vadd.f32 %v2906, %v3614
      %v3705 = vadd.f32 %v2909, %v3617
      %v3706 = vadd.f32 %v2914, %v3622
      %v3707 = vadd.f32 %v2917, %v3625
      %v3708 = vadd.f32 %v2922, %v3630
      %v3709 = vadd.f32 %v2925, %v3633
      %v3710 = vadd.f32 %v2930, %v3638
      %v3711 = vadd.f32 %v2933, %v3641
      %v3712 = vadd.f32 %v2938, %v3646
      %v3713 = vadd.f32 %v2941, %v3649
      %v3714 = vadd.f32 %v2946, %v3654
      %v3715 = vadd.f32 %v2949, %v3657
      %v3716 = vadd.f32 %v2954, %v3662
      %v3717 = vadd.f32 %v2957, %v3665
      %v3718 = vadd.f32 %v2962, %v3670
      %v3719 = vadd.f32 %v2965, %v3673
      %v3720 = vadd.f32 %v2970, %v3678
      %v3721 = vadd.f32 %v2973, %v3681
      %v3722 = vadd.f32 %v2978, %v3686
      %v3723 = vadd.f32 %v2981, %v3689
      %v3724 = vld [vmem:[%s2] sm:$0x1]
      %v3726 = vlaneseq
      %v3727 = vshrl.u32 %v3726, 7
      %v3728 = vsub.s32 0, %v3727
      %v3729 = vrot.slane %v3724, %v3728
      %v3731 = vadd.f32 %v3692, %v3729
      %v3732 = vadd.f32 %v3693, %v3729
      %v3733 = vadd.f32 %v3694, %v3729
      %v3734 = vadd.f32 %v3695, %v3729
      %v3735 = vadd.f32 %v3696, %v3729
      %v3736 = vadd.f32 %v3697, %v3729
      %v3737 = vadd.f32 %v3698, %v3729
      %v3738 = vadd.f32 %v3699, %v3729
      %v3739 = vadd.f32 %v3700, %v3729
      %v3740 = vadd.f32 %v3701, %v3729
      %v3741 = vadd.f32 %v3702, %v3729
      %v3742 = vadd.f32 %v3703, %v3729
      %v3743 = vadd.f32 %v3704, %v3729
      %v3744 = vadd.f32 %v3705, %v3729
      %v3745 = vadd.f32 %v3706, %v3729
      %v3746 = vadd.f32 %v3707, %v3729
      %v3747 = vadd.f32 %v3708, %v3729
      %v3748 = vadd.f32 %v3709, %v3729
      %v3749 = vadd.f32 %v3710, %v3729
      %v3750 = vadd.f32 %v3711, %v3729
      %v3751 = vadd.f32 %v3712, %v3729
      %v3752 = vadd.f32 %v3713, %v3729
      %v3753 = vadd.f32 %v3714, %v3729
      %v3754 = vadd.f32 %v3715, %v3729
      %v3755 = vadd.f32 %v3716, %v3729
      %v3756 = vadd.f32 %v3717, %v3729
      %v3757 = vadd.f32 %v3718, %v3729
      %v3758 = vadd.f32 %v3719, %v3729
      %v3759 = vadd.f32 %v3720, %v3729
      %v3760 = vadd.f32 %v3721, %v3729
      %v3761 = vadd.f32 %v3722, %v3729
      %v3762 = vadd.f32 %v3723, %v3729
      %v3763 = vmax.f32 %v3731, 0.0
      %v3764 = vmax.f32 %v3732, 0.0
      %v3765 = vmax.f32 %v3733, 0.0
      %v3766 = vmax.f32 %v3734, 0.0
      %v3767 = vmax.f32 %v3735, 0.0
      %v3768 = vmax.f32 %v3736, 0.0
      %v3769 = vmax.f32 %v3737, 0.0
      %v3770 = vmax.f32 %v3738, 0.0
      %v3771 = vmax.f32 %v3739, 0.0
      %v3772 = vmax.f32 %v3740, 0.0
      %v3773 = vmax.f32 %v3741, 0.0
      %v3774 = vmax.f32 %v3742, 0.0
      %v3775 = vmax.f32 %v3743, 0.0
      %v3776 = vmax.f32 %v3744, 0.0
      %v3777 = vmax.f32 %v3745, 0.0
      %v3778 = vmax.f32 %v3746, 0.0
      %v3779 = vmax.f32 %v3747, 0.0
      %v3780 = vmax.f32 %v3748, 0.0
      %v3781 = vmax.f32 %v3749, 0.0
      %v3782 = vmax.f32 %v3750, 0.0
      %v3783 = vmax.f32 %v3751, 0.0
      %v3784 = vmax.f32 %v3752, 0.0
      %v3785 = vmax.f32 %v3753, 0.0
      %v3786 = vmax.f32 %v3754, 0.0
      %v3787 = vmax.f32 %v3755, 0.0
      %v3788 = vmax.f32 %v3756, 0.0
      %v3789 = vmax.f32 %v3757, 0.0
      %v3790 = vmax.f32 %v3758, 0.0
      %v3791 = vmax.f32 %v3759, 0.0
      %v3792 = vmax.f32 %v3760, 0.0
      %v3793 = vmax.f32 %v3761, 0.0
      %v3794 = vmax.f32 %v3762, 0.0
      %v3795 = vpack.c.bf16 %v3764, %v3763
      %v3796 = vpack.c.bf16 %v3766, %v3765
      %v3797 = vpack.c.bf16 %v3768, %v3767
      %v3798 = vpack.c.bf16 %v3770, %v3769
      %v3799 = vpack.c.bf16 %v3772, %v3771
      %v3800 = vpack.c.bf16 %v3774, %v3773
      %v3801 = vpack.c.bf16 %v3776, %v3775
      %v3802 = vpack.c.bf16 %v3778, %v3777
      %v3803 = vpack.c.bf16 %v3780, %v3779
      %v3804 = vpack.c.bf16 %v3782, %v3781
      %v3805 = vpack.c.bf16 %v3784, %v3783
      %v3806 = vpack.c.bf16 %v3786, %v3785
      %v3807 = vpack.c.bf16 %v3788, %v3787
      %v3808 = vpack.c.bf16 %v3790, %v3789
      %v3809 = vpack.c.bf16 %v3792, %v3791
      %v3810 = vpack.c.bf16 %v3794, %v3793
      %v3827 = vunpack.c.l.b16 %v3795
      %v3828 = vunpack.c.h.b16 %v3795
      %v3829 = vunpack.c.l.b16 %v3796
      %v3830 = vunpack.c.h.b16 %v3796
      %v3831 = vunpack.c.l.b16 %v3797
      %v3832 = vunpack.c.h.b16 %v3797
      %v3833 = vunpack.c.l.b16 %v3798
      %v3834 = vunpack.c.h.b16 %v3798
      %v3835 = vunpack.c.l.b16 %v3799
      %v3836 = vunpack.c.h.b16 %v3799
      %v3837 = vunpack.c.l.b16 %v3800
      %v3838 = vunpack.c.h.b16 %v3800
      %v3839 = vunpack.c.l.b16 %v3801
      %v3840 = vunpack.c.h.b16 %v3801
      %v3841 = vunpack.c.l.b16 %v3802
      %v3842 = vunpack.c.h.b16 %v3802
      %v3843 = vunpack.c.l.b16 %v3803
      %v3844 = vunpack.c.h.b16 %v3803
      %v3845 = vunpack.c.l.b16 %v3804
      %v3846 = vunpack.c.h.b16 %v3804
      %v3847 = vunpack.c.l.b16 %v3805
      %v3848 = vunpack.c.h.b16 %v3805
      %v3849 = vunpack.c.l.b16 %v3806
      %v3850 = vunpack.c.h.b16 %v3806
      %v3851 = vunpack.c.l.b16 %v3807
      %v3852 = vunpack.c.h.b16 %v3807
      %v3853 = vunpack.c.l.b16 %v3808
      %v3854 = vunpack.c.h.b16 %v3808
      %v3855 = vunpack.c.l.b16 %v3809
      %v3856 = vunpack.c.h.b16 %v3809
      %v3857 = vunpack.c.l.b16 %v3810
      %v3858 = vunpack.c.h.b16 %v3810
      %v3859 = vpack.c.b16 %v3827, %v3827
      %v3860 = vpack.c.b16 %v3828, %v3828
      %v3861 = vpack.c.b16 %v3829, %v3829
      %v3862 = vpack.c.b16 %v3830, %v3830
      %v3863 = vpack.c.b16 %v3831, %v3831
      %v3864 = vpack.c.b16 %v3832, %v3832
      %v3865 = vpack.c.b16 %v3833, %v3833
      %v3866 = vpack.c.b16 %v3834, %v3834
      %v3867 = vpack.c.b16 %v3835, %v3835
      %v3868 = vpack.c.b16 %v3836, %v3836
      %v3869 = vpack.c.b16 %v3837, %v3837
      %v3870 = vpack.c.b16 %v3838, %v3838
      %v3871 = vpack.c.b16 %v3839, %v3839
      %v3872 = vpack.c.b16 %v3840, %v3840
      %v3873 = vpack.c.b16 %v3841, %v3841
      %v3874 = vpack.c.b16 %v3842, %v3842
      %v3875 = vpack.c.b16 %v3843, %v3843
      %v3876 = vpack.c.b16 %v3844, %v3844
      %v3877 = vpack.c.b16 %v3845, %v3845
      %v3878 = vpack.c.b16 %v3846, %v3846
      %v3879 = vpack.c.b16 %v3847, %v3847
      %v3880 = vpack.c.b16 %v3848, %v3848
      %v3881 = vpack.c.b16 %v3849, %v3849
      %v3882 = vpack.c.b16 %v3850, %v3850
      %v3883 = vpack.c.b16 %v3851, %v3851
      %v3884 = vpack.c.b16 %v3852, %v3852
      %v3885 = vpack.c.b16 %v3853, %v3853
      %v3886 = vpack.c.b16 %v3854, %v3854
      %v3887 = vpack.c.b16 %v3855, %v3855
      %v3888 = vpack.c.b16 %v3856, %v3856
      %v3889 = vpack.c.b16 %v3857, %v3857
      %v3890 = vpack.c.b16 %v3858, %v3858
      %v3892 = vshrl.u32 %v3859, 16
      %v3894 = vrot.slane %v3892, 7
      %v3895 = vshll.u32 %v3859, 16
      %v3897 = vor.u32 %v3894, %v3895
      %v3898 = vrot.slane %v3894, 4
      %v3900 = vshrl.u32 %v3860, 16
      %v3902 = vrot.slane %v3900, 7
      %v3903 = vshll.u32 %v3860, 16
      %v3905 = vor.u32 %v3902, %v3903
      %v3906 = vsel %vm314, %v3898, %v3905
      %v3907 = vrot.slane %v3902, 4
      %v3909 = vshrl.u32 %v3861, 16
      %v3911 = vrot.slane %v3909, 7
      %v3912 = vshll.u32 %v3861, 16
      %v3914 = vor.u32 %v3911, %v3912
      %v3915 = vrot.slane %v3911, 4
      %v3917 = vshrl.u32 %v3862, 16
      %v3919 = vrot.slane %v3917, 7
      %v3920 = vshll.u32 %v3862, 16
      %v3922 = vor.u32 %v3919, %v3920
      %v3923 = vsel %vm314, %v3915, %v3922
      %v3924 = vrot.slane %v3919, 4
      %v3926 = vshrl.u32 %v3863, 16
      %v3928 = vrot.slane %v3926, 7
      %v3929 = vshll.u32 %v3863, 16
      %v3931 = vor.u32 %v3928, %v3929
      %v3932 = vrot.slane %v3928, 4
      %v3934 = vshrl.u32 %v3864, 16
      %v3936 = vrot.slane %v3934, 7
      %v3937 = vshll.u32 %v3864, 16
      %v3939 = vor.u32 %v3936, %v3937
      %v3940 = vsel %vm314, %v3932, %v3939
      %v3941 = vrot.slane %v3936, 4
      %v3943 = vshrl.u32 %v3865, 16
      %v3945 = vrot.slane %v3943, 7
      %v3946 = vshll.u32 %v3865, 16
      %v3948 = vor.u32 %v3945, %v3946
      %v3949 = vrot.slane %v3945, 4
      %v3951 = vshrl.u32 %v3866, 16
      %v3953 = vrot.slane %v3951, 7
      %v3954 = vshll.u32 %v3866, 16
      %v3956 = vor.u32 %v3953, %v3954
      %v3957 = vsel %vm314, %v3949, %v3956
      %v3958 = vrot.slane %v3953, 4
      %v3960 = vshrl.u32 %v3867, 16
      %v3962 = vrot.slane %v3960, 7
      %v3963 = vshll.u32 %v3867, 16
      %v3965 = vor.u32 %v3962, %v3963
      %v3966 = vrot.slane %v3962, 4
      %v3968 = vshrl.u32 %v3868, 16
      %v3970 = vrot.slane %v3968, 7
      %v3971 = vshll.u32 %v3868, 16
      %v3973 = vor.u32 %v3970, %v3971
      %v3974 = vsel %vm314, %v3966, %v3973
      %v3975 = vrot.slane %v3970, 4
      %v3977 = vshrl.u32 %v3869, 16
      %v3979 = vrot.slane %v3977, 7
      %v3980 = vshll.u32 %v3869, 16
      %v3982 = vor.u32 %v3979, %v3980
      %v3983 = vrot.slane %v3979, 4
      %v3985 = vshrl.u32 %v3870, 16
      %v3987 = vrot.slane %v3985, 7
      %v3988 = vshll.u32 %v3870, 16
      %v3990 = vor.u32 %v3987, %v3988
      %v3991 = vsel %vm314, %v3983, %v3990
      %v3992 = vrot.slane %v3987, 4
      %v3994 = vshrl.u32 %v3871, 16
      %v3996 = vrot.slane %v3994, 7
      %v3997 = vshll.u32 %v3871, 16
      %v3999 = vor.u32 %v3996, %v3997
      %v4000 = vrot.slane %v3996, 4
      %v4002 = vshrl.u32 %v3872, 16
      %v4004 = vrot.slane %v4002, 7
      %v4005 = vshll.u32 %v3872, 16
      %v4007 = vor.u32 %v4004, %v4005
      %v4008 = vsel %vm314, %v4000, %v4007
      %v4009 = vrot.slane %v4004, 4
      %v4011 = vshrl.u32 %v3873, 16
      %v4013 = vrot.slane %v4011, 7
      %v4014 = vshll.u32 %v3873, 16
      %v4016 = vor.u32 %v4013, %v4014
      %v4017 = vrot.slane %v4013, 4
      %v4019 = vshrl.u32 %v3874, 16
      %v4021 = vrot.slane %v4019, 7
      %v4022 = vshll.u32 %v3874, 16
      %v4024 = vor.u32 %v4021, %v4022
      %v4025 = vsel %vm314, %v4017, %v4024
      %v4026 = vrot.slane %v4021, 4
      %v4028 = vshrl.u32 %v3875, 16
      %v4030 = vrot.slane %v4028, 7
      %v4031 = vshll.u32 %v3875, 16
      %v4033 = vor.u32 %v4030, %v4031
      %v4034 = vrot.slane %v4030, 4
      %v4036 = vshrl.u32 %v3876, 16
      %v4038 = vrot.slane %v4036, 7
      %v4039 = vshll.u32 %v3876, 16
      %v4041 = vor.u32 %v4038, %v4039
      %v4042 = vsel %vm314, %v4034, %v4041
      %v4043 = vrot.slane %v4038, 4
      %v4045 = vshrl.u32 %v3877, 16
      %v4047 = vrot.slane %v4045, 7
      %v4048 = vshll.u32 %v3877, 16
      %v4050 = vor.u32 %v4047, %v4048
      %v4051 = vrot.slane %v4047, 4
      %v4053 = vshrl.u32 %v3878, 16
      %v4055 = vrot.slane %v4053, 7
      %v4056 = vshll.u32 %v3878, 16
      %v4058 = vor.u32 %v4055, %v4056
      %v4059 = vsel %vm314, %v4051, %v4058
      %v4060 = vrot.slane %v4055, 4
      %v4062 = vshrl.u32 %v3879, 16
      %v4064 = vrot.slane %v4062, 7
      %v4065 = vshll.u32 %v3879, 16
      %v4067 = vor.u32 %v4064, %v4065
      %v4068 = vrot.slane %v4064, 4
      %v4070 = vshrl.u32 %v3880, 16
      %v4072 = vrot.slane %v4070, 7
      %v4073 = vshll.u32 %v3880, 16
      %v4075 = vor.u32 %v4072, %v4073
      %v4076 = vsel %vm314, %v4068, %v4075
      %v4077 = vrot.slane %v4072, 4
      %v4079 = vshrl.u32 %v3881, 16
      %v4081 = vrot.slane %v4079, 7
      %v4082 = vshll.u32 %v3881, 16
      %v4084 = vor.u32 %v4081, %v4082
      %v4085 = vrot.slane %v4081, 4
      %v4087 = vshrl.u32 %v3882, 16
      %v4089 = vrot.slane %v4087, 7
      %v4090 = vshll.u32 %v3882, 16
      %v4092 = vor.u32 %v4089, %v4090
      %v4093 = vsel %vm314, %v4085, %v4092
      %v4094 = vrot.slane %v4089, 4
      %v4096 = vshrl.u32 %v3883, 16
      %v4098 = vrot.slane %v4096, 7
      %v4099 = vshll.u32 %v3883, 16
      %v4101 = vor.u32 %v4098, %v4099
      %v4102 = vrot.slane %v4098, 4
      %v4104 = vshrl.u32 %v3884, 16
      %v4106 = vrot.slane %v4104, 7
      %v4107 = vshll.u32 %v3884, 16
      %v4109 = vor.u32 %v4106, %v4107
      %v4110 = vsel %vm314, %v4102, %v4109
      %v4111 = vrot.slane %v4106, 4
      %v4113 = vshrl.u32 %v3885, 16
      %v4115 = vrot.slane %v4113, 7
      %v4116 = vshll.u32 %v3885, 16
      %v4118 = vor.u32 %v4115, %v4116
      %v4119 = vrot.slane %v4115, 4
      %v4121 = vshrl.u32 %v3886, 16
      %v4123 = vrot.slane %v4121, 7
      %v4124 = vshll.u32 %v3886, 16
      %v4126 = vor.u32 %v4123, %v4124
      %v4127 = vsel %vm314, %v4119, %v4126
      %v4128 = vrot.slane %v4123, 4
      %v4130 = vshrl.u32 %v3887, 16
      %v4132 = vrot.slane %v4130, 7
      %v4133 = vshll.u32 %v3887, 16
      %v4135 = vor.u32 %v4132, %v4133
      %v4136 = vrot.slane %v4132, 4
      %v4138 = vshrl.u32 %v3888, 16
      %v4140 = vrot.slane %v4138, 7
      %v4141 = vshll.u32 %v3888, 16
      %v4143 = vor.u32 %v4140, %v4141
      %v4144 = vsel %vm314, %v4136, %v4143
      %v4145 = vrot.slane %v4140, 4
      %v4147 = vshrl.u32 %v3889, 16
      %v4149 = vrot.slane %v4147, 7
      %v4150 = vshll.u32 %v3889, 16
      %v4152 = vor.u32 %v4149, %v4150
      %v4153 = vrot.slane %v4149, 4
      %v4155 = vshrl.u32 %v3890, 16
      %v4157 = vrot.slane %v4155, 7
      %v4158 = vshll.u32 %v3890, 16
      %v4160 = vor.u32 %v4157, %v4158
      %v4161 = vsel %vm314, %v4153, %v4160
      %v4162 = vrot.slane %v4157, 4
      %s4211 = scalar_lea.vmem [#allocation3], 12
      %v4212 = vld [vmem:[%s4211] sm:$0xf]
      %v4213 = vsel %vm638, %v3897, %v4212
      %4214 = vst [vmem:[%s4211] sm:$0xf] %v4213
      %4215 = vst [vmem:[%s4211 + $0x4] sm:$0xf] %v3906
      %v4216 = vld [vmem:[%s4211 + $0x8] sm:$0x1]
      %v4217 = vsel %vm644, %v3907, %v4216
      %4218 = vst [vmem:[%s4211 + $0x8] sm:$0x1] %v4217
      %v4219 = vld [vmem:[%s4211 + $0xc] sm:$0xf]
      %v4220 = vsel %vm638, %v3914, %v4219
      %4221 = vst [vmem:[%s4211 + $0xc] sm:$0xf] %v4220
      %4222 = vst [vmem:[%s4211 + $0x10] sm:$0xf] %v3923
      %v4223 = vld [vmem:[%s4211 + $0x14] sm:$0x1]
      %v4224 = vsel %vm644, %v3924, %v4223
      %4225 = vst [vmem:[%s4211 + $0x14] sm:$0x1] %v4224
      %v4226 = vld [vmem:[%s4211 + $0x18] sm:$0xf]
      %v4227 = vsel %vm638, %v3931, %v4226
      %4228 = vst [vmem:[%s4211 + $0x18] sm:$0xf] %v4227
      %4229 = vst [vmem:[%s4211 + $0x1c] sm:$0xf] %v3940
      %v4230 = vld [vmem:[%s4211 + $0x20] sm:$0x1]
      %v4231 = vsel %vm644, %v3941, %v4230
      %4232 = vst [vmem:[%s4211 + $0x20] sm:$0x1] %v4231
      %v4233 = vld [vmem:[%s4211 + $0x24] sm:$0xf]
      %v4234 = vsel %vm638, %v3948, %v4233
      %4235 = vst [vmem:[%s4211 + $0x24] sm:$0xf] %v4234
      %4236 = vst [vmem:[%s4211 + $0x28] sm:$0xf] %v3957
      %v4237 = vld [vmem:[%s4211 + $0x2c] sm:$0x1]
      %v4238 = vsel %vm644, %v3958, %v4237
      %4239 = vst [vmem:[%s4211 + $0x2c] sm:$0x1] %v4238
      %v4240 = vld [vmem:[%s4211 + $0x30] sm:$0xf]
      %v4241 = vsel %vm638, %v3965, %v4240
      %4242 = vst [vmem:[%s4211 + $0x30] sm:$0xf] %v4241
      %4243 = vst [vmem:[%s4211 + $0x34] sm:$0xf] %v3974
      %v4244 = vld [vmem:[%s4211 + $0x38] sm:$0x1]
      %v4245 = vsel %vm644, %v3975, %v4244
      %4246 = vst [vmem:[%s4211 + $0x38] sm:$0x1] %v4245
      %v4247 = vld [vmem:[%s4211 + $0x3c] sm:$0xf]
      %v4248 = vsel %vm638, %v3982, %v4247
      %4249 = vst [vmem:[%s4211 + $0x3c] sm:$0xf] %v4248
      %4250 = vst [vmem:[%s4211 + $0x40] sm:$0xf] %v3991
      %v4251 = vld [vmem:[%s4211 + $0x44] sm:$0x1]
      %v4252 = vsel %vm644, %v3992, %v4251
      %4253 = vst [vmem:[%s4211 + $0x44] sm:$0x1] %v4252
      %v4254 = vld [vmem:[%s4211 + $0x48] sm:$0xf]
      %v4255 = vsel %vm638, %v3999, %v4254
      %4256 = vst [vmem:[%s4211 + $0x48] sm:$0xf] %v4255
      %4257 = vst [vmem:[%s4211 + $0x4c] sm:$0xf] %v4008
      %v4258 = vld [vmem:[%s4211 + $0x50] sm:$0x1]
      %v4259 = vsel %vm644, %v4009, %v4258
      %4260 = vst [vmem:[%s4211 + $0x50] sm:$0x1] %v4259
      %v4261 = vld [vmem:[%s4211 + $0x54] sm:$0xf]
      %v4262 = vsel %vm638, %v4016, %v4261
      %4263 = vst [vmem:[%s4211 + $0x54] sm:$0xf] %v4262
      %4264 = vst [vmem:[%s4211 + $0x58] sm:$0xf] %v4025
      %v4265 = vld [vmem:[%s4211 + $0x5c] sm:$0x1]
      %v4266 = vsel %vm644, %v4026, %v4265
      %4267 = vst [vmem:[%s4211 + $0x5c] sm:$0x1] %v4266
      %v4268 = vld [vmem:[%s4211 + $0x60] sm:$0xf]
      %v4269 = vsel %vm638, %v4033, %v4268
      %4270 = vst [vmem:[%s4211 + $0x60] sm:$0xf] %v4269
      %4271 = vst [vmem:[%s4211 + $0x64] sm:$0xf] %v4042
      %v4272 = vld [vmem:[%s4211 + $0x68] sm:$0x1]
      %v4273 = vsel %vm644, %v4043, %v4272
      %4274 = vst [vmem:[%s4211 + $0x68] sm:$0x1] %v4273
      %v4275 = vld [vmem:[%s4211 + $0x6c] sm:$0xf]
      %v4276 = vsel %vm638, %v4050, %v4275
      %4277 = vst [vmem:[%s4211 + $0x6c] sm:$0xf] %v4276
      %4278 = vst [vmem:[%s4211 + $0x70] sm:$0xf] %v4059
      %v4279 = vld [vmem:[%s4211 + $0x74] sm:$0x1]
      %v4280 = vsel %vm644, %v4060, %v4279
      %4281 = vst [vmem:[%s4211 + $0x74] sm:$0x1] %v4280
      %v4282 = vld [vmem:[%s4211 + $0x78] sm:$0xf]
      %v4283 = vsel %vm638, %v4067, %v4282
      %4284 = vst [vmem:[%s4211 + $0x78] sm:$0xf] %v4283
      %4285 = vst [vmem:[%s4211 + $0x7c] sm:$0xf] %v4076
      %v4286 = vld [vmem:[%s4211 + $0x80] sm:$0x1]
      %v4287 = vsel %vm644, %v4077, %v4286
      %4288 = vst [vmem:[%s4211 + $0x80] sm:$0x1] %v4287
      %v4289 = vld [vmem:[%s4211 + $0x84] sm:$0xf]
      %v4290 = vsel %vm638, %v4084, %v4289
      %4291 = vst [vmem:[%s4211 + $0x84] sm:$0xf] %v4290
      %4292 = vst [vmem:[%s4211 + $0x88] sm:$0xf] %v4093
      %v4293 = vld [vmem:[%s4211 + $0x8c] sm:$0x1]
      %v4294 = vsel %vm644, %v4094, %v4293
      %4295 = vst [vmem:[%s4211 + $0x8c] sm:$0x1] %v4294
      %v4296 = vld [vmem:[%s4211 + $0x90] sm:$0xf]
      %v4297 = vsel %vm638, %v4101, %v4296
      %4298 = vst [vmem:[%s4211 + $0x90] sm:$0xf] %v4297
      %4299 = vst [vmem:[%s4211 + $0x94] sm:$0xf] %v4110
      %v4300 = vld [vmem:[%s4211 + $0x98] sm:$0x1]
      %v4301 = vsel %vm644, %v4111, %v4300
      %4302 = vst [vmem:[%s4211 + $0x98] sm:$0x1] %v4301
      %v4303 = vld [vmem:[%s4211 + $0x9c] sm:$0xf]
      %v4304 = vsel %vm638, %v4118, %v4303
      %4305 = vst [vmem:[%s4211 + $0x9c] sm:$0xf] %v4304
      %4306 = vst [vmem:[%s4211 + $0xa0] sm:$0xf] %v4127
      %v4307 = vld [vmem:[%s4211 + $0xa4] sm:$0x1]
      %v4308 = vsel %vm644, %v4128, %v4307
      %4309 = vst [vmem:[%s4211 + $0xa4] sm:$0x1] %v4308
      %v4310 = vld [vmem:[%s4211 + $0xa8] sm:$0xf]
      %v4311 = vsel %vm638, %v4135, %v4310
      %4312 = vst [vmem:[%s4211 + $0xa8] sm:$0xf] %v4311
      %4313 = vst [vmem:[%s4211 + $0xac] sm:$0xf] %v4144
      %v4314 = vld [vmem:[%s4211 + $0xb0] sm:$0x1]
      %v4315 = vsel %vm644, %v4145, %v4314
      %4316 = vst [vmem:[%s4211 + $0xb0] sm:$0x1] %v4315
      %v4317 = vld [vmem:[%s4211 + $0xb4] sm:$0xf]
      %v4318 = vsel %vm638, %v4152, %v4317
      %4319 = vst [vmem:[%s4211 + $0xb4] sm:$0xf] %v4318
      %4320 = vst [vmem:[%s4211 + $0xb8] sm:$0xf] %v4161
      %v4321 = vld [vmem:[%s4211 + $0xbc] sm:$0x1]
      %v4322 = vsel %vm644, %v4162, %v4321
      %4323 = vst [vmem:[%s4211 + $0xbc] sm:$0x1] %v4322
      %v4324 = vld [vmem:[#allocation3] sm:$0xf]
      %v4325 = vld [vmem:[#allocation3 + $0x4] sm:$0xf]
      %v4326 = vld [vmem:[#allocation3 + $0x8] sm:$0xf]
      %v4327 = vld [vmem:[#allocation3 + $0xc] sm:$0xf]
      %v4328 = vld [vmem:[#allocation3 + $0x10] sm:$0xf]
      %v4329 = vld [vmem:[#allocation3 + $0x14] sm:$0xf]
      %v4330 = vld [vmem:[#allocation3 + $0x18] sm:$0xf]
      %v4331 = vld [vmem:[#allocation3 + $0x1c] sm:$0xf]
      %v4332 = vld [vmem:[#allocation3 + $0x20] sm:$0xf]
      %v4333 = vld [vmem:[#allocation3 + $0x24] sm:$0xf]
      %v4334 = vld [vmem:[#allocation3 + $0x28] sm:$0xf]
      %v4335 = vld [vmem:[#allocation3 + $0x2c] sm:$0xf]
      %v4336 = vld [vmem:[#allocation3 + $0x30] sm:$0xf]
      %v4337 = vld [vmem:[#allocation3 + $0x34] sm:$0xf]
      %v4338 = vld [vmem:[#allocation3 + $0x38] sm:$0xf]
      %v4339 = vld [vmem:[#allocation3 + $0x3c] sm:$0xf]
      %v4340 = vld [vmem:[#allocation3 + $0x40] sm:$0xf]
      %v4341 = vld [vmem:[#allocation3 + $0x44] sm:$0xf]
      %v4342 = vld [vmem:[#allocation3 + $0x48] sm:$0xf]
      %v4343 = vld [vmem:[#allocation3 + $0x4c] sm:$0xf]
      %v4344 = vld [vmem:[#allocation3 + $0x50] sm:$0xf]
      %v4345 = vld [vmem:[#allocation3 + $0x54] sm:$0xf]
      %v4346 = vld [vmem:[#allocation3 + $0x58] sm:$0xf]
      %v4347 = vld [vmem:[#allocation3 + $0x5c] sm:$0xf]
      %v4348 = vld [vmem:[#allocation3 + $0x60] sm:$0xf]
      %v4349 = vld [vmem:[#allocation3 + $0x64] sm:$0xf]
      %v4350 = vld [vmem:[#allocation3 + $0x68] sm:$0xf]
      %v4351 = vld [vmem:[#allocation3 + $0x6c] sm:$0xf]
      %v4352 = vld [vmem:[#allocation3 + $0x70] sm:$0xf]
      %v4353 = vld [vmem:[#allocation3 + $0x74] sm:$0xf]
      %v4354 = vld [vmem:[#allocation3 + $0x78] sm:$0xf]
      %v4355 = vld [vmem:[#allocation3 + $0x7c] sm:$0xf]
      %v4356 = vld [vmem:[#allocation3 + $0x80] sm:$0xf]
      %v4357 = vld [vmem:[#allocation3 + $0x84] sm:$0xf]
      %v4358 = vld [vmem:[#allocation3 + $0x88] sm:$0xf]
      %v4359 = vld [vmem:[#allocation3 + $0x8c] sm:$0xf]
      %v4360 = vld [vmem:[#allocation3 + $0x90] sm:$0xf]
      %v4361 = vld [vmem:[#allocation3 + $0x94] sm:$0xf]
      %v4362 = vld [vmem:[#allocation3 + $0x98] sm:$0xf]
      %v4363 = vld [vmem:[#allocation3 + $0x9c] sm:$0xf]
      %v4364 = vld [vmem:[#allocation3 + $0xa0] sm:$0xf]
      %v4365 = vld [vmem:[#allocation3 + $0xa4] sm:$0xf]
      %v4366 = vld [vmem:[#allocation3 + $0xa8] sm:$0xf]
      %v4367 = vld [vmem:[#allocation3 + $0xac] sm:$0xf]
      %v4368 = vld [vmem:[#allocation3 + $0xb0] sm:$0xf]
      %v4369 = vld [vmem:[#allocation3 + $0xb4] sm:$0xf]
      %v4370 = vld [vmem:[#allocation3 + $0xb8] sm:$0xf]
      %v4371 = vld [vmem:[#allocation3 + $0xbc] sm:$0xf]
      %v4372 = vld [vmem:[%s4211] sm:$0xf]
      %v4373 = vld [vmem:[%s4211 + $0x4] sm:$0xf]
      %v4374 = vld [vmem:[%s4211 + $0x8] sm:$0xf]
      %v4375 = vld [vmem:[%s4211 + $0xc] sm:$0xf]
      %v4376 = vld [vmem:[%s4211 + $0x10] sm:$0xf]
      %v4377 = vld [vmem:[%s4211 + $0x14] sm:$0xf]
      %v4378 = vld [vmem:[%s4211 + $0x18] sm:$0xf]
      %v4379 = vld [vmem:[%s4211 + $0x1c] sm:$0xf]
      %v4380 = vld [vmem:[%s4211 + $0x20] sm:$0xf]
      %v4381 = vld [vmem:[%s4211 + $0x24] sm:$0xf]
      %v4382 = vld [vmem:[%s4211 + $0x28] sm:$0xf]
      %v4383 = vld [vmem:[%s4211 + $0x2c] sm:$0xf]
      %v4384 = vld [vmem:[%s4211 + $0x30] sm:$0xf]
      %v4385 = vld [vmem:[%s4211 + $0x34] sm:$0xf]
      %v4386 = vld [vmem:[%s4211 + $0x38] sm:$0xf]
      %v4387 = vld [vmem:[%s4211 + $0x3c] sm:$0xf]
      %v4388 = vld [vmem:[%s4211 + $0x40] sm:$0xf]
      %v4389 = vld [vmem:[%s4211 + $0x44] sm:$0xf]
      %v4390 = vld [vmem:[%s4211 + $0x48] sm:$0xf]
      %v4391 = vld [vmem:[%s4211 + $0x4c] sm:$0xf]
      %v4392 = vld [vmem:[%s4211 + $0x50] sm:$0xf]
      %v4393 = vld [vmem:[%s4211 + $0x54] sm:$0xf]
      %v4394 = vld [vmem:[%s4211 + $0x58] sm:$0xf]
      %v4395 = vld [vmem:[%s4211 + $0x5c] sm:$0xf]
      %v4396 = vld [vmem:[%s4211 + $0x60] sm:$0xf]
      %v4397 = vld [vmem:[%s4211 + $0x64] sm:$0xf]
      %v4398 = vld [vmem:[%s4211 + $0x68] sm:$0xf]
      %v4399 = vld [vmem:[%s4211 + $0x6c] sm:$0xf]
      %v4400 = vld [vmem:[%s4211 + $0x70] sm:$0xf]
      %v4401 = vld [vmem:[%s4211 + $0x74] sm:$0xf]
      %v4402 = vld [vmem:[%s4211 + $0x78] sm:$0xf]
      %v4403 = vld [vmem:[%s4211 + $0x7c] sm:$0xf]
      %v4404 = vld [vmem:[%s4211 + $0x80] sm:$0xf]
      %v4405 = vld [vmem:[%s4211 + $0x84] sm:$0xf]
      %v4406 = vld [vmem:[%s4211 + $0x88] sm:$0xf]
      %v4407 = vld [vmem:[%s4211 + $0x8c] sm:$0xf]
      %v4408 = vld [vmem:[%s4211 + $0x90] sm:$0xf]
      %v4409 = vld [vmem:[%s4211 + $0x94] sm:$0xf]
      %v4410 = vld [vmem:[%s4211 + $0x98] sm:$0xf]
      %v4411 = vld [vmem:[%s4211 + $0x9c] sm:$0xf]
      %v4412 = vld [vmem:[%s4211 + $0xa0] sm:$0xf]
      %v4413 = vld [vmem:[%s4211 + $0xa4] sm:$0xf]
      %v4414 = vld [vmem:[%s4211 + $0xa8] sm:$0xf]
      %v4415 = vld [vmem:[%s4211 + $0xac] sm:$0xf]
      %v4416 = vld [vmem:[%s4211 + $0xb0] sm:$0xf]
      %v4417 = vld [vmem:[%s4211 + $0xb4] sm:$0xf]
      %v4418 = vld [vmem:[%s4211 + $0xb8] sm:$0xf]
      %v4419 = vld [vmem:[%s4211 + $0xbc] sm:$0xf]
      %s4420 = scalar_lea.vmem [#allocation3], 24
      %v4421 = vld [vmem:[%s4420] sm:$0xf]
      %v4422 = vld [vmem:[%s4420 + $0x4] sm:$0xf]
      %v4423 = vld [vmem:[%s4420 + $0x8] sm:$0xf]
      %v4424 = vld [vmem:[%s4420 + $0xc] sm:$0xf]
      %v4425 = vld [vmem:[%s4420 + $0x10] sm:$0xf]
      %v4426 = vld [vmem:[%s4420 + $0x14] sm:$0xf]
      %v4427 = vld [vmem:[%s4420 + $0x18] sm:$0xf]
      %v4428 = vld [vmem:[%s4420 + $0x1c] sm:$0xf]
      %v4429 = vld [vmem:[%s4420 + $0x20] sm:$0xf]
      %v4430 = vld [vmem:[%s4420 + $0x24] sm:$0xf]
      %v4431 = vld [vmem:[%s4420 + $0x28] sm:$0xf]
      %v4432 = vld [vmem:[%s4420 + $0x2c] sm:$0xf]
      %v4433 = vld [vmem:[%s4420 + $0x30] sm:$0xf]
      %v4434 = vld [vmem:[%s4420 + $0x34] sm:$0xf]
      %v4435 = vld [vmem:[%s4420 + $0x38] sm:$0xf]
      %v4436 = vld [vmem:[%s4420 + $0x3c] sm:$0xf]
      %v4437 = vld [vmem:[%s4420 + $0x40] sm:$0xf]
      %v4438 = vld [vmem:[%s4420 + $0x44] sm:$0xf]
      %v4439 = vld [vmem:[%s4420 + $0x48] sm:$0xf]
      %v4440 = vld [vmem:[%s4420 + $0x4c] sm:$0xf]
      %v4441 = vld [vmem:[%s4420 + $0x50] sm:$0xf]
      %v4442 = vld [vmem:[%s4420 + $0x54] sm:$0xf]
      %v4443 = vld [vmem:[%s4420 + $0x58] sm:$0xf]
      %v4444 = vld [vmem:[%s4420 + $0x5c] sm:$0xf]
      %v4445 = vld [vmem:[%s4420 + $0x60] sm:$0xf]
      %v4446 = vld [vmem:[%s4420 + $0x64] sm:$0xf]
      %v4447 = vld [vmem:[%s4420 + $0x68] sm:$0xf]
      %v4448 = vld [vmem:[%s4420 + $0x6c] sm:$0xf]
      %v4449 = vld [vmem:[%s4420 + $0x70] sm:$0xf]
      %v4450 = vld [vmem:[%s4420 + $0x74] sm:$0xf]
      %v4451 = vld [vmem:[%s4420 + $0x78] sm:$0xf]
      %v4452 = vld [vmem:[%s4420 + $0x7c] sm:$0xf]
      %v4453 = vld [vmem:[%s4420 + $0x80] sm:$0xf]
      %v4454 = vld [vmem:[%s4420 + $0x84] sm:$0xf]
      %v4455 = vld [vmem:[%s4420 + $0x88] sm:$0xf]
      %v4456 = vld [vmem:[%s4420 + $0x8c] sm:$0xf]
      %v4457 = vld [vmem:[%s4420 + $0x90] sm:$0xf]
      %v4458 = vld [vmem:[%s4420 + $0x94] sm:$0xf]
      %v4459 = vld [vmem:[%s4420 + $0x98] sm:$0xf]
      %v4460 = vld [vmem:[%s4420 + $0x9c] sm:$0xf]
      %v4461 = vld [vmem:[%s4420 + $0xa0] sm:$0xf]
      %v4462 = vld [vmem:[%s4420 + $0xa4] sm:$0xf]
      %v4463 = vld [vmem:[%s4420 + $0xa8] sm:$0xf]
      %v4464 = vld [vmem:[%s4420 + $0xac] sm:$0xf]
      %v4465 = vld [vmem:[%s4420 + $0xb0] sm:$0xf]
      %v4466 = vld [vmem:[%s4420 + $0xb4] sm:$0xf]
      %v4467 = vld [vmem:[%s4420 + $0xb8] sm:$0xf]
      %v4468 = vld [vmem:[%s4420 + $0xbc] sm:$0xf]
      %v4517 = vunpack.c.l.b16 %v4324
      %v4518 = vunpack.c.l.b16 %v4325
      %v4519 = vunpack.c.l.b16 %v4326
      %v4520 = vunpack.c.l.b16 %v4327
      %v4521 = vunpack.c.l.b16 %v4328
      %v4522 = vunpack.c.l.b16 %v4329
      %v4523 = vunpack.c.l.b16 %v4330
      %v4524 = vunpack.c.l.b16 %v4331
      %v4525 = vunpack.c.l.b16 %v4332
      %v4526 = vunpack.c.l.b16 %v4333
      %v4527 = vunpack.c.l.b16 %v4334
      %v4528 = vunpack.c.l.b16 %v4335
      %v4529 = vunpack.c.l.b16 %v4336
      %v4530 = vunpack.c.l.b16 %v4337
      %v4531 = vunpack.c.l.b16 %v4338
      %v4532 = vunpack.c.l.b16 %v4339
      %v4533 = vunpack.c.l.b16 %v4340
      %v4534 = vunpack.c.l.b16 %v4341
      %v4535 = vunpack.c.l.b16 %v4342
      %v4536 = vunpack.c.l.b16 %v4343
      %v4537 = vunpack.c.l.b16 %v4344
      %v4538 = vunpack.c.l.b16 %v4345
      %v4539 = vunpack.c.l.b16 %v4346
      %v4540 = vunpack.c.l.b16 %v4347
      %v4541 = vunpack.c.l.b16 %v4348
      %v4542 = vunpack.c.l.b16 %v4349
      %v4543 = vunpack.c.l.b16 %v4350
      %v4544 = vunpack.c.l.b16 %v4351
      %v4545 = vunpack.c.l.b16 %v4352
      %v4546 = vunpack.c.l.b16 %v4353
      %v4547 = vunpack.c.l.b16 %v4354
      %v4548 = vunpack.c.l.b16 %v4355
      %v4549 = vunpack.c.l.b16 %v4356
      %v4550 = vunpack.c.l.b16 %v4357
      %v4551 = vunpack.c.l.b16 %v4358
      %v4552 = vunpack.c.l.b16 %v4359
      %v4553 = vunpack.c.l.b16 %v4360
      %v4554 = vunpack.c.l.b16 %v4361
      %v4555 = vunpack.c.l.b16 %v4362
      %v4556 = vunpack.c.l.b16 %v4363
      %v4557 = vunpack.c.l.b16 %v4364
      %v4558 = vunpack.c.l.b16 %v4365
      %v4559 = vunpack.c.l.b16 %v4366
      %v4560 = vunpack.c.l.b16 %v4367
      %v4561 = vunpack.c.l.b16 %v4368
      %v4562 = vunpack.c.l.b16 %v4369
      %v4563 = vunpack.c.l.b16 %v4370
      %v4564 = vunpack.c.l.b16 %v4371
      %v4565 = vpack.c.b16 %v4518, %v4517
      %v4566 = vpack.c.b16 %v4519, %v4519
      %v4567 = vpack.c.b16 %v4521, %v4520
      %v4568 = vpack.c.b16 %v4522, %v4522
      %v4569 = vpack.c.b16 %v4524, %v4523
      %v4570 = vpack.c.b16 %v4525, %v4525
      %v4571 = vpack.c.b16 %v4527, %v4526
      %v4572 = vpack.c.b16 %v4528, %v4528
      %v4573 = vpack.c.b16 %v4530, %v4529
      %v4574 = vpack.c.b16 %v4531, %v4531
      %v4575 = vpack.c.b16 %v4533, %v4532
      %v4576 = vpack.c.b16 %v4534, %v4534
      %v4577 = vpack.c.b16 %v4536, %v4535
      %v4578 = vpack.c.b16 %v4537, %v4537
      %v4579 = vpack.c.b16 %v4539, %v4538
      %v4580 = vpack.c.b16 %v4540, %v4540
      %v4581 = vpack.c.b16 %v4542, %v4541
      %v4582 = vpack.c.b16 %v4543, %v4543
      %v4583 = vpack.c.b16 %v4545, %v4544
      %v4584 = vpack.c.b16 %v4546, %v4546
      %v4585 = vpack.c.b16 %v4548, %v4547
      %v4586 = vpack.c.b16 %v4549, %v4549
      %v4587 = vpack.c.b16 %v4551, %v4550
      %v4588 = vpack.c.b16 %v4552, %v4552
      %v4589 = vpack.c.b16 %v4554, %v4553
      %v4590 = vpack.c.b16 %v4555, %v4555
      %v4591 = vpack.c.b16 %v4557, %v4556
      %v4592 = vpack.c.b16 %v4558, %v4558
      %v4593 = vpack.c.b16 %v4560, %v4559
      %v4594 = vpack.c.b16 %v4561, %v4561
      %v4595 = vpack.c.b16 %v4563, %v4562
      %v4596 = vpack.c.b16 %v4564, %v4564
      %v4661 = vunpack.c.l.b16 %v4372
      %v4662 = vunpack.c.l.b16 %v4373
      %v4663 = vunpack.c.l.b16 %v4374
      %v4664 = vunpack.c.l.b16 %v4375
      %v4665 = vunpack.c.l.b16 %v4376
      %v4666 = vunpack.c.l.b16 %v4377
      %v4667 = vunpack.c.l.b16 %v4378
      %v4668 = vunpack.c.l.b16 %v4379
      %v4669 = vunpack.c.l.b16 %v4380
      %v4670 = vunpack.c.l.b16 %v4381
      %v4671 = vunpack.c.l.b16 %v4382
      %v4672 = vunpack.c.l.b16 %v4383
      %v4673 = vunpack.c.l.b16 %v4384
      %v4674 = vunpack.c.l.b16 %v4385
      %v4675 = vunpack.c.l.b16 %v4386
      %v4676 = vunpack.c.l.b16 %v4387
      %v4677 = vunpack.c.l.b16 %v4388
      %v4678 = vunpack.c.l.b16 %v4389
      %v4679 = vunpack.c.l.b16 %v4390
      %v4680 = vunpack.c.l.b16 %v4391
      %v4681 = vunpack.c.l.b16 %v4392
      %v4682 = vunpack.c.l.b16 %v4393
      %v4683 = vunpack.c.l.b16 %v4394
      %v4684 = vunpack.c.l.b16 %v4395
      %v4685 = vunpack.c.l.b16 %v4396
      %v4686 = vunpack.c.l.b16 %v4397
      %v4687 = vunpack.c.l.b16 %v4398
      %v4688 = vunpack.c.l.b16 %v4399
      %v4689 = vunpack.c.l.b16 %v4400
      %v4690 = vunpack.c.l.b16 %v4401
      %v4691 = vunpack.c.l.b16 %v4402
      %v4692 = vunpack.c.l.b16 %v4403
      %v4693 = vunpack.c.l.b16 %v4404
      %v4694 = vunpack.c.l.b16 %v4405
      %v4695 = vunpack.c.l.b16 %v4406
      %v4696 = vunpack.c.l.b16 %v4407
      %v4697 = vunpack.c.l.b16 %v4408
      %v4698 = vunpack.c.l.b16 %v4409
      %v4699 = vunpack.c.l.b16 %v4410
      %v4700 = vunpack.c.l.b16 %v4411
      %v4701 = vunpack.c.l.b16 %v4412
      %v4702 = vunpack.c.l.b16 %v4413
      %v4703 = vunpack.c.l.b16 %v4414
      %v4704 = vunpack.c.l.b16 %v4415
      %v4705 = vunpack.c.l.b16 %v4416
      %v4706 = vunpack.c.l.b16 %v4417
      %v4707 = vunpack.c.l.b16 %v4418
      %v4708 = vunpack.c.l.b16 %v4419
      %v4709 = vpack.c.b16 %v4662, %v4661
      %v4710 = vpack.c.b16 %v4663, %v4663
      %v4711 = vpack.c.b16 %v4665, %v4664
      %v4712 = vpack.c.b16 %v4666, %v4666
      %v4713 = vpack.c.b16 %v4668, %v4667
      %v4714 = vpack.c.b16 %v4669, %v4669
      %v4715 = vpack.c.b16 %v4671, %v4670
      %v4716 = vpack.c.b16 %v4672, %v4672
      %v4717 = vpack.c.b16 %v4674, %v4673
      %v4718 = vpack.c.b16 %v4675, %v4675
      %v4719 = vpack.c.b16 %v4677, %v4676
      %v4720 = vpack.c.b16 %v4678, %v4678
      %v4721 = vpack.c.b16 %v4680, %v4679
      %v4722 = vpack.c.b16 %v4681, %v4681
      %v4723 = vpack.c.b16 %v4683, %v4682
      %v4724 = vpack.c.b16 %v4684, %v4684
      %v4725 = vpack.c.b16 %v4686, %v4685
      %v4726 = vpack.c.b16 %v4687, %v4687
      %v4727 = vpack.c.b16 %v4689, %v4688
      %v4728 = vpack.c.b16 %v4690, %v4690
      %v4729 = vpack.c.b16 %v4692, %v4691
      %v4730 = vpack.c.b16 %v4693, %v4693
      %v4731 = vpack.c.b16 %v4695, %v4694
      %v4732 = vpack.c.b16 %v4696, %v4696
      %v4733 = vpack.c.b16 %v4698, %v4697
      %v4734 = vpack.c.b16 %v4699, %v4699
      %v4735 = vpack.c.b16 %v4701, %v4700
      %v4736 = vpack.c.b16 %v4702, %v4702
      %v4737 = vpack.c.b16 %v4704, %v4703
      %v4738 = vpack.c.b16 %v4705, %v4705
      %v4739 = vpack.c.b16 %v4707, %v4706
      %v4740 = vpack.c.b16 %v4708, %v4708
      %v4805 = vunpack.c.l.b16 %v4421
      %v4806 = vunpack.c.l.b16 %v4422
      %v4807 = vunpack.c.l.b16 %v4423
      %v4808 = vunpack.c.l.b16 %v4424
      %v4809 = vunpack.c.l.b16 %v4425
      %v4810 = vunpack.c.l.b16 %v4426
      %v4811 = vunpack.c.l.b16 %v4427
      %v4812 = vunpack.c.l.b16 %v4428
      %v4813 = vunpack.c.l.b16 %v4429
      %v4814 = vunpack.c.l.b16 %v4430
      %v4815 = vunpack.c.l.b16 %v4431
      %v4816 = vunpack.c.l.b16 %v4432
      %v4817 = vunpack.c.l.b16 %v4433
      %v4818 = vunpack.c.l.b16 %v4434
      %v4819 = vunpack.c.l.b16 %v4435
      %v4820 = vunpack.c.l.b16 %v4436
      %v4821 = vunpack.c.l.b16 %v4437
      %v4822 = vunpack.c.l.b16 %v4438
      %v4823 = vunpack.c.l.b16 %v4439
      %v4824 = vunpack.c.l.b16 %v4440
      %v4825 = vunpack.c.l.b16 %v4441
      %v4826 = vunpack.c.l.b16 %v4442
      %v4827 = vunpack.c.l.b16 %v4443
      %v4828 = vunpack.c.l.b16 %v4444
      %v4829 = vunpack.c.l.b16 %v4445
      %v4830 = vunpack.c.l.b16 %v4446
      %v4831 = vunpack.c.l.b16 %v4447
      %v4832 = vunpack.c.l.b16 %v4448
      %v4833 = vunpack.c.l.b16 %v4449
      %v4834 = vunpack.c.l.b16 %v4450
      %v4835 = vunpack.c.l.b16 %v4451
      %v4836 = vunpack.c.l.b16 %v4452
      %v4837 = vunpack.c.l.b16 %v4453
      %v4838 = vunpack.c.l.b16 %v4454
      %v4839 = vunpack.c.l.b16 %v4455
      %v4840 = vunpack.c.l.b16 %v4456
      %v4841 = vunpack.c.l.b16 %v4457
      %v4842 = vunpack.c.l.b16 %v4458
      %v4843 = vunpack.c.l.b16 %v4459
      %v4844 = vunpack.c.l.b16 %v4460
      %v4845 = vunpack.c.l.b16 %v4461
      %v4846 = vunpack.c.l.b16 %v4462
      %v4847 = vunpack.c.l.b16 %v4463
      %v4848 = vunpack.c.l.b16 %v4464
      %v4849 = vunpack.c.l.b16 %v4465
      %v4850 = vunpack.c.l.b16 %v4466
      %v4851 = vunpack.c.l.b16 %v4467
      %v4852 = vunpack.c.l.b16 %v4468
      %v4853 = vpack.c.b16 %v4806, %v4805
      %v4854 = vpack.c.b16 %v4807, %v4807
      %v4855 = vpack.c.b16 %v4809, %v4808
      %v4856 = vpack.c.b16 %v4810, %v4810
      %v4857 = vpack.c.b16 %v4812, %v4811
      %v4858 = vpack.c.b16 %v4813, %v4813
      %v4859 = vpack.c.b16 %v4815, %v4814
      %v4860 = vpack.c.b16 %v4816, %v4816
      %v4861 = vpack.c.b16 %v4818, %v4817
      %v4862 = vpack.c.b16 %v4819, %v4819
      %v4863 = vpack.c.b16 %v4821, %v4820
      %v4864 = vpack.c.b16 %v4822, %v4822
      %v4865 = vpack.c.b16 %v4824, %v4823
      %v4866 = vpack.c.b16 %v4825, %v4825
      %v4867 = vpack.c.b16 %v4827, %v4826
      %v4868 = vpack.c.b16 %v4828, %v4828
      %v4869 = vpack.c.b16 %v4830, %v4829
      %v4870 = vpack.c.b16 %v4831, %v4831
      %v4871 = vpack.c.b16 %v4833, %v4832
      %v4872 = vpack.c.b16 %v4834, %v4834
      %v4873 = vpack.c.b16 %v4836, %v4835
      %v4874 = vpack.c.b16 %v4837, %v4837
      %v4875 = vpack.c.b16 %v4839, %v4838
      %v4876 = vpack.c.b16 %v4840, %v4840
      %v4877 = vpack.c.b16 %v4842, %v4841
      %v4878 = vpack.c.b16 %v4843, %v4843
      %v4879 = vpack.c.b16 %v4845, %v4844
      %v4880 = vpack.c.b16 %v4846, %v4846
      %v4881 = vpack.c.b16 %v4848, %v4847
      %v4882 = vpack.c.b16 %v4849, %v4849
      %v4883 = vpack.c.b16 %v4851, %v4850
      %v4884 = vpack.c.b16 %v4852, %v4852
      %s4901 = scalar_lea.vmem %s1, 576
      %v4902 = vld [vmem:[%s4901] sm:$0xf]
      %v4903 = vld [vmem:[%s4901 + $0x4] sm:$0xf]
      %v4904 = vld [vmem:[%s4901 + $0x8] sm:$0xf]
      %v4905 = vld [vmem:[%s4901 + $0xc] sm:$0xf]
      %v4906 = vld [vmem:[%s4901 + $0x10] sm:$0xf]
      %v4907 = vld [vmem:[%s4901 + $0x14] sm:$0xf]
      %v4908 = vld [vmem:[%s4901 + $0x18] sm:$0xf]
      %v4909 = vld [vmem:[%s4901 + $0x1c] sm:$0xf]
      %v4910 = vld [vmem:[%s4901 + $0x20] sm:$0xf]
      %v4911 = vld [vmem:[%s4901 + $0x24] sm:$0xf]
      %v4912 = vld [vmem:[%s4901 + $0x28] sm:$0xf]
      %v4913 = vld [vmem:[%s4901 + $0x2c] sm:$0xf]
      %v4914 = vld [vmem:[%s4901 + $0x30] sm:$0xf]
      %v4915 = vld [vmem:[%s4901 + $0x34] sm:$0xf]
      %v4916 = vld [vmem:[%s4901 + $0x38] sm:$0xf]
      %v4917 = vld [vmem:[%s4901 + $0x3c] sm:$0xf]
      %v4918 = vld [vmem:[%s4901 + $0x40] sm:$0xf]
      %v4919 = vld [vmem:[%s4901 + $0x44] sm:$0xf]
      %v4920 = vld [vmem:[%s4901 + $0x48] sm:$0xf]
      %v4921 = vld [vmem:[%s4901 + $0x4c] sm:$0xf]
      %v4922 = vld [vmem:[%s4901 + $0x50] sm:$0xf]
      %v4923 = vld [vmem:[%s4901 + $0x54] sm:$0xf]
      %v4924 = vld [vmem:[%s4901 + $0x58] sm:$0xf]
      %v4925 = vld [vmem:[%s4901 + $0x5c] sm:$0xf]
      %v4926 = vld [vmem:[%s4901 + $0x60] sm:$0xf]
      %v4927 = vld [vmem:[%s4901 + $0x64] sm:$0xf]
      %v4928 = vld [vmem:[%s4901 + $0x68] sm:$0xf]
      %v4929 = vld [vmem:[%s4901 + $0x6c] sm:$0xf]
      %v4930 = vld [vmem:[%s4901 + $0x70] sm:$0xf]
      %v4931 = vld [vmem:[%s4901 + $0x74] sm:$0xf]
      %v4932 = vld [vmem:[%s4901 + $0x78] sm:$0xf]
      %v4933 = vld [vmem:[%s4901 + $0x7c] sm:$0xf]
      %v4934 = vld [vmem:[%s4901 + $0x80] sm:$0xf]
      %v4935 = vld [vmem:[%s4901 + $0x84] sm:$0xf]
      %v4936 = vld [vmem:[%s4901 + $0x88] sm:$0xf]
      %v4937 = vld [vmem:[%s4901 + $0x8c] sm:$0xf]
      %v4938 = vld [vmem:[%s4901 + $0x90] sm:$0xf]
      %v4939 = vld [vmem:[%s4901 + $0x94] sm:$0xf]
      %v4940 = vld [vmem:[%s4901 + $0x98] sm:$0xf]
      %v4941 = vld [vmem:[%s4901 + $0x9c] sm:$0xf]
      %v4942 = vld [vmem:[%s4901 + $0xa0] sm:$0xf]
      %v4943 = vld [vmem:[%s4901 + $0xa4] sm:$0xf]
      %v4944 = vld [vmem:[%s4901 + $0xa8] sm:$0xf]
      %v4945 = vld [vmem:[%s4901 + $0xac] sm:$0xf]
      %v4946 = vld [vmem:[%s4901 + $0xb0] sm:$0xf]
      %v4947 = vld [vmem:[%s4901 + $0xb4] sm:$0xf]
      %v4948 = vld [vmem:[%s4901 + $0xb8] sm:$0xf]
      %v4949 = vld [vmem:[%s4901 + $0xbc] sm:$0xf]
      %v4951 = vshrl.u32 %v4565, 16
      %v4953 = vshll.u32 %v4565, 16
      %v4955 = vrot.slane %v4953, 1
      %v4956 = vor.u32 %v4951, %v4955
      %v4958 = vshll.u32 %v4566, 16
      %v4960 = vrot.slane %v4958, 1
      %v4961 = vsel %vm1378, %v4956, %v4960
      %v4963 = vshrl.u32 %v4709, 16
      %v4965 = vshll.u32 %v4709, 16
      %v4967 = vrot.slane %v4965, 1
      %v4968 = vor.u32 %v4963, %v4967
      %v4970 = vshll.u32 %v4710, 16
      %v4972 = vrot.slane %v4970, 1
      %v4973 = vsel %vm1378, %v4968, %v4972
      %v4975 = vshrl.u32 %v4853, 16
      %v4977 = vshll.u32 %v4853, 16
      %v4979 = vrot.slane %v4977, 1
      %v4980 = vor.u32 %v4975, %v4979
      %v4982 = vshll.u32 %v4854, 16
      %v4984 = vrot.slane %v4982, 1
      %v4985 = vsel %vm1378, %v4980, %v4984
      %v4987 = vshrl.u32 %v4567, 16
      %v4989 = vshll.u32 %v4567, 16
      %v4991 = vrot.slane %v4989, 1
      %v4992 = vor.u32 %v4987, %v4991
      %v4994 = vshll.u32 %v4568, 16
      %v4996 = vrot.slane %v4994, 1
      %v4997 = vsel %vm1378, %v4992, %v4996
      %v4999 = vshrl.u32 %v4711, 16
      %v5001 = vshll.u32 %v4711, 16
      %v5003 = vrot.slane %v5001, 1
      %v5004 = vor.u32 %v4999, %v5003
      %v5006 = vshll.u32 %v4712, 16
      %v5008 = vrot.slane %v5006, 1
      %v5009 = vsel %vm1378, %v5004, %v5008
      %v5011 = vshrl.u32 %v4855, 16
      %v5013 = vshll.u32 %v4855, 16
      %v5015 = vrot.slane %v5013, 1
      %v5016 = vor.u32 %v5011, %v5015
      %v5018 = vshll.u32 %v4856, 16
      %v5020 = vrot.slane %v5018, 1
      %v5021 = vsel %vm1378, %v5016, %v5020
      %v5023 = vshrl.u32 %v4569, 16
      %v5025 = vshll.u32 %v4569, 16
      %v5027 = vrot.slane %v5025, 1
      %v5028 = vor.u32 %v5023, %v5027
      %v5030 = vshll.u32 %v4570, 16
      %v5032 = vrot.slane %v5030, 1
      %v5033 = vsel %vm1378, %v5028, %v5032
      %v5035 = vshrl.u32 %v4713, 16
      %v5037 = vshll.u32 %v4713, 16
      %v5039 = vrot.slane %v5037, 1
      %v5040 = vor.u32 %v5035, %v5039
      %v5042 = vshll.u32 %v4714, 16
      %v5044 = vrot.slane %v5042, 1
      %v5045 = vsel %vm1378, %v5040, %v5044
      %v5047 = vshrl.u32 %v4857, 16
      %v5049 = vshll.u32 %v4857, 16
      %v5051 = vrot.slane %v5049, 1
      %v5052 = vor.u32 %v5047, %v5051
      %v5054 = vshll.u32 %v4858, 16
      %v5056 = vrot.slane %v5054, 1
      %v5057 = vsel %vm1378, %v5052, %v5056
      %v5059 = vshrl.u32 %v4571, 16
      %v5061 = vshll.u32 %v4571, 16
      %v5063 = vrot.slane %v5061, 1
      %v5064 = vor.u32 %v5059, %v5063
      %v5066 = vshll.u32 %v4572, 16
      %v5068 = vrot.slane %v5066, 1
      %v5069 = vsel %vm1378, %v5064, %v5068
      %v5071 = vshrl.u32 %v4715, 16
      %v5073 = vshll.u32 %v4715, 16
      %v5075 = vrot.slane %v5073, 1
      %v5076 = vor.u32 %v5071, %v5075
      %v5078 = vshll.u32 %v4716, 16
      %v5080 = vrot.slane %v5078, 1
      %v5081 = vsel %vm1378, %v5076, %v5080
      %v5083 = vshrl.u32 %v4859, 16
      %v5085 = vshll.u32 %v4859, 16
      %v5087 = vrot.slane %v5085, 1
      %v5088 = vor.u32 %v5083, %v5087
      %v5090 = vshll.u32 %v4860, 16
      %v5092 = vrot.slane %v5090, 1
      %v5093 = vsel %vm1378, %v5088, %v5092
      %v5095 = vshrl.u32 %v4573, 16
      %v5097 = vshll.u32 %v4573, 16
      %v5099 = vrot.slane %v5097, 1
      %v5100 = vor.u32 %v5095, %v5099
      %v5102 = vshll.u32 %v4574, 16
      %v5104 = vrot.slane %v5102, 1
      %v5105 = vsel %vm1378, %v5100, %v5104
      %v5107 = vshrl.u32 %v4717, 16
      %v5109 = vshll.u32 %v4717, 16
      %v5111 = vrot.slane %v5109, 1
      %v5112 = vor.u32 %v5107, %v5111
      %v5114 = vshll.u32 %v4718, 16
      %v5116 = vrot.slane %v5114, 1
      %v5117 = vsel %vm1378, %v5112, %v5116
      %v5119 = vshrl.u32 %v4861, 16
      %v5121 = vshll.u32 %v4861, 16
      %v5123 = vrot.slane %v5121, 1
      %v5124 = vor.u32 %v5119, %v5123
      %v5126 = vshll.u32 %v4862, 16
      %v5128 = vrot.slane %v5126, 1
      %v5129 = vsel %vm1378, %v5124, %v5128
      %v5131 = vshrl.u32 %v4575, 16
      %v5133 = vshll.u32 %v4575, 16
      %v5135 = vrot.slane %v5133, 1
      %v5136 = vor.u32 %v5131, %v5135
      %v5138 = vshll.u32 %v4576, 16
      %v5140 = vrot.slane %v5138, 1
      %v5141 = vsel %vm1378, %v5136, %v5140
      %v5143 = vshrl.u32 %v4719, 16
      %v5145 = vshll.u32 %v4719, 16
      %v5147 = vrot.slane %v5145, 1
      %v5148 = vor.u32 %v5143, %v5147
      %v5150 = vshll.u32 %v4720, 16
      %v5152 = vrot.slane %v5150, 1
      %v5153 = vsel %vm1378, %v5148, %v5152
      %v5155 = vshrl.u32 %v4863, 16
      %v5157 = vshll.u32 %v4863, 16
      %v5159 = vrot.slane %v5157, 1
      %v5160 = vor.u32 %v5155, %v5159
      %v5162 = vshll.u32 %v4864, 16
      %v5164 = vrot.slane %v5162, 1
      %v5165 = vsel %vm1378, %v5160, %v5164
      %v5167 = vshrl.u32 %v4577, 16
      %v5169 = vshll.u32 %v4577, 16
      %v5171 = vrot.slane %v5169, 1
      %v5172 = vor.u32 %v5167, %v5171
      %v5174 = vshll.u32 %v4578, 16
      %v5176 = vrot.slane %v5174, 1
      %v5177 = vsel %vm1378, %v5172, %v5176
      %v5179 = vshrl.u32 %v4721, 16
      %v5181 = vshll.u32 %v4721, 16
      %v5183 = vrot.slane %v5181, 1
      %v5184 = vor.u32 %v5179, %v5183
      %v5186 = vshll.u32 %v4722, 16
      %v5188 = vrot.slane %v5186, 1
      %v5189 = vsel %vm1378, %v5184, %v5188
      %v5191 = vshrl.u32 %v4865, 16
      %v5193 = vshll.u32 %v4865, 16
      %v5195 = vrot.slane %v5193, 1
      %v5196 = vor.u32 %v5191, %v5195
      %v5198 = vshll.u32 %v4866, 16
      %v5200 = vrot.slane %v5198, 1
      %v5201 = vsel %vm1378, %v5196, %v5200
      %v5203 = vshrl.u32 %v4579, 16
      %v5205 = vshll.u32 %v4579, 16
      %v5207 = vrot.slane %v5205, 1
      %v5208 = vor.u32 %v5203, %v5207
      %v5210 = vshll.u32 %v4580, 16
      %v5212 = vrot.slane %v5210, 1
      %v5213 = vsel %vm1378, %v5208, %v5212
      %v5215 = vshrl.u32 %v4723, 16
      %v5217 = vshll.u32 %v4723, 16
      %v5219 = vrot.slane %v5217, 1
      %v5220 = vor.u32 %v5215, %v5219
      %v5222 = vshll.u32 %v4724, 16
      %v5224 = vrot.slane %v5222, 1
      %v5225 = vsel %vm1378, %v5220, %v5224
      %v5227 = vshrl.u32 %v4867, 16
      %v5229 = vshll.u32 %v4867, 16
      %v5231 = vrot.slane %v5229, 1
      %v5232 = vor.u32 %v5227, %v5231
      %v5234 = vshll.u32 %v4868, 16
      %v5236 = vrot.slane %v5234, 1
      %v5237 = vsel %vm1378, %v5232, %v5236
      %v5239 = vshrl.u32 %v4581, 16
      %v5241 = vshll.u32 %v4581, 16
      %v5243 = vrot.slane %v5241, 1
      %v5244 = vor.u32 %v5239, %v5243
      %v5246 = vshll.u32 %v4582, 16
      %v5248 = vrot.slane %v5246, 1
      %v5249 = vsel %vm1378, %v5244, %v5248
      %v5251 = vshrl.u32 %v4725, 16
      %v5253 = vshll.u32 %v4725, 16
      %v5255 = vrot.slane %v5253, 1
      %v5256 = vor.u32 %v5251, %v5255
      %v5258 = vshll.u32 %v4726, 16
      %v5260 = vrot.slane %v5258, 1
      %v5261 = vsel %vm1378, %v5256, %v5260
      %v5263 = vshrl.u32 %v4869, 16
      %v5265 = vshll.u32 %v4869, 16
      %v5267 = vrot.slane %v5265, 1
      %v5268 = vor.u32 %v5263, %v5267
      %v5270 = vshll.u32 %v4870, 16
      %v5272 = vrot.slane %v5270, 1
      %v5273 = vsel %vm1378, %v5268, %v5272
      %v5275 = vshrl.u32 %v4583, 16
      %v5277 = vshll.u32 %v4583, 16
      %v5279 = vrot.slane %v5277, 1
      %v5280 = vor.u32 %v5275, %v5279
      %v5282 = vshll.u32 %v4584, 16
      %v5284 = vrot.slane %v5282, 1
      %v5285 = vsel %vm1378, %v5280, %v5284
      %v5287 = vshrl.u32 %v4727, 16
      %v5289 = vshll.u32 %v4727, 16
      %v5291 = vrot.slane %v5289, 1
      %v5292 = vor.u32 %v5287, %v5291
      %v5294 = vshll.u32 %v4728, 16
      %v5296 = vrot.slane %v5294, 1
      %v5297 = vsel %vm1378, %v5292, %v5296
      %v5299 = vshrl.u32 %v4871, 16
      %v5301 = vshll.u32 %v4871, 16
      %v5303 = vrot.slane %v5301, 1
      %v5304 = vor.u32 %v5299, %v5303
      %v5306 = vshll.u32 %v4872, 16
      %v5308 = vrot.slane %v5306, 1
      %v5309 = vsel %vm1378, %v5304, %v5308
      %v5311 = vshrl.u32 %v4585, 16
      %v5313 = vshll.u32 %v4585, 16
      %v5315 = vrot.slane %v5313, 1
      %v5316 = vor.u32 %v5311, %v5315
      %v5318 = vshll.u32 %v4586, 16
      %v5320 = vrot.slane %v5318, 1
      %v5321 = vsel %vm1378, %v5316, %v5320
      %v5323 = vshrl.u32 %v4729, 16
      %v5325 = vshll.u32 %v4729, 16
      %v5327 = vrot.slane %v5325, 1
      %v5328 = vor.u32 %v5323, %v5327
      %v5330 = vshll.u32 %v4730, 16
      %v5332 = vrot.slane %v5330, 1
      %v5333 = vsel %vm1378, %v5328, %v5332
      %v5335 = vshrl.u32 %v4873, 16
      %v5337 = vshll.u32 %v4873, 16
      %v5339 = vrot.slane %v5337, 1
      %v5340 = vor.u32 %v5335, %v5339
      %v5342 = vshll.u32 %v4874, 16
      %v5344 = vrot.slane %v5342, 1
      %v5345 = vsel %vm1378, %v5340, %v5344
      %v5347 = vshrl.u32 %v4587, 16
      %v5349 = vshll.u32 %v4587, 16
      %v5351 = vrot.slane %v5349, 1
      %v5352 = vor.u32 %v5347, %v5351
      %v5354 = vshll.u32 %v4588, 16
      %v5356 = vrot.slane %v5354, 1
      %v5357 = vsel %vm1378, %v5352, %v5356
      %v5359 = vshrl.u32 %v4731, 16
      %v5361 = vshll.u32 %v4731, 16
      %v5363 = vrot.slane %v5361, 1
      %v5364 = vor.u32 %v5359, %v5363
      %v5366 = vshll.u32 %v4732, 16
      %v5368 = vrot.slane %v5366, 1
      %v5369 = vsel %vm1378, %v5364, %v5368
      %v5371 = vshrl.u32 %v4875, 16
      %v5373 = vshll.u32 %v4875, 16
      %v5375 = vrot.slane %v5373, 1
      %v5376 = vor.u32 %v5371, %v5375
      %v5378 = vshll.u32 %v4876, 16
      %v5380 = vrot.slane %v5378, 1
      %v5381 = vsel %vm1378, %v5376, %v5380
      %v5383 = vshrl.u32 %v4589, 16
      %v5385 = vshll.u32 %v4589, 16
      %v5387 = vrot.slane %v5385, 1
      %v5388 = vor.u32 %v5383, %v5387
      %v5390 = vshll.u32 %v4590, 16
      %v5392 = vrot.slane %v5390, 1
      %v5393 = vsel %vm1378, %v5388, %v5392
      %v5395 = vshrl.u32 %v4733, 16
      %v5397 = vshll.u32 %v4733, 16
      %v5399 = vrot.slane %v5397, 1
      %v5400 = vor.u32 %v5395, %v5399
      %v5402 = vshll.u32 %v4734, 16
      %v5404 = vrot.slane %v5402, 1
      %v5405 = vsel %vm1378, %v5400, %v5404
      %v5407 = vshrl.u32 %v4877, 16
      %v5409 = vshll.u32 %v4877, 16
      %v5411 = vrot.slane %v5409, 1
      %v5412 = vor.u32 %v5407, %v5411
      %v5414 = vshll.u32 %v4878, 16
      %v5416 = vrot.slane %v5414, 1
      %v5417 = vsel %vm1378, %v5412, %v5416
      %v5419 = vshrl.u32 %v4591, 16
      %v5421 = vshll.u32 %v4591, 16
      %v5423 = vrot.slane %v5421, 1
      %v5424 = vor.u32 %v5419, %v5423
      %v5426 = vshll.u32 %v4592, 16
      %v5428 = vrot.slane %v5426, 1
      %v5429 = vsel %vm1378, %v5424, %v5428
      %v5431 = vshrl.u32 %v4735, 16
      %v5433 = vshll.u32 %v4735, 16
      %v5435 = vrot.slane %v5433, 1
      %v5436 = vor.u32 %v5431, %v5435
      %v5438 = vshll.u32 %v4736, 16
      %v5440 = vrot.slane %v5438, 1
      %v5441 = vsel %vm1378, %v5436, %v5440
      %v5443 = vshrl.u32 %v4879, 16
      %v5445 = vshll.u32 %v4879, 16
      %v5447 = vrot.slane %v5445, 1
      %v5448 = vor.u32 %v5443, %v5447
      %v5450 = vshll.u32 %v4880, 16
      %v5452 = vrot.slane %v5450, 1
      %v5453 = vsel %vm1378, %v5448, %v5452
      %v5455 = vshrl.u32 %v4593, 16
      %v5457 = vshll.u32 %v4593, 16
      %v5459 = vrot.slane %v5457, 1
      %v5460 = vor.u32 %v5455, %v5459
      %v5462 = vshll.u32 %v4594, 16
      %v5464 = vrot.slane %v5462, 1
      %v5465 = vsel %vm1378, %v5460, %v5464
      %v5467 = vshrl.u32 %v4737, 16
      %v5469 = vshll.u32 %v4737, 16
      %v5471 = vrot.slane %v5469, 1
      %v5472 = vor.u32 %v5467, %v5471
      %v5474 = vshll.u32 %v4738, 16
      %v5476 = vrot.slane %v5474, 1
      %v5477 = vsel %vm1378, %v5472, %v5476
      %v5479 = vshrl.u32 %v4881, 16
      %v5481 = vshll.u32 %v4881, 16
      %v5483 = vrot.slane %v5481, 1
      %v5484 = vor.u32 %v5479, %v5483
      %v5486 = vshll.u32 %v4882, 16
      %v5488 = vrot.slane %v5486, 1
      %v5489 = vsel %vm1378, %v5484, %v5488
      %v5491 = vshrl.u32 %v4595, 16
      %v5493 = vshll.u32 %v4595, 16
      %v5495 = vrot.slane %v5493, 1
      %v5496 = vor.u32 %v5491, %v5495
      %v5498 = vshll.u32 %v4596, 16
      %v5500 = vrot.slane %v5498, 1
      %v5501 = vsel %vm1378, %v5496, %v5500
      %v5503 = vshrl.u32 %v4739, 16
      %v5505 = vshll.u32 %v4739, 16
      %v5507 = vrot.slane %v5505, 1
      %v5508 = vor.u32 %v5503, %v5507
      %v5510 = vshll.u32 %v4740, 16
      %v5512 = vrot.slane %v5510, 1
      %v5513 = vsel %vm1378, %v5508, %v5512
      %v5515 = vshrl.u32 %v4883, 16
      %v5517 = vshll.u32 %v4883, 16
      %v5519 = vrot.slane %v5517, 1
      %v5520 = vor.u32 %v5515, %v5519
      %v5522 = vshll.u32 %v4884, 16
      %v5524 = vrot.slane %v5522, 1
      %v5525 = vsel %vm1378, %v5520, %v5524
      %s5574 = scalar_lea.vmem %s1, 768
      %v5575 = vld [vmem:[%s5574] sm:$0xf]
      %v5576 = vld [vmem:[%s5574 + $0x4] sm:$0xf]
      %v5577 = vld [vmem:[%s5574 + $0x8] sm:$0xf]
      %v5578 = vld [vmem:[%s5574 + $0xc] sm:$0xf]
      %v5579 = vld [vmem:[%s5574 + $0x10] sm:$0xf]
      %v5580 = vld [vmem:[%s5574 + $0x14] sm:$0xf]
      %v5581 = vld [vmem:[%s5574 + $0x18] sm:$0xf]
      %v5582 = vld [vmem:[%s5574 + $0x1c] sm:$0xf]
      %v5583 = vld [vmem:[%s5574 + $0x20] sm:$0xf]
      %v5584 = vld [vmem:[%s5574 + $0x24] sm:$0xf]
      %v5585 = vld [vmem:[%s5574 + $0x28] sm:$0xf]
      %v5586 = vld [vmem:[%s5574 + $0x2c] sm:$0xf]
      %v5587 = vld [vmem:[%s5574 + $0x30] sm:$0xf]
      %v5588 = vld [vmem:[%s5574 + $0x34] sm:$0xf]
      %v5589 = vld [vmem:[%s5574 + $0x38] sm:$0xf]
      %v5590 = vld [vmem:[%s5574 + $0x3c] sm:$0xf]
      %v5591 = vld [vmem:[%s5574 + $0x40] sm:$0xf]
      %v5592 = vld [vmem:[%s5574 + $0x44] sm:$0xf]
      %v5593 = vld [vmem:[%s5574 + $0x48] sm:$0xf]
      %v5594 = vld [vmem:[%s5574 + $0x4c] sm:$0xf]
      %v5595 = vld [vmem:[%s5574 + $0x50] sm:$0xf]
      %v5596 = vld [vmem:[%s5574 + $0x54] sm:$0xf]
      %v5597 = vld [vmem:[%s5574 + $0x58] sm:$0xf]
      %v5598 = vld [vmem:[%s5574 + $0x5c] sm:$0xf]
      %v5599 = vld [vmem:[%s5574 + $0x60] sm:$0xf]
      %v5600 = vld [vmem:[%s5574 + $0x64] sm:$0xf]
      %v5601 = vld [vmem:[%s5574 + $0x68] sm:$0xf]
      %v5602 = vld [vmem:[%s5574 + $0x6c] sm:$0xf]
      %v5603 = vld [vmem:[%s5574 + $0x70] sm:$0xf]
      %v5604 = vld [vmem:[%s5574 + $0x74] sm:$0xf]
      %v5605 = vld [vmem:[%s5574 + $0x78] sm:$0xf]
      %v5606 = vld [vmem:[%s5574 + $0x7c] sm:$0xf]
      %v5607 = vld [vmem:[%s5574 + $0x80] sm:$0xf]
      %v5608 = vld [vmem:[%s5574 + $0x84] sm:$0xf]
      %v5609 = vld [vmem:[%s5574 + $0x88] sm:$0xf]
      %v5610 = vld [vmem:[%s5574 + $0x8c] sm:$0xf]
      %v5611 = vld [vmem:[%s5574 + $0x90] sm:$0xf]
      %v5612 = vld [vmem:[%s5574 + $0x94] sm:$0xf]
      %v5613 = vld [vmem:[%s5574 + $0x98] sm:$0xf]
      %v5614 = vld [vmem:[%s5574 + $0x9c] sm:$0xf]
      %v5615 = vld [vmem:[%s5574 + $0xa0] sm:$0xf]
      %v5616 = vld [vmem:[%s5574 + $0xa4] sm:$0xf]
      %v5617 = vld [vmem:[%s5574 + $0xa8] sm:$0xf]
      %v5618 = vld [vmem:[%s5574 + $0xac] sm:$0xf]
      %v5619 = vld [vmem:[%s5574 + $0xb0] sm:$0xf]
      %v5620 = vld [vmem:[%s5574 + $0xb4] sm:$0xf]
      %v5621 = vld [vmem:[%s5574 + $0xb8] sm:$0xf]
      %v5622 = vld [vmem:[%s5574 + $0xbc] sm:$0xf]
      %v5671 = vunpack.c.l.b16 %v5575
      %v5672 = vunpack.c.l.b16 %v5576
      %v5673 = vunpack.c.l.b16 %v5577
      %v5674 = vunpack.c.l.b16 %v5578
      %v5675 = vunpack.c.l.b16 %v5579
      %v5676 = vunpack.c.l.b16 %v5580
      %v5677 = vunpack.c.l.b16 %v5581
      %v5678 = vunpack.c.l.b16 %v5582
      %v5679 = vunpack.c.l.b16 %v5583
      %v5680 = vunpack.c.l.b16 %v5584
      %v5681 = vunpack.c.l.b16 %v5585
      %v5682 = vunpack.c.l.b16 %v5586
      %v5683 = vunpack.c.l.b16 %v5587
      %v5684 = vunpack.c.l.b16 %v5588
      %v5685 = vunpack.c.l.b16 %v5589
      %v5686 = vunpack.c.l.b16 %v5590
      %v5687 = vunpack.c.l.b16 %v5591
      %v5688 = vunpack.c.l.b16 %v5592
      %v5689 = vunpack.c.l.b16 %v5593
      %v5690 = vunpack.c.l.b16 %v5594
      %v5691 = vunpack.c.l.b16 %v5595
      %v5692 = vunpack.c.l.b16 %v5596
      %v5693 = vunpack.c.l.b16 %v5597
      %v5694 = vunpack.c.l.b16 %v5598
      %v5695 = vunpack.c.l.b16 %v5599
      %v5696 = vunpack.c.l.b16 %v5600
      %v5697 = vunpack.c.l.b16 %v5601
      %v5698 = vunpack.c.l.b16 %v5602
      %v5699 = vunpack.c.l.b16 %v5603
      %v5700 = vunpack.c.l.b16 %v5604
      %v5701 = vunpack.c.l.b16 %v5605
      %v5702 = vunpack.c.l.b16 %v5606
      %v5703 = vunpack.c.l.b16 %v5607
      %v5704 = vunpack.c.l.b16 %v5608
      %v5705 = vunpack.c.l.b16 %v5609
      %v5706 = vunpack.c.l.b16 %v5610
      %v5707 = vunpack.c.l.b16 %v5611
      %v5708 = vunpack.c.l.b16 %v5612
      %v5709 = vunpack.c.l.b16 %v5613
      %v5710 = vunpack.c.l.b16 %v5614
      %v5711 = vunpack.c.l.b16 %v5615
      %v5712 = vunpack.c.l.b16 %v5616
      %v5713 = vunpack.c.l.b16 %v5617
      %v5714 = vunpack.c.l.b16 %v5618
      %v5715 = vunpack.c.l.b16 %v5619
      %v5716 = vunpack.c.l.b16 %v5620
      %v5717 = vunpack.c.l.b16 %v5621
      %v5718 = vunpack.c.l.b16 %v5622
      %v5719 = vpack.c.b16 %v5672, %v5671
      %v5720 = vpack.c.b16 %v5674, %v5673
      %v5721 = vpack.c.b16 %v5676, %v5675
      %v5722 = vpack.c.b16 %v5678, %v5677
      %v5723 = vpack.c.b16 %v5680, %v5679
      %v5724 = vpack.c.b16 %v5682, %v5681
      %v5725 = vpack.c.b16 %v5684, %v5683
      %v5726 = vpack.c.b16 %v5686, %v5685
      %v5727 = vpack.c.b16 %v5688, %v5687
      %v5728 = vpack.c.b16 %v5690, %v5689
      %v5729 = vpack.c.b16 %v5692, %v5691
      %v5730 = vpack.c.b16 %v5694, %v5693
      %v5731 = vpack.c.b16 %v5696, %v5695
      %v5732 = vpack.c.b16 %v5698, %v5697
      %v5733 = vpack.c.b16 %v5700, %v5699
      %v5734 = vpack.c.b16 %v5702, %v5701
      %v5735 = vpack.c.b16 %v5704, %v5703
      %v5736 = vpack.c.b16 %v5706, %v5705
      %v5737 = vpack.c.b16 %v5708, %v5707
      %v5738 = vpack.c.b16 %v5710, %v5709
      %v5739 = vpack.c.b16 %v5712, %v5711
      %v5740 = vpack.c.b16 %v5714, %v5713
      %v5741 = vpack.c.b16 %v5716, %v5715
      %v5742 = vpack.c.b16 %v5718, %v5717
      %5767 = vmatprep.subr.bf16.mxu0 0
      %5768 = vmatpush1.bf16.msra.mxu0 %v5719
      %5769 = vmatprep.subr.bf16.mxu0 0
      %5770 = vmatpush1.bf16.msra.mxu0 %v5720
      %5771 = vmatprep.subr.bf16.mxu0 0
      %5772 = vmatpush1.bf16.msra.mxu0 %v5721
      %5773 = vmatprep.subr.bf16.mxu0 0
      %5774 = vmatpush1.bf16.msra.mxu0 %v5722
      %5775 = vmatprep.subr.bf16.mxu0 0
      %5776 = vmatpush1.bf16.msra.mxu0 %v5723
      %5777 = vmatprep.subr.bf16.mxu0 0
      %5778 = vmatpush1.bf16.msra.mxu0 %v5724
      %5779 = vmatprep.subr.bf16.mxu0 0
      %5780 = vmatpush1.bf16.msra.mxu0 %v5725
      %5781 = vmatprep.subr.bf16.mxu0 0
      %5782 = vmatpush1.bf16.msra.mxu0 %v5726
      %5783 = vmatprep.subr.bf16.mxu0 0
      %5784 = vmatpush1.bf16.msra.mxu0 %v5727
      %5785 = vmatprep.subr.bf16.mxu0 0
      %5786 = vmatpush1.bf16.msra.mxu0 %v5728
      %5787 = vmatprep.subr.bf16.mxu0 0
      %5788 = vmatpush1.bf16.msra.mxu0 %v5729
      %5789 = vmatprep.subr.bf16.mxu0 0
      %5790 = vmatpush1.bf16.msra.mxu0 %v5730
      %5791 = vmatprep.subr.bf16.mxu0 0
      %5792 = vmatpush1.bf16.msra.mxu0 %v5731
      %5793 = vmatprep.subr.bf16.mxu0 0
      %5794 = vmatpush1.bf16.msra.mxu0 %v5732
      %5795 = vmatprep.subr.bf16.mxu0 0
      %5796 = vmatpush1.bf16.msra.mxu0 %v5733
      %5797 = vmatprep.subr.bf16.mxu0 0
      %5798 = vmatpush1.bf16.msra.mxu0 %v5734
      %5799 = vmatprep.mubr.bf16.mxu0 %v4973
      %5800 = vmatmul.mubr.bf16.gmra.mrb[0].mxu0 %v4961
      %v5801 = vpop.f32.mrb[0].mxu0
      %v5802 = vadd.f32 0.0, %v5801
      %v5803 = vpop.f32.mrb[0].mxu0
      %v5804 = vpop.f32.mrb[0].mxu0
      %v5805 = vadd.f32 0.0, %v5804
      %v5806 = vpop.f32.mrb[0].mxu0
      %5807 = vmatprep.mubr.bf16.mxu0 %v5009
      %5808 = vmatmul.mubr.bf16.gmra.mrb[0].mxu0 %v4997
      %v5809 = vpop.f32.mrb[0].mxu0
      %v5810 = vadd.f32 0.0, %v5809
      %v5811 = vpop.f32.mrb[0].mxu0
      %v5812 = vpop.f32.mrb[0].mxu0
      %v5813 = vadd.f32 0.0, %v5812
      %v5814 = vpop.f32.mrb[0].mxu0
      %5815 = vmatprep.mubr.bf16.mxu0 %v5045
      %5816 = vmatmul.mubr.bf16.gmra.mrb[0].mxu0 %v5033
      %v5817 = vpop.f32.mrb[0].mxu0
      %v5818 = vadd.f32 0.0, %v5817
      %v5819 = vpop.f32.mrb[0].mxu0
      %v5820 = vpop.f32.mrb[0].mxu0
      %v5821 = vadd.f32 0.0, %v5820
      %v5822 = vpop.f32.mrb[0].mxu0
      %5823 = vmatprep.mubr.bf16.mxu0 %v5081
      %5824 = vmatmul.mubr.bf16.gmra.mrb[0].mxu0 %v5069
      %v5825 = vpop.f32.mrb[0].mxu0
      %v5826 = vadd.f32 0.0, %v5825
      %v5827 = vpop.f32.mrb[0].mxu0
      %v5828 = vpop.f32.mrb[0].mxu0
      %v5829 = vadd.f32 0.0, %v5828
      %v5830 = vpop.f32.mrb[0].mxu0
      %5831 = vmatprep.mubr.bf16.mxu0 %v5117
      %5832 = vmatmul.mubr.bf16.gmra.mrb[0].mxu0 %v5105
      %v5833 = vpop.f32.mrb[0].mxu0
      %v5834 = vadd.f32 0.0, %v5833
      %v5835 = vpop.f32.mrb[0].mxu0
      %v5836 = vpop.f32.mrb[0].mxu0
      %v5837 = vadd.f32 0.0, %v5836
      %v5838 = vpop.f32.mrb[0].mxu0
      %5839 = vmatprep.mubr.bf16.mxu0 %v5153
      %5840 = vmatmul.mubr.bf16.gmra.mrb[0].mxu0 %v5141
      %v5841 = vpop.f32.mrb[0].mxu0
      %v5842 = vadd.f32 0.0, %v5841
      %v5843 = vpop.f32.mrb[0].mxu0
      %v5844 = vpop.f32.mrb[0].mxu0
      %v5845 = vadd.f32 0.0, %v5844
      %v5846 = vpop.f32.mrb[0].mxu0
      %5847 = vmatprep.mubr.bf16.mxu0 %v5189
      %5848 = vmatmul.mubr.bf16.gmra.mrb[0].mxu0 %v5177
      %v5849 = vpop.f32.mrb[0].mxu0
      %v5850 = vadd.f32 0.0, %v5849
      %v5851 = vpop.f32.mrb[0].mxu0
      %v5852 = vpop.f32.mrb[0].mxu0
      %v5853 = vadd.f32 0.0, %v5852
      %v5854 = vpop.f32.mrb[0].mxu0
      %5855 = vmatprep.mubr.bf16.mxu0 %v5225
      %5856 = vmatmul.mubr.bf16.gmra.mrb[0].mxu0 %v5213
      %v5857 = vpop.f32.mrb[0].mxu0
      %v5858 = vadd.f32 0.0, %v5857
      %v5859 = vpop.f32.mrb[0].mxu0
      %v5860 = vpop.f32.mrb[0].mxu0
      %v5861 = vadd.f32 0.0, %v5860
      %v5862 = vpop.f32.mrb[0].mxu0
      %5863 = vmatprep.mubr.bf16.mxu0 %v5261
      %5864 = vmatmul.mubr.bf16.gmra.mrb[0].mxu0 %v5249
      %v5865 = vpop.f32.mrb[0].mxu0
      %v5866 = vadd.f32 0.0, %v5865
      %v5867 = vpop.f32.mrb[0].mxu0
      %v5868 = vpop.f32.mrb[0].mxu0
      %v5869 = vadd.f32 0.0, %v5868
      %v5870 = vpop.f32.mrb[0].mxu0
      %5871 = vmatprep.mubr.bf16.mxu0 %v5297
      %5872 = vmatmul.mubr.bf16.gmra.mrb[0].mxu0 %v5285
      %v5873 = vpop.f32.mrb[0].mxu0
      %v5874 = vadd.f32 0.0, %v5873
      %v5875 = vpop.f32.mrb[0].mxu0
      %v5876 = vpop.f32.mrb[0].mxu0
      %v5877 = vadd.f32 0.0, %v5876
      %v5878 = vpop.f32.mrb[0].mxu0
      %5879 = vmatprep.mubr.bf16.mxu0 %v5333
      %5880 = vmatmul.mubr.bf16.gmra.mrb[0].mxu0 %v5321
      %v5881 = vpop.f32.mrb[0].mxu0
      %v5882 = vadd.f32 0.0, %v5881
      %v5883 = vpop.f32.mrb[0].mxu0
      %v5884 = vpop.f32.mrb[0].mxu0
      %v5885 = vadd.f32 0.0, %v5884
      %v5886 = vpop.f32.mrb[0].mxu0
      %5887 = vmatprep.mubr.bf16.mxu0 %v5369
      %5888 = vmatmul.mubr.bf16.gmra.mrb[0].mxu0 %v5357
      %v5889 = vpop.f32.mrb[0].mxu0
      %v5890 = vadd.f32 0.0, %v5889
      %v5891 = vpop.f32.mrb[0].mxu0
      %v5892 = vpop.f32.mrb[0].mxu0
      %v5893 = vadd.f32 0.0, %v5892
      %v5894 = vpop.f32.mrb[0].mxu0
      %5895 = vmatprep.mubr.bf16.mxu0 %v5405
      %5896 = vmatmul.mubr.bf16.gmra.mrb[0].mxu0 %v5393
      %v5897 = vpop.f32.mrb[0].mxu0
      %v5898 = vadd.f32 0.0, %v5897
      %v5899 = vpop.f32.mrb[0].mxu0
      %v5900 = vpop.f32.mrb[0].mxu0
      %v5901 = vadd.f32 0.0, %v5900
      %v5902 = vpop.f32.mrb[0].mxu0
      %5903 = vmatprep.mubr.bf16.mxu0 %v5441
      %5904 = vmatmul.mubr.bf16.gmra.mrb[0].mxu0 %v5429
      %v5905 = vpop.f32.mrb[0].mxu0
      %v5906 = vadd.f32 0.0, %v5905
      %v5907 = vpop.f32.mrb[0].mxu0
      %v5908 = vpop.f32.mrb[0].mxu0
      %v5909 = vadd.f32 0.0, %v5908
      %v5910 = vpop.f32.mrb[0].mxu0
      %5911 = vmatprep.mubr.bf16.mxu0 %v5477
      %5912 = vmatmul.mubr.bf16.gmra.mrb[0].mxu0 %v5465
      %v5913 = vpop.f32.mrb[0].mxu0
      %v5914 = vadd.f32 0.0, %v5913
      %v5915 = vpop.f32.mrb[0].mxu0
      %v5916 = vpop.f32.mrb[0].mxu0
      %v5917 = vadd.f32 0.0, %v5916
      %v5918 = vpop.f32.mrb[0].mxu0
      %5919 = vmatprep.mubr.bf16.mxu0 %v5513
      %5920 = vmatmul.mubr.bf16.gmra.mrb[0].mxu0 %v5501
      %v5921 = vpop.f32.mrb[0].mxu0
      %v5922 = vadd.f32 0.0, %v5921
      %v5923 = vpop.f32.mrb[0].mxu0
      %v5924 = vpop.f32.mrb[0].mxu0
      %v5925 = vadd.f32 0.0, %v5924
      %v5926 = vpop.f32.mrb[0].mxu0
      %5927 = vdwg.mxu0
      %5928 = vmatprep.subr.bf16.mxu0 0
      %5929 = vmatpush1.bf16.msra.mxu0 %v5735
      %5930 = vmatprep.subr.bf16.mxu0 0
      %5931 = vmatpush1.bf16.msra.mxu0 %v5736
      %5932 = vmatprep.subr.bf16.mxu0 0
      %5933 = vmatpush1.bf16.msra.mxu0 %v5737
      %5934 = vmatprep.subr.bf16.mxu0 0
      %5935 = vmatpush1.bf16.msra.mxu0 %v5738
      %5936 = vmatprep.subr.bf16.mxu0 0
      %5937 = vmatpush1.bf16.msra.mxu0 %v5739
      %5938 = vmatprep.subr.bf16.mxu0 0
      %5939 = vmatpush1.bf16.msra.mxu0 %v5740
      %5940 = vmatprep.subr.bf16.mxu0 0
      %5941 = vmatpush1.bf16.msra.mxu0 %v5741
      %5942 = vmatprep.subr.bf16.mxu0 0
      %5943 = vmatpush1.bf16.msra.mxu0 %v5742
      %5944 = vmatprep.subr.bf16.mxu0 0
      %5945 = vmatpush1.bf16.msra.mxu0 0
      %5946 = vmatprep.subr.bf16.mxu0 0
      %5947 = vmatpush1.bf16.msra.mxu0 0
      %5948 = vmatprep.subr.bf16.mxu0 0
      %5949 = vmatpush1.bf16.msra.mxu0 0
      %5950 = vmatprep.subr.bf16.mxu0 0
      %5951 = vmatpush1.bf16.msra.mxu0 0
      %5952 = vmatprep.subr.bf16.mxu0 0
      %5953 = vmatpush1.bf16.msra.mxu0 0
      %5954 = vmatprep.subr.bf16.mxu0 0
      %5955 = vmatpush1.bf16.msra.mxu0 0
      %5956 = vmatprep.subr.bf16.mxu0 0
      %5957 = vmatpush1.bf16.msra.mxu0 0
      %5958 = vmatprep.subr.bf16.mxu0 0
      %5959 = vmatpush1.bf16.msra.mxu0 0
      %5960 = vmatprep.mubr.bf16.mxu0 0
      %5961 = vmatmul.mubr.bf16.gmra.mrb[0].mxu0 %v4985
      %v5962 = vpop.f32.mrb[0].mxu0
      %v5963 = vadd.f32 %v5802, %v5962
      %v5964 = vpop.f32.mrb[0].mxu0
      %v5965 = vpop.f32.mrb[0].mxu0
      %v5966 = vadd.f32 %v5805, %v5965
      %v5967 = vpop.f32.mrb[0].mxu0
      %5968 = vmatprep.mubr.bf16.mxu0 0
      %5969 = vmatmul.mubr.bf16.gmra.mrb[0].mxu0 %v5021
      %v5970 = vpop.f32.mrb[0].mxu0
      %v5971 = vadd.f32 %v5810, %v5970
      %v5972 = vpop.f32.mrb[0].mxu0
      %v5973 = vpop.f32.mrb[0].mxu0
      %v5974 = vadd.f32 %v5813, %v5973
      %v5975 = vpop.f32.mrb[0].mxu0
      %5976 = vmatprep.mubr.bf16.mxu0 0
      %5977 = vmatmul.mubr.bf16.gmra.mrb[0].mxu0 %v5057
      %v5978 = vpop.f32.mrb[0].mxu0
      %v5979 = vadd.f32 %v5818, %v5978
      %v5980 = vpop.f32.mrb[0].mxu0
      %v5981 = vpop.f32.mrb[0].mxu0
      %v5982 = vadd.f32 %v5821, %v5981
      %v5983 = vpop.f32.mrb[0].mxu0
      %5984 = vmatprep.mubr.bf16.mxu0 0
      %5985 = vmatmul.mubr.bf16.gmra.mrb[0].mxu0 %v5093
      %v5986 = vpop.f32.mrb[0].mxu0
      %v5987 = vadd.f32 %v5826, %v5986
      %v5988 = vpop.f32.mrb[0].mxu0
      %v5989 = vpop.f32.mrb[0].mxu0
      %v5990 = vadd.f32 %v5829, %v5989
      %v5991 = vpop.f32.mrb[0].mxu0
      %5992 = vmatprep.mubr.bf16.mxu0 0
      %5993 = vmatmul.mubr.bf16.gmra.mrb[0].mxu0 %v5129
      %v5994 = vpop.f32.mrb[0].mxu0
      %v5995 = vadd.f32 %v5834, %v5994
      %v5996 = vpop.f32.mrb[0].mxu0
      %v5997 = vpop.f32.mrb[0].mxu0
      %v5998 = vadd.f32 %v5837, %v5997
      %v5999 = vpop.f32.mrb[0].mxu0
      %6000 = vmatprep.mubr.bf16.mxu0 0
      %6001 = vmatmul.mubr.bf16.gmra.mrb[0].mxu0 %v5165
      %v6002 = vpop.f32.mrb[0].mxu0
      %v6003 = vadd.f32 %v5842, %v6002
      %v6004 = vpop.f32.mrb[0].mxu0
      %v6005 = vpop.f32.mrb[0].mxu0
      %v6006 = vadd.f32 %v5845, %v6005
      %v6007 = vpop.f32.mrb[0].mxu0
      %6008 = vmatprep.mubr.bf16.mxu0 0
      %6009 = vmatmul.mubr.bf16.gmra.mrb[0].mxu0 %v5201
      %v6010 = vpop.f32.mrb[0].mxu0
      %v6011 = vadd.f32 %v5850, %v6010
      %v6012 = vpop.f32.mrb[0].mxu0
      %v6013 = vpop.f32.mrb[0].mxu0
      %v6014 = vadd.f32 %v5853, %v6013
      %v6015 = vpop.f32.mrb[0].mxu0
      %6016 = vmatprep.mubr.bf16.mxu0 0
      %6017 = vmatmul.mubr.bf16.gmra.mrb[0].mxu0 %v5237
      %v6018 = vpop.f32.mrb[0].mxu0
      %v6019 = vadd.f32 %v5858, %v6018
      %v6020 = vpop.f32.mrb[0].mxu0
      %v6021 = vpop.f32.mrb[0].mxu0
      %v6022 = vadd.f32 %v5861, %v6021
      %v6023 = vpop.f32.mrb[0].mxu0
      %6024 = vmatprep.mubr.bf16.mxu0 0
      %6025 = vmatmul.mubr.bf16.gmra.mrb[0].mxu0 %v5273
      %v6026 = vpop.f32.mrb[0].mxu0
      %v6027 = vadd.f32 %v5866, %v6026
      %v6028 = vpop.f32.mrb[0].mxu0
      %v6029 = vpop.f32.mrb[0].mxu0
      %v6030 = vadd.f32 %v5869, %v6029
      %v6031 = vpop.f32.mrb[0].mxu0
      %6032 = vmatprep.mubr.bf16.mxu0 0
      %6033 = vmatmul.mubr.bf16.gmra.mrb[0].mxu0 %v5309
      %v6034 = vpop.f32.mrb[0].mxu0
      %v6035 = vadd.f32 %v5874, %v6034
      %v6036 = vpop.f32.mrb[0].mxu0
      %v6037 = vpop.f32.mrb[0].mxu0
      %v6038 = vadd.f32 %v5877, %v6037
      %v6039 = vpop.f32.mrb[0].mxu0
      %6040 = vmatprep.mubr.bf16.mxu0 0
      %6041 = vmatmul.mubr.bf16.gmra.mrb[0].mxu0 %v5345
      %v6042 = vpop.f32.mrb[0].mxu0
      %v6043 = vadd.f32 %v5882, %v6042
      %v6044 = vpop.f32.mrb[0].mxu0
      %v6045 = vpop.f32.mrb[0].mxu0
      %v6046 = vadd.f32 %v5885, %v6045
      %v6047 = vpop.f32.mrb[0].mxu0
      %6048 = vmatprep.mubr.bf16.mxu0 0
      %6049 = vmatmul.mubr.bf16.gmra.mrb[0].mxu0 %v5381
      %v6050 = vpop.f32.mrb[0].mxu0
      %v6051 = vadd.f32 %v5890, %v6050
      %v6052 = vpop.f32.mrb[0].mxu0
      %v6053 = vpop.f32.mrb[0].mxu0
      %v6054 = vadd.f32 %v5893, %v6053
      %v6055 = vpop.f32.mrb[0].mxu0
      %6056 = vmatprep.mubr.bf16.mxu0 0
      %6057 = vmatmul.mubr.bf16.gmra.mrb[0].mxu0 %v5417
      %v6058 = vpop.f32.mrb[0].mxu0
      %v6059 = vadd.f32 %v5898, %v6058
      %v6060 = vpop.f32.mrb[0].mxu0
      %v6061 = vpop.f32.mrb[0].mxu0
      %v6062 = vadd.f32 %v5901, %v6061
      %v6063 = vpop.f32.mrb[0].mxu0
      %6064 = vmatprep.mubr.bf16.mxu0 0
      %6065 = vmatmul.mubr.bf16.gmra.mrb[0].mxu0 %v5453
      %v6066 = vpop.f32.mrb[0].mxu0
      %v6067 = vadd.f32 %v5906, %v6066
      %v6068 = vpop.f32.mrb[0].mxu0
      %v6069 = vpop.f32.mrb[0].mxu0
      %v6070 = vadd.f32 %v5909, %v6069
      %v6071 = vpop.f32.mrb[0].mxu0
      %6072 = vmatprep.mubr.bf16.mxu0 0
      %6073 = vmatmul.mubr.bf16.gmra.mrb[0].mxu0 %v5489
      %v6074 = vpop.f32.mrb[0].mxu0
      %v6075 = vadd.f32 %v5914, %v6074
      %v6076 = vpop.f32.mrb[0].mxu0
      %v6077 = vpop.f32.mrb[0].mxu0
      %v6078 = vadd.f32 %v5917, %v6077
      %v6079 = vpop.f32.mrb[0].mxu0
      %6080 = vmatprep.mubr.bf16.mxu0 0
      %6081 = vmatmul.mubr.bf16.gmra.mrb[0].mxu0 %v5525
      %v6082 = vpop.f32.mrb[0].mxu0
      %v6083 = vadd.f32 %v5922, %v6082
      %v6084 = vpop.f32.mrb[0].mxu0
      %v6085 = vpop.f32.mrb[0].mxu0
      %v6086 = vadd.f32 %v5925, %v6085
      %v6087 = vpop.f32.mrb[0].mxu0
      %6088 = vdwg.mxu0
      %v6137 = vunpack.c.l.b16 %v4902
      %v6138 = vunpack.c.l.b16 %v4903
      %v6139 = vunpack.c.l.b16 %v4904
      %v6140 = vunpack.c.l.b16 %v4905
      %v6141 = vunpack.c.l.b16 %v4906
      %v6142 = vunpack.c.l.b16 %v4907
      %v6143 = vunpack.c.l.b16 %v4908
      %v6144 = vunpack.c.l.b16 %v4909
      %v6145 = vunpack.c.l.b16 %v4910
      %v6146 = vunpack.c.l.b16 %v4911
      %v6147 = vunpack.c.l.b16 %v4912
      %v6148 = vunpack.c.l.b16 %v4913
      %v6149 = vunpack.c.l.b16 %v4914
      %v6150 = vunpack.c.l.b16 %v4915
      %v6151 = vunpack.c.l.b16 %v4916
      %v6152 = vunpack.c.l.b16 %v4917
      %v6153 = vunpack.c.l.b16 %v4918
      %v6154 = vunpack.c.l.b16 %v4919
      %v6155 = vunpack.c.l.b16 %v4920
      %v6156 = vunpack.c.l.b16 %v4921
      %v6157 = vunpack.c.l.b16 %v4922
      %v6158 = vunpack.c.l.b16 %v4923
      %v6159 = vunpack.c.l.b16 %v4924
      %v6160 = vunpack.c.l.b16 %v4925
      %v6161 = vunpack.c.l.b16 %v4926
      %v6162 = vunpack.c.l.b16 %v4927
      %v6163 = vunpack.c.l.b16 %v4928
      %v6164 = vunpack.c.l.b16 %v4929
      %v6165 = vunpack.c.l.b16 %v4930
      %v6166 = vunpack.c.l.b16 %v4931
      %v6167 = vunpack.c.l.b16 %v4932
      %v6168 = vunpack.c.l.b16 %v4933
      %v6169 = vunpack.c.l.b16 %v4934
      %v6170 = vunpack.c.l.b16 %v4935
      %v6171 = vunpack.c.l.b16 %v4936
      %v6172 = vunpack.c.l.b16 %v4937
      %v6173 = vunpack.c.l.b16 %v4938
      %v6174 = vunpack.c.l.b16 %v4939
      %v6175 = vunpack.c.l.b16 %v4940
      %v6176 = vunpack.c.l.b16 %v4941
      %v6177 = vunpack.c.l.b16 %v4942
      %v6178 = vunpack.c.l.b16 %v4943
      %v6179 = vunpack.c.l.b16 %v4944
      %v6180 = vunpack.c.l.b16 %v4945
      %v6181 = vunpack.c.l.b16 %v4946
      %v6182 = vunpack.c.l.b16 %v4947
      %v6183 = vunpack.c.l.b16 %v4948
      %v6184 = vunpack.c.l.b16 %v4949
      %v6185 = vpack.c.b16 %v6138, %v6137
      %v6186 = vpack.c.b16 %v6140, %v6139
      %v6187 = vpack.c.b16 %v6142, %v6141
      %v6188 = vpack.c.b16 %v6144, %v6143
      %v6189 = vpack.c.b16 %v6146, %v6145
      %v6190 = vpack.c.b16 %v6148, %v6147
      %v6191 = vpack.c.b16 %v6150, %v6149
      %v6192 = vpack.c.b16 %v6152, %v6151
      %v6193 = vpack.c.b16 %v6154, %v6153
      %v6194 = vpack.c.b16 %v6156, %v6155
      %v6195 = vpack.c.b16 %v6158, %v6157
      %v6196 = vpack.c.b16 %v6160, %v6159
      %v6197 = vpack.c.b16 %v6162, %v6161
      %v6198 = vpack.c.b16 %v6164, %v6163
      %v6199 = vpack.c.b16 %v6166, %v6165
      %v6200 = vpack.c.b16 %v6168, %v6167
      %v6201 = vpack.c.b16 %v6170, %v6169
      %v6202 = vpack.c.b16 %v6172, %v6171
      %v6203 = vpack.c.b16 %v6174, %v6173
      %v6204 = vpack.c.b16 %v6176, %v6175
      %v6205 = vpack.c.b16 %v6178, %v6177
      %v6206 = vpack.c.b16 %v6180, %v6179
      %v6207 = vpack.c.b16 %v6182, %v6181
      %v6208 = vpack.c.b16 %v6184, %v6183
      %6233 = vmatprep.subr.bf16.mxu0 0
      %6234 = vmatpush1.bf16.msra.mxu0 %v6185
      %6235 = vmatprep.subr.bf16.mxu0 0
      %6236 = vmatpush1.bf16.msra.mxu0 %v6186
      %6237 = vmatprep.subr.bf16.mxu0 0
      %6238 = vmatpush1.bf16.msra.mxu0 %v6187
      %6239 = vmatprep.subr.bf16.mxu0 0
      %6240 = vmatpush1.bf16.msra.mxu0 %v6188
      %6241 = vmatprep.subr.bf16.mxu0 0
      %6242 = vmatpush1.bf16.msra.mxu0 %v6189
      %6243 = vmatprep.subr.bf16.mxu0 0
      %6244 = vmatpush1.bf16.msra.mxu0 %v6190
      %6245 = vmatprep.subr.bf16.mxu0 0
      %6246 = vmatpush1.bf16.msra.mxu0 %v6191
      %6247 = vmatprep.subr.bf16.mxu0 0
      %6248 = vmatpush1.bf16.msra.mxu0 %v6192
      %6249 = vmatprep.subr.bf16.mxu0 0
      %6250 = vmatpush1.bf16.msra.mxu0 %v6193
      %6251 = vmatprep.subr.bf16.mxu0 0
      %6252 = vmatpush1.bf16.msra.mxu0 %v6194
      %6253 = vmatprep.subr.bf16.mxu0 0
      %6254 = vmatpush1.bf16.msra.mxu0 %v6195
      %6255 = vmatprep.subr.bf16.mxu0 0
      %6256 = vmatpush1.bf16.msra.mxu0 %v6196
      %6257 = vmatprep.subr.bf16.mxu0 0
      %6258 = vmatpush1.bf16.msra.mxu0 %v6197
      %6259 = vmatprep.subr.bf16.mxu0 0
      %6260 = vmatpush1.bf16.msra.mxu0 %v6198
      %6261 = vmatprep.subr.bf16.mxu0 0
      %6262 = vmatpush1.bf16.msra.mxu0 %v6199
      %6263 = vmatprep.subr.bf16.mxu0 0
      %6264 = vmatpush1.bf16.msra.mxu0 %v6200
      %6265 = vmatprep.mubr.bf16.mxu0 %v4709
      %6266 = vmatmul.mubr.bf16.gmra.mrb[0].mxu0 %v4565
      %v6267 = vpop.f32.mrb[0].mxu0
      %v6268 = vadd.f32 %v5963, %v6267
      %v6269 = vpop.f32.mrb[0].mxu0
      %v6270 = vpop.f32.mrb[0].mxu0
      %v6271 = vadd.f32 %v5966, %v6270
      %v6272 = vpop.f32.mrb[0].mxu0
      %6273 = vmatprep.mubr.bf16.mxu0 %v4711
      %6274 = vmatmul.mubr.bf16.gmra.mrb[0].mxu0 %v4567
      %v6275 = vpop.f32.mrb[0].mxu0
      %v6276 = vadd.f32 %v5971, %v6275
      %v6277 = vpop.f32.mrb[0].mxu0
      %v6278 = vpop.f32.mrb[0].mxu0
      %v6279 = vadd.f32 %v5974, %v6278
      %v6280 = vpop.f32.mrb[0].mxu0
      %6281 = vmatprep.mubr.bf16.mxu0 %v4713
      %6282 = vmatmul.mubr.bf16.gmra.mrb[0].mxu0 %v4569
      %v6283 = vpop.f32.mrb[0].mxu0
      %v6284 = vadd.f32 %v5979, %v6283
      %v6285 = vpop.f32.mrb[0].mxu0
      %v6286 = vpop.f32.mrb[0].mxu0
      %v6287 = vadd.f32 %v5982, %v6286
      %v6288 = vpop.f32.mrb[0].mxu0
      %6289 = vmatprep.mubr.bf16.mxu0 %v4715
      %6290 = vmatmul.mubr.bf16.gmra.mrb[0].mxu0 %v4571
      %v6291 = vpop.f32.mrb[0].mxu0
      %v6292 = vadd.f32 %v5987, %v6291
      %v6293 = vpop.f32.mrb[0].mxu0
      %v6294 = vpop.f32.mrb[0].mxu0
      %v6295 = vadd.f32 %v5990, %v6294
      %v6296 = vpop.f32.mrb[0].mxu0
      %6297 = vmatprep.mubr.bf16.mxu0 %v4717
      %6298 = vmatmul.mubr.bf16.gmra.mrb[0].mxu0 %v4573
      %v6299 = vpop.f32.mrb[0].mxu0
      %v6300 = vadd.f32 %v5995, %v6299
      %v6301 = vpop.f32.mrb[0].mxu0
      %v6302 = vpop.f32.mrb[0].mxu0
      %v6303 = vadd.f32 %v5998, %v6302
      %v6304 = vpop.f32.mrb[0].mxu0
      %6305 = vmatprep.mubr.bf16.mxu0 %v4719
      %6306 = vmatmul.mubr.bf16.gmra.mrb[0].mxu0 %v4575
      %v6307 = vpop.f32.mrb[0].mxu0
      %v6308 = vadd.f32 %v6003, %v6307
      %v6309 = vpop.f32.mrb[0].mxu0
      %v6310 = vpop.f32.mrb[0].mxu0
      %v6311 = vadd.f32 %v6006, %v6310
      %v6312 = vpop.f32.mrb[0].mxu0
      %6313 = vmatprep.mubr.bf16.mxu0 %v4721
      %6314 = vmatmul.mubr.bf16.gmra.mrb[0].mxu0 %v4577
      %v6315 = vpop.f32.mrb[0].mxu0
      %v6316 = vadd.f32 %v6011, %v6315
      %v6317 = vpop.f32.mrb[0].mxu0
      %v6318 = vpop.f32.mrb[0].mxu0
      %v6319 = vadd.f32 %v6014, %v6318
      %v6320 = vpop.f32.mrb[0].mxu0
      %6321 = vmatprep.mubr.bf16.mxu0 %v4723
      %6322 = vmatmul.mubr.bf16.gmra.mrb[0].mxu0 %v4579
      %v6323 = vpop.f32.mrb[0].mxu0
      %v6324 = vadd.f32 %v6019, %v6323
      %v6325 = vpop.f32.mrb[0].mxu0
      %v6326 = vpop.f32.mrb[0].mxu0
      %v6327 = vadd.f32 %v6022, %v6326
      %v6328 = vpop.f32.mrb[0].mxu0
      %6329 = vmatprep.mubr.bf16.mxu0 %v4725
      %6330 = vmatmul.mubr.bf16.gmra.mrb[0].mxu0 %v4581
      %v6331 = vpop.f32.mrb[0].mxu0
      %v6332 = vadd.f32 %v6027, %v6331
      %v6333 = vpop.f32.mrb[0].mxu0
      %v6334 = vpop.f32.mrb[0].mxu0
      %v6335 = vadd.f32 %v6030, %v6334
      %v6336 = vpop.f32.mrb[0].mxu0
      %6337 = vmatprep.mubr.bf16.mxu0 %v4727
      %6338 = vmatmul.mubr.bf16.gmra.mrb[0].mxu0 %v4583
      %v6339 = vpop.f32.mrb[0].mxu0
      %v6340 = vadd.f32 %v6035, %v6339
      %v6341 = vpop.f32.mrb[0].mxu0
      %v6342 = vpop.f32.mrb[0].mxu0
      %v6343 = vadd.f32 %v6038, %v6342
      %v6344 = vpop.f32.mrb[0].mxu0
      %6345 = vmatprep.mubr.bf16.mxu0 %v4729
      %6346 = vmatmul.mubr.bf16.gmra.mrb[0].mxu0 %v4585
      %v6347 = vpop.f32.mrb[0].mxu0
      %v6348 = vadd.f32 %v6043, %v6347
      %v6349 = vpop.f32.mrb[0].mxu0
      %v6350 = vpop.f32.mrb[0].mxu0
      %v6351 = vadd.f32 %v6046, %v6350
      %v6352 = vpop.f32.mrb[0].mxu0
      %6353 = vmatprep.mubr.bf16.mxu0 %v4731
      %6354 = vmatmul.mubr.bf16.gmra.mrb[0].mxu0 %v4587
      %v6355 = vpop.f32.mrb[0].mxu0
      %v6356 = vadd.f32 %v6051, %v6355
      %v6357 = vpop.f32.mrb[0].mxu0
      %v6358 = vpop.f32.mrb[0].mxu0
      %v6359 = vadd.f32 %v6054, %v6358
      %v6360 = vpop.f32.mrb[0].mxu0
      %6361 = vmatprep.mubr.bf16.mxu0 %v4733
      %6362 = vmatmul.mubr.bf16.gmra.mrb[0].mxu0 %v4589
      %v6363 = vpop.f32.mrb[0].mxu0
      %v6364 = vadd.f32 %v6059, %v6363
      %v6365 = vpop.f32.mrb[0].mxu0
      %v6366 = vpop.f32.mrb[0].mxu0
      %v6367 = vadd.f32 %v6062, %v6366
      %v6368 = vpop.f32.mrb[0].mxu0
      %6369 = vmatprep.mubr.bf16.mxu0 %v4735
      %6370 = vmatmul.mubr.bf16.gmra.mrb[0].mxu0 %v4591
      %v6371 = vpop.f32.mrb[0].mxu0
      %v6372 = vadd.f32 %v6067, %v6371
      %v6373 = vpop.f32.mrb[0].mxu0
      %v6374 = vpop.f32.mrb[0].mxu0
      %v6375 = vadd.f32 %v6070, %v6374
      %v6376 = vpop.f32.mrb[0].mxu0
      %6377 = vmatprep.mubr.bf16.mxu0 %v4737
      %6378 = vmatmul.mubr.bf16.gmra.mrb[0].mxu0 %v4593
      %v6379 = vpop.f32.mrb[0].mxu0
      %v6380 = vadd.f32 %v6075, %v6379
      %v6381 = vpop.f32.mrb[0].mxu0
      %v6382 = vpop.f32.mrb[0].mxu0
      %v6383 = vadd.f32 %v6078, %v6382
      %v6384 = vpop.f32.mrb[0].mxu0
      %6385 = vmatprep.mubr.bf16.mxu0 %v4739
      %6386 = vmatmul.mubr.bf16.gmra.mrb[0].mxu0 %v4595
      %v6387 = vpop.f32.mrb[0].mxu0
      %v6388 = vadd.f32 %v6083, %v6387
      %v6389 = vpop.f32.mrb[0].mxu0
      %v6390 = vpop.f32.mrb[0].mxu0
      %v6391 = vadd.f32 %v6086, %v6390
      %v6392 = vpop.f32.mrb[0].mxu0
      %6393 = vdwg.mxu0
      %6394 = vmatprep.subr.bf16.mxu0 0
      %6395 = vmatpush1.bf16.msra.mxu0 %v6201
      %6396 = vmatprep.subr.bf16.mxu0 0
      %6397 = vmatpush1.bf16.msra.mxu0 %v6202
      %6398 = vmatprep.subr.bf16.mxu0 0
      %6399 = vmatpush1.bf16.msra.mxu0 %v6203
      %6400 = vmatprep.subr.bf16.mxu0 0
      %6401 = vmatpush1.bf16.msra.mxu0 %v6204
      %6402 = vmatprep.subr.bf16.mxu0 0
      %6403 = vmatpush1.bf16.msra.mxu0 %v6205
      %6404 = vmatprep.subr.bf16.mxu0 0
      %6405 = vmatpush1.bf16.msra.mxu0 %v6206
      %6406 = vmatprep.subr.bf16.mxu0 0
      %6407 = vmatpush1.bf16.msra.mxu0 %v6207
      %6408 = vmatprep.subr.bf16.mxu0 0
      %6409 = vmatpush1.bf16.msra.mxu0 %v6208
      %6410 = vmatprep.subr.bf16.mxu0 0
      %6411 = vmatpush1.bf16.msra.mxu0 0
      %6412 = vmatprep.subr.bf16.mxu0 0
      %6413 = vmatpush1.bf16.msra.mxu0 0
      %6414 = vmatprep.subr.bf16.mxu0 0
      %6415 = vmatpush1.bf16.msra.mxu0 0
      %6416 = vmatprep.subr.bf16.mxu0 0
      %6417 = vmatpush1.bf16.msra.mxu0 0
      %6418 = vmatprep.subr.bf16.mxu0 0
      %6419 = vmatpush1.bf16.msra.mxu0 0
      %6420 = vmatprep.subr.bf16.mxu0 0
      %6421 = vmatpush1.bf16.msra.mxu0 0
      %6422 = vmatprep.subr.bf16.mxu0 0
      %6423 = vmatpush1.bf16.msra.mxu0 0
      %6424 = vmatprep.subr.bf16.mxu0 0
      %6425 = vmatpush1.bf16.msra.mxu0 0
      %6426 = vmatprep.mubr.bf16.mxu0 0
      %6427 = vmatmul.mubr.bf16.gmra.mrb[0].mxu0 %v4853
      %v6428 = vpop.f32.mrb[0].mxu0
      %v6429 = vadd.f32 %v6268, %v6428
      %v6430 = vpop.f32.mrb[0].mxu0
      %v6431 = vpop.f32.mrb[0].mxu0
      %v6432 = vadd.f32 %v6271, %v6431
      %v6433 = vpop.f32.mrb[0].mxu0
      %6434 = vmatprep.mubr.bf16.mxu0 0
      %6435 = vmatmul.mubr.bf16.gmra.mrb[0].mxu0 %v4855
      %v6436 = vpop.f32.mrb[0].mxu0
      %v6437 = vadd.f32 %v6276, %v6436
      %v6438 = vpop.f32.mrb[0].mxu0
      %v6439 = vpop.f32.mrb[0].mxu0
      %v6440 = vadd.f32 %v6279, %v6439
      %v6441 = vpop.f32.mrb[0].mxu0
      %6442 = vmatprep.mubr.bf16.mxu0 0
      %6443 = vmatmul.mubr.bf16.gmra.mrb[0].mxu0 %v4857
      %v6444 = vpop.f32.mrb[0].mxu0
      %v6445 = vadd.f32 %v6284, %v6444
      %v6446 = vpop.f32.mrb[0].mxu0
      %v6447 = vpop.f32.mrb[0].mxu0
      %v6448 = vadd.f32 %v6287, %v6447
      %v6449 = vpop.f32.mrb[0].mxu0
      %6450 = vmatprep.mubr.bf16.mxu0 0
      %6451 = vmatmul.mubr.bf16.gmra.mrb[0].mxu0 %v4859
      %v6452 = vpop.f32.mrb[0].mxu0
      %v6453 = vadd.f32 %v6292, %v6452
      %v6454 = vpop.f32.mrb[0].mxu0
      %v6455 = vpop.f32.mrb[0].mxu0
      %v6456 = vadd.f32 %v6295, %v6455
      %v6457 = vpop.f32.mrb[0].mxu0
      %6458 = vmatprep.mubr.bf16.mxu0 0
      %6459 = vmatmul.mubr.bf16.gmra.mrb[0].mxu0 %v4861
      %v6460 = vpop.f32.mrb[0].mxu0
      %v6461 = vadd.f32 %v6300, %v6460
      %v6462 = vpop.f32.mrb[0].mxu0
      %v6463 = vpop.f32.mrb[0].mxu0
      %v6464 = vadd.f32 %v6303, %v6463
      %v6465 = vpop.f32.mrb[0].mxu0
      %6466 = vmatprep.mubr.bf16.mxu0 0
      %6467 = vmatmul.mubr.bf16.gmra.mrb[0].mxu0 %v4863
      %v6468 = vpop.f32.mrb[0].mxu0
      %v6469 = vadd.f32 %v6308, %v6468
      %v6470 = vpop.f32.mrb[0].mxu0
      %v6471 = vpop.f32.mrb[0].mxu0
      %v6472 = vadd.f32 %v6311, %v6471
      %v6473 = vpop.f32.mrb[0].mxu0
      %6474 = vmatprep.mubr.bf16.mxu0 0
      %6475 = vmatmul.mubr.bf16.gmra.mrb[0].mxu0 %v4865
      %v6476 = vpop.f32.mrb[0].mxu0
      %v6477 = vadd.f32 %v6316, %v6476
      %v6478 = vpop.f32.mrb[0].mxu0
      %v6479 = vpop.f32.mrb[0].mxu0
      %v6480 = vadd.f32 %v6319, %v6479
      %v6481 = vpop.f32.mrb[0].mxu0
      %6482 = vmatprep.mubr.bf16.mxu0 0
      %6483 = vmatmul.mubr.bf16.gmra.mrb[0].mxu0 %v4867
      %v6484 = vpop.f32.mrb[0].mxu0
      %v6485 = vadd.f32 %v6324, %v6484
      %v6486 = vpop.f32.mrb[0].mxu0
      %v6487 = vpop.f32.mrb[0].mxu0
      %v6488 = vadd.f32 %v6327, %v6487
      %v6489 = vpop.f32.mrb[0].mxu0
      %6490 = vmatprep.mubr.bf16.mxu0 0
      %6491 = vmatmul.mubr.bf16.gmra.mrb[0].mxu0 %v4869
      %v6492 = vpop.f32.mrb[0].mxu0
      %v6493 = vadd.f32 %v6332, %v6492
      %v6494 = vpop.f32.mrb[0].mxu0
      %v6495 = vpop.f32.mrb[0].mxu0
      %v6496 = vadd.f32 %v6335, %v6495
      %v6497 = vpop.f32.mrb[0].mxu0
      %6498 = vmatprep.mubr.bf16.mxu0 0
      %6499 = vmatmul.mubr.bf16.gmra.mrb[0].mxu0 %v4871
      %v6500 = vpop.f32.mrb[0].mxu0
      %v6501 = vadd.f32 %v6340, %v6500
      %v6502 = vpop.f32.mrb[0].mxu0
      %v6503 = vpop.f32.mrb[0].mxu0
      %v6504 = vadd.f32 %v6343, %v6503
      %v6505 = vpop.f32.mrb[0].mxu0
      %6506 = vmatprep.mubr.bf16.mxu0 0
      %6507 = vmatmul.mubr.bf16.gmra.mrb[0].mxu0 %v4873
      %v6508 = vpop.f32.mrb[0].mxu0
      %v6509 = vadd.f32 %v6348, %v6508
      %v6510 = vpop.f32.mrb[0].mxu0
      %v6511 = vpop.f32.mrb[0].mxu0
      %v6512 = vadd.f32 %v6351, %v6511
      %v6513 = vpop.f32.mrb[0].mxu0
      %6514 = vmatprep.mubr.bf16.mxu0 0
      %6515 = vmatmul.mubr.bf16.gmra.mrb[0].mxu0 %v4875
      %v6516 = vpop.f32.mrb[0].mxu0
      %v6517 = vadd.f32 %v6356, %v6516
      %v6518 = vpop.f32.mrb[0].mxu0
      %v6519 = vpop.f32.mrb[0].mxu0
      %v6520 = vadd.f32 %v6359, %v6519
      %v6521 = vpop.f32.mrb[0].mxu0
      %6522 = vmatprep.mubr.bf16.mxu0 0
      %6523 = vmatmul.mubr.bf16.gmra.mrb[0].mxu0 %v4877
      %v6524 = vpop.f32.mrb[0].mxu0
      %v6525 = vadd.f32 %v6364, %v6524
      %v6526 = vpop.f32.mrb[0].mxu0
      %v6527 = vpop.f32.mrb[0].mxu0
      %v6528 = vadd.f32 %v6367, %v6527
      %v6529 = vpop.f32.mrb[0].mxu0
      %6530 = vmatprep.mubr.bf16.mxu0 0
      %6531 = vmatmul.mubr.bf16.gmra.mrb[0].mxu0 %v4879
      %v6532 = vpop.f32.mrb[0].mxu0
      %v6533 = vadd.f32 %v6372, %v6532
      %v6534 = vpop.f32.mrb[0].mxu0
      %v6535 = vpop.f32.mrb[0].mxu0
      %v6536 = vadd.f32 %v6375, %v6535
      %v6537 = vpop.f32.mrb[0].mxu0
      %6538 = vmatprep.mubr.bf16.mxu0 0
      %6539 = vmatmul.mubr.bf16.gmra.mrb[0].mxu0 %v4881
      %v6540 = vpop.f32.mrb[0].mxu0
      %v6541 = vadd.f32 %v6380, %v6540
      %v6542 = vpop.f32.mrb[0].mxu0
      %v6543 = vpop.f32.mrb[0].mxu0
      %v6544 = vadd.f32 %v6383, %v6543
      %v6545 = vpop.f32.mrb[0].mxu0
      %6546 = vmatprep.mubr.bf16.mxu0 0
      %6547 = vmatmul.mubr.bf16.gmra.mrb[0].mxu0 %v4883
      %v6548 = vpop.f32.mrb[0].mxu0
      %v6549 = vadd.f32 %v6388, %v6548
      %v6550 = vpop.f32.mrb[0].mxu0
      %v6551 = vpop.f32.mrb[0].mxu0
      %v6552 = vadd.f32 %v6391, %v6551
      %v6553 = vpop.f32.mrb[0].mxu0
      %6554 = vdwg.mxu0
      %v6555 = vrot.slane %v4565, 1
      %v6556 = vrot.slane %v4566, 1
      %v6557 = vsel %vm2984, %v6555, %v6556
      %v6558 = vrot.slane %v4709, 1
      %v6559 = vrot.slane %v4710, 1
      %v6560 = vsel %vm2984, %v6558, %v6559
      %v6561 = vrot.slane %v4853, 1
      %v6562 = vrot.slane %v4854, 1
      %v6563 = vsel %vm2984, %v6561, %v6562
      %v6564 = vrot.slane %v4567, 1
      %v6565 = vrot.slane %v4568, 1
      %v6566 = vsel %vm2984, %v6564, %v6565
      %v6567 = vrot.slane %v4711, 1
      %v6568 = vrot.slane %v4712, 1
      %v6569 = vsel %vm2984, %v6567, %v6568
      %v6570 = vrot.slane %v4855, 1
      %v6571 = vrot.slane %v4856, 1
      %v6572 = vsel %vm2984, %v6570, %v6571
      %v6573 = vrot.slane %v4569, 1
      %v6574 = vrot.slane %v4570, 1
      %v6575 = vsel %vm2984, %v6573, %v6574
      %v6576 = vrot.slane %v4713, 1
      %v6577 = vrot.slane %v4714, 1
      %v6578 = vsel %vm2984, %v6576, %v6577
      %v6579 = vrot.slane %v4857, 1
      %v6580 = vrot.slane %v4858, 1
      %v6581 = vsel %vm2984, %v6579, %v6580
      %v6582 = vrot.slane %v4571, 1
      %v6583 = vrot.slane %v4572, 1
      %v6584 = vsel %vm2984, %v6582, %v6583
      %v6585 = vrot.slane %v4715, 1
      %v6586 = vrot.slane %v4716, 1
      %v6587 = vsel %vm2984, %v6585, %v6586
      %v6588 = vrot.slane %v4859, 1
      %v6589 = vrot.slane %v4860, 1
      %v6590 = vsel %vm2984, %v6588, %v6589
      %v6591 = vrot.slane %v4573, 1
      %v6592 = vrot.slane %v4574, 1
      %v6593 = vsel %vm2984, %v6591, %v6592
      %v6594 = vrot.slane %v4717, 1
      %v6595 = vrot.slane %v4718, 1
      %v6596 = vsel %vm2984, %v6594, %v6595
      %v6597 = vrot.slane %v4861, 1
      %v6598 = vrot.slane %v4862, 1
      %v6599 = vsel %vm2984, %v6597, %v6598
      %v6600 = vrot.slane %v4575, 1
      %v6601 = vrot.slane %v4576, 1
      %v6602 = vsel %vm2984, %v6600, %v6601
      %v6603 = vrot.slane %v4719, 1
      %v6604 = vrot.slane %v4720, 1
      %v6605 = vsel %vm2984, %v6603, %v6604
      %v6606 = vrot.slane %v4863, 1
      %v6607 = vrot.slane %v4864, 1
      %v6608 = vsel %vm2984, %v6606, %v6607
      %v6609 = vrot.slane %v4577, 1
      %v6610 = vrot.slane %v4578, 1
      %v6611 = vsel %vm2984, %v6609, %v6610
      %v6612 = vrot.slane %v4721, 1
      %v6613 = vrot.slane %v4722, 1
      %v6614 = vsel %vm2984, %v6612, %v6613
      %v6615 = vrot.slane %v4865, 1
      %v6616 = vrot.slane %v4866, 1
      %v6617 = vsel %vm2984, %v6615, %v6616
      %v6618 = vrot.slane %v4579, 1
      %v6619 = vrot.slane %v4580, 1
      %v6620 = vsel %vm2984, %v6618, %v6619
      %v6621 = vrot.slane %v4723, 1
      %v6622 = vrot.slane %v4724, 1
      %v6623 = vsel %vm2984, %v6621, %v6622
      %v6624 = vrot.slane %v4867, 1
      %v6625 = vrot.slane %v4868, 1
      %v6626 = vsel %vm2984, %v6624, %v6625
      %v6627 = vrot.slane %v4581, 1
      %v6628 = vrot.slane %v4582, 1
      %v6629 = vsel %vm2984, %v6627, %v6628
      %v6630 = vrot.slane %v4725, 1
      %v6631 = vrot.slane %v4726, 1
      %v6632 = vsel %vm2984, %v6630, %v6631
      %v6633 = vrot.slane %v4869, 1
      %v6634 = vrot.slane %v4870, 1
      %v6635 = vsel %vm2984, %v6633, %v6634
      %v6636 = vrot.slane %v4583, 1
      %v6637 = vrot.slane %v4584, 1
      %v6638 = vsel %vm2984, %v6636, %v6637
      %v6639 = vrot.slane %v4727, 1
      %v6640 = vrot.slane %v4728, 1
      %v6641 = vsel %vm2984, %v6639, %v6640
      %v6642 = vrot.slane %v4871, 1
      %v6643 = vrot.slane %v4872, 1
      %v6644 = vsel %vm2984, %v6642, %v6643
      %v6645 = vrot.slane %v4585, 1
      %v6646 = vrot.slane %v4586, 1
      %v6647 = vsel %vm2984, %v6645, %v6646
      %v6648 = vrot.slane %v4729, 1
      %v6649 = vrot.slane %v4730, 1
      %v6650 = vsel %vm2984, %v6648, %v6649
      %v6651 = vrot.slane %v4873, 1
      %v6652 = vrot.slane %v4874, 1
      %v6653 = vsel %vm2984, %v6651, %v6652
      %v6654 = vrot.slane %v4587, 1
      %v6655 = vrot.slane %v4588, 1
      %v6656 = vsel %vm2984, %v6654, %v6655
      %v6657 = vrot.slane %v4731, 1
      %v6658 = vrot.slane %v4732, 1
      %v6659 = vsel %vm2984, %v6657, %v6658
      %v6660 = vrot.slane %v4875, 1
      %v6661 = vrot.slane %v4876, 1
      %v6662 = vsel %vm2984, %v6660, %v6661
      %v6663 = vrot.slane %v4589, 1
      %v6664 = vrot.slane %v4590, 1
      %v6665 = vsel %vm2984, %v6663, %v6664
      %v6666 = vrot.slane %v4733, 1
      %v6667 = vrot.slane %v4734, 1
      %v6668 = vsel %vm2984, %v6666, %v6667
      %v6669 = vrot.slane %v4877, 1
      %v6670 = vrot.slane %v4878, 1
      %v6671 = vsel %vm2984, %v6669, %v6670
      %v6672 = vrot.slane %v4591, 1
      %v6673 = vrot.slane %v4592, 1
      %v6674 = vsel %vm2984, %v6672, %v6673
      %v6675 = vrot.slane %v4735, 1
      %v6676 = vrot.slane %v4736, 1
      %v6677 = vsel %vm2984, %v6675, %v6676
      %v6678 = vrot.slane %v4879, 1
      %v6679 = vrot.slane %v4880, 1
      %v6680 = vsel %vm2984, %v6678, %v6679
      %v6681 = vrot.slane %v4593, 1
      %v6682 = vrot.slane %v4594, 1
      %v6683 = vsel %vm2984, %v6681, %v6682
      %v6684 = vrot.slane %v4737, 1
      %v6685 = vrot.slane %v4738, 1
      %v6686 = vsel %vm2984, %v6684, %v6685
      %v6687 = vrot.slane %v4881, 1
      %v6688 = vrot.slane %v4882, 1
      %v6689 = vsel %vm2984, %v6687, %v6688
      %v6690 = vrot.slane %v4595, 1
      %v6691 = vrot.slane %v4596, 1
      %v6692 = vsel %vm2984, %v6690, %v6691
      %v6693 = vrot.slane %v4739, 1
      %v6694 = vrot.slane %v4740, 1
      %v6695 = vsel %vm2984, %v6693, %v6694
      %v6696 = vrot.slane %v4883, 1
      %v6697 = vrot.slane %v4884, 1
      %v6698 = vsel %vm2984, %v6696, %v6697
      %s6747 = scalar_lea.vmem %s1, 960
      %v6748 = vld [vmem:[%s6747] sm:$0xf]
      %v6749 = vld [vmem:[%s6747 + $0x4] sm:$0xf]
      %v6750 = vld [vmem:[%s6747 + $0x8] sm:$0xf]
      %v6751 = vld [vmem:[%s6747 + $0xc] sm:$0xf]
      %v6752 = vld [vmem:[%s6747 + $0x10] sm:$0xf]
      %v6753 = vld [vmem:[%s6747 + $0x14] sm:$0xf]
      %v6754 = vld [vmem:[%s6747 + $0x18] sm:$0xf]
      %v6755 = vld [vmem:[%s6747 + $0x1c] sm:$0xf]
      %v6756 = vld [vmem:[%s6747 + $0x20] sm:$0xf]
      %v6757 = vld [vmem:[%s6747 + $0x24] sm:$0xf]
      %v6758 = vld [vmem:[%s6747 + $0x28] sm:$0xf]
      %v6759 = vld [vmem:[%s6747 + $0x2c] sm:$0xf]
      %v6760 = vld [vmem:[%s6747 + $0x30] sm:$0xf]
      %v6761 = vld [vmem:[%s6747 + $0x34] sm:$0xf]
      %v6762 = vld [vmem:[%s6747 + $0x38] sm:$0xf]
      %v6763 = vld [vmem:[%s6747 + $0x3c] sm:$0xf]
      %v6764 = vld [vmem:[%s6747 + $0x40] sm:$0xf]
      %v6765 = vld [vmem:[%s6747 + $0x44] sm:$0xf]
      %v6766 = vld [vmem:[%s6747 + $0x48] sm:$0xf]
      %v6767 = vld [vmem:[%s6747 + $0x4c] sm:$0xf]
      %v6768 = vld [vmem:[%s6747 + $0x50] sm:$0xf]
      %v6769 = vld [vmem:[%s6747 + $0x54] sm:$0xf]
      %v6770 = vld [vmem:[%s6747 + $0x58] sm:$0xf]
      %v6771 = vld [vmem:[%s6747 + $0x5c] sm:$0xf]
      %v6772 = vld [vmem:[%s6747 + $0x60] sm:$0xf]
      %v6773 = vld [vmem:[%s6747 + $0x64] sm:$0xf]
      %v6774 = vld [vmem:[%s6747 + $0x68] sm:$0xf]
      %v6775 = vld [vmem:[%s6747 + $0x6c] sm:$0xf]
      %v6776 = vld [vmem:[%s6747 + $0x70] sm:$0xf]
      %v6777 = vld [vmem:[%s6747 + $0x74] sm:$0xf]
      %v6778 = vld [vmem:[%s6747 + $0x78] sm:$0xf]
      %v6779 = vld [vmem:[%s6747 + $0x7c] sm:$0xf]
      %v6780 = vld [vmem:[%s6747 + $0x80] sm:$0xf]
      %v6781 = vld [vmem:[%s6747 + $0x84] sm:$0xf]
      %v6782 = vld [vmem:[%s6747 + $0x88] sm:$0xf]
      %v6783 = vld [vmem:[%s6747 + $0x8c] sm:$0xf]
      %v6784 = vld [vmem:[%s6747 + $0x90] sm:$0xf]
      %v6785 = vld [vmem:[%s6747 + $0x94] sm:$0xf]
      %v6786 = vld [vmem:[%s6747 + $0x98] sm:$0xf]
      %v6787 = vld [vmem:[%s6747 + $0x9c] sm:$0xf]
      %v6788 = vld [vmem:[%s6747 + $0xa0] sm:$0xf]
      %v6789 = vld [vmem:[%s6747 + $0xa4] sm:$0xf]
      %v6790 = vld [vmem:[%s6747 + $0xa8] sm:$0xf]
      %v6791 = vld [vmem:[%s6747 + $0xac] sm:$0xf]
      %v6792 = vld [vmem:[%s6747 + $0xb0] sm:$0xf]
      %v6793 = vld [vmem:[%s6747 + $0xb4] sm:$0xf]
      %v6794 = vld [vmem:[%s6747 + $0xb8] sm:$0xf]
      %v6795 = vld [vmem:[%s6747 + $0xbc] sm:$0xf]
      %v6844 = vunpack.c.l.b16 %v6748
      %v6845 = vunpack.c.l.b16 %v6749
      %v6846 = vunpack.c.l.b16 %v6750
      %v6847 = vunpack.c.l.b16 %v6751
      %v6848 = vunpack.c.l.b16 %v6752
      %v6849 = vunpack.c.l.b16 %v6753
      %v6850 = vunpack.c.l.b16 %v6754
      %v6851 = vunpack.c.l.b16 %v6755
      %v6852 = vunpack.c.l.b16 %v6756
      %v6853 = vunpack.c.l.b16 %v6757
      %v6854 = vunpack.c.l.b16 %v6758
      %v6855 = vunpack.c.l.b16 %v6759
      %v6856 = vunpack.c.l.b16 %v6760
      %v6857 = vunpack.c.l.b16 %v6761
      %v6858 = vunpack.c.l.b16 %v6762
      %v6859 = vunpack.c.l.b16 %v6763
      %v6860 = vunpack.c.l.b16 %v6764
      %v6861 = vunpack.c.l.b16 %v6765
      %v6862 = vunpack.c.l.b16 %v6766
      %v6863 = vunpack.c.l.b16 %v6767
      %v6864 = vunpack.c.l.b16 %v6768
      %v6865 = vunpack.c.l.b16 %v6769
      %v6866 = vunpack.c.l.b16 %v6770
      %v6867 = vunpack.c.l.b16 %v6771
      %v6868 = vunpack.c.l.b16 %v6772
      %v6869 = vunpack.c.l.b16 %v6773
      %v6870 = vunpack.c.l.b16 %v6774
      %v6871 = vunpack.c.l.b16 %v6775
      %v6872 = vunpack.c.l.b16 %v6776
      %v6873 = vunpack.c.l.b16 %v6777
      %v6874 = vunpack.c.l.b16 %v6778
      %v6875 = vunpack.c.l.b16 %v6779
      %v6876 = vunpack.c.l.b16 %v6780
      %v6877 = vunpack.c.l.b16 %v6781
      %v6878 = vunpack.c.l.b16 %v6782
      %v6879 = vunpack.c.l.b16 %v6783
      %v6880 = vunpack.c.l.b16 %v6784
      %v6881 = vunpack.c.l.b16 %v6785
      %v6882 = vunpack.c.l.b16 %v6786
      %v6883 = vunpack.c.l.b16 %v6787
      %v6884 = vunpack.c.l.b16 %v6788
      %v6885 = vunpack.c.l.b16 %v6789
      %v6886 = vunpack.c.l.b16 %v6790
      %v6887 = vunpack.c.l.b16 %v6791
      %v6888 = vunpack.c.l.b16 %v6792
      %v6889 = vunpack.c.l.b16 %v6793
      %v6890 = vunpack.c.l.b16 %v6794
      %v6891 = vunpack.c.l.b16 %v6795
      %v6892 = vpack.c.b16 %v6845, %v6844
      %v6893 = vpack.c.b16 %v6847, %v6846
      %v6894 = vpack.c.b16 %v6849, %v6848
      %v6895 = vpack.c.b16 %v6851, %v6850
      %v6896 = vpack.c.b16 %v6853, %v6852
      %v6897 = vpack.c.b16 %v6855, %v6854
      %v6898 = vpack.c.b16 %v6857, %v6856
      %v6899 = vpack.c.b16 %v6859, %v6858
      %v6900 = vpack.c.b16 %v6861, %v6860
      %v6901 = vpack.c.b16 %v6863, %v6862
      %v6902 = vpack.c.b16 %v6865, %v6864
      %v6903 = vpack.c.b16 %v6867, %v6866
      %v6904 = vpack.c.b16 %v6869, %v6868
      %v6905 = vpack.c.b16 %v6871, %v6870
      %v6906 = vpack.c.b16 %v6873, %v6872
      %v6907 = vpack.c.b16 %v6875, %v6874
      %v6908 = vpack.c.b16 %v6877, %v6876
      %v6909 = vpack.c.b16 %v6879, %v6878
      %v6910 = vpack.c.b16 %v6881, %v6880
      %v6911 = vpack.c.b16 %v6883, %v6882
      %v6912 = vpack.c.b16 %v6885, %v6884
      %v6913 = vpack.c.b16 %v6887, %v6886
      %v6914 = vpack.c.b16 %v6889, %v6888
      %v6915 = vpack.c.b16 %v6891, %v6890
      %6940 = vmatprep.subr.bf16.mxu0 0
      %6941 = vmatpush1.bf16.msra.mxu0 %v6892
      %6942 = vmatprep.subr.bf16.mxu0 0
      %6943 = vmatpush1.bf16.msra.mxu0 %v6893
      %6944 = vmatprep.subr.bf16.mxu0 0
      %6945 = vmatpush1.bf16.msra.mxu0 %v6894
      %6946 = vmatprep.subr.bf16.mxu0 0
      %6947 = vmatpush1.bf16.msra.mxu0 %v6895
      %6948 = vmatprep.subr.bf16.mxu0 0
      %6949 = vmatpush1.bf16.msra.mxu0 %v6896
      %6950 = vmatprep.subr.bf16.mxu0 0
      %6951 = vmatpush1.bf16.msra.mxu0 %v6897
      %6952 = vmatprep.subr.bf16.mxu0 0
      %6953 = vmatpush1.bf16.msra.mxu0 %v6898
      %6954 = vmatprep.subr.bf16.mxu0 0
      %6955 = vmatpush1.bf16.msra.mxu0 %v6899
      %6956 = vmatprep.subr.bf16.mxu0 0
      %6957 = vmatpush1.bf16.msra.mxu0 %v6900
      %6958 = vmatprep.subr.bf16.mxu0 0
      %6959 = vmatpush1.bf16.msra.mxu0 %v6901
      %6960 = vmatprep.subr.bf16.mxu0 0
      %6961 = vmatpush1.bf16.msra.mxu0 %v6902
      %6962 = vmatprep.subr.bf16.mxu0 0
      %6963 = vmatpush1.bf16.msra.mxu0 %v6903
      %6964 = vmatprep.subr.bf16.mxu0 0
      %6965 = vmatpush1.bf16.msra.mxu0 %v6904
      %6966 = vmatprep.subr.bf16.mxu0 0
      %6967 = vmatpush1.bf16.msra.mxu0 %v6905
      %6968 = vmatprep.subr.bf16.mxu0 0
      %6969 = vmatpush1.bf16.msra.mxu0 %v6906
      %6970 = vmatprep.subr.bf16.mxu0 0
      %6971 = vmatpush1.bf16.msra.mxu0 %v6907
      %6972 = vmatprep.mubr.bf16.mxu0 %v6560
      %6973 = vmatmul.mubr.bf16.gmra.mrb[0].mxu0 %v6557
      %v6974 = vpop.f32.mrb[0].mxu0
      %v6975 = vadd.f32 0.0, %v6974
      %v6976 = vpop.f32.mrb[0].mxu0
      %v6977 = vpop.f32.mrb[0].mxu0
      %v6978 = vadd.f32 0.0, %v6977
      %v6979 = vpop.f32.mrb[0].mxu0
      %6980 = vmatprep.mubr.bf16.mxu0 %v6569
      %6981 = vmatmul.mubr.bf16.gmra.mrb[0].mxu0 %v6566
      %v6982 = vpop.f32.mrb[0].mxu0
      %v6983 = vadd.f32 0.0, %v6982
      %v6984 = vpop.f32.mrb[0].mxu0
      %v6985 = vpop.f32.mrb[0].mxu0
      %v6986 = vadd.f32 0.0, %v6985
      %v6987 = vpop.f32.mrb[0].mxu0
      %6988 = vmatprep.mubr.bf16.mxu0 %v6578
      %6989 = vmatmul.mubr.bf16.gmra.mrb[0].mxu0 %v6575
      %v6990 = vpop.f32.mrb[0].mxu0
      %v6991 = vadd.f32 0.0, %v6990
      %v6992 = vpop.f32.mrb[0].mxu0
      %v6993 = vpop.f32.mrb[0].mxu0
      %v6994 = vadd.f32 0.0, %v6993
      %v6995 = vpop.f32.mrb[0].mxu0
      %6996 = vmatprep.mubr.bf16.mxu0 %v6587
      %6997 = vmatmul.mubr.bf16.gmra.mrb[0].mxu0 %v6584
      %v6998 = vpop.f32.mrb[0].mxu0
      %v6999 = vadd.f32 0.0, %v6998
      %v7000 = vpop.f32.mrb[0].mxu0
      %v7001 = vpop.f32.mrb[0].mxu0
      %v7002 = vadd.f32 0.0, %v7001
      %v7003 = vpop.f32.mrb[0].mxu0
      %7004 = vmatprep.mubr.bf16.mxu0 %v6596
      %7005 = vmatmul.mubr.bf16.gmra.mrb[0].mxu0 %v6593
      %v7006 = vpop.f32.mrb[0].mxu0
      %v7007 = vadd.f32 0.0, %v7006
      %v7008 = vpop.f32.mrb[0].mxu0
      %v7009 = vpop.f32.mrb[0].mxu0
      %v7010 = vadd.f32 0.0, %v7009
      %v7011 = vpop.f32.mrb[0].mxu0
      %7012 = vmatprep.mubr.bf16.mxu0 %v6605
      %7013 = vmatmul.mubr.bf16.gmra.mrb[0].mxu0 %v6602
      %v7014 = vpop.f32.mrb[0].mxu0
      %v7015 = vadd.f32 0.0, %v7014
      %v7016 = vpop.f32.mrb[0].mxu0
      %v7017 = vpop.f32.mrb[0].mxu0
      %v7018 = vadd.f32 0.0, %v7017
      %v7019 = vpop.f32.mrb[0].mxu0
      %7020 = vmatprep.mubr.bf16.mxu0 %v6614
      %7021 = vmatmul.mubr.bf16.gmra.mrb[0].mxu0 %v6611
      %v7022 = vpop.f32.mrb[0].mxu0
      %v7023 = vadd.f32 0.0, %v7022
      %v7024 = vpop.f32.mrb[0].mxu0
      %v7025 = vpop.f32.mrb[0].mxu0
      %v7026 = vadd.f32 0.0, %v7025
      %v7027 = vpop.f32.mrb[0].mxu0
      %7028 = vmatprep.mubr.bf16.mxu0 %v6623
      %7029 = vmatmul.mubr.bf16.gmra.mrb[0].mxu0 %v6620
      %v7030 = vpop.f32.mrb[0].mxu0
      %v7031 = vadd.f32 0.0, %v7030
      %v7032 = vpop.f32.mrb[0].mxu0
      %v7033 = vpop.f32.mrb[0].mxu0
      %v7034 = vadd.f32 0.0, %v7033
      %v7035 = vpop.f32.mrb[0].mxu0
      %7036 = vmatprep.mubr.bf16.mxu0 %v6632
      %7037 = vmatmul.mubr.bf16.gmra.mrb[0].mxu0 %v6629
      %v7038 = vpop.f32.mrb[0].mxu0
      %v7039 = vadd.f32 0.0, %v7038
      %v7040 = vpop.f32.mrb[0].mxu0
      %v7041 = vpop.f32.mrb[0].mxu0
      %v7042 = vadd.f32 0.0, %v7041
      %v7043 = vpop.f32.mrb[0].mxu0
      %7044 = vmatprep.mubr.bf16.mxu0 %v6641
      %7045 = vmatmul.mubr.bf16.gmra.mrb[0].mxu0 %v6638
      %v7046 = vpop.f32.mrb[0].mxu0
      %v7047 = vadd.f32 0.0, %v7046
      %v7048 = vpop.f32.mrb[0].mxu0
      %v7049 = vpop.f32.mrb[0].mxu0
      %v7050 = vadd.f32 0.0, %v7049
      %v7051 = vpop.f32.mrb[0].mxu0
      %7052 = vmatprep.mubr.bf16.mxu0 %v6650
      %7053 = vmatmul.mubr.bf16.gmra.mrb[0].mxu0 %v6647
      %v7054 = vpop.f32.mrb[0].mxu0
      %v7055 = vadd.f32 0.0, %v7054
      %v7056 = vpop.f32.mrb[0].mxu0
      %v7057 = vpop.f32.mrb[0].mxu0
      %v7058 = vadd.f32 0.0, %v7057
      %v7059 = vpop.f32.mrb[0].mxu0
      %7060 = vmatprep.mubr.bf16.mxu0 %v6659
      %7061 = vmatmul.mubr.bf16.gmra.mrb[0].mxu0 %v6656
      %v7062 = vpop.f32.mrb[0].mxu0
      %v7063 = vadd.f32 0.0, %v7062
      %v7064 = vpop.f32.mrb[0].mxu0
      %v7065 = vpop.f32.mrb[0].mxu0
      %v7066 = vadd.f32 0.0, %v7065
      %v7067 = vpop.f32.mrb[0].mxu0
      %7068 = vmatprep.mubr.bf16.mxu0 %v6668
      %7069 = vmatmul.mubr.bf16.gmra.mrb[0].mxu0 %v6665
      %v7070 = vpop.f32.mrb[0].mxu0
      %v7071 = vadd.f32 0.0, %v7070
      %v7072 = vpop.f32.mrb[0].mxu0
      %v7073 = vpop.f32.mrb[0].mxu0
      %v7074 = vadd.f32 0.0, %v7073
      %v7075 = vpop.f32.mrb[0].mxu0
      %7076 = vmatprep.mubr.bf16.mxu0 %v6677
      %7077 = vmatmul.mubr.bf16.gmra.mrb[0].mxu0 %v6674
      %v7078 = vpop.f32.mrb[0].mxu0
      %v7079 = vadd.f32 0.0, %v7078
      %v7080 = vpop.f32.mrb[0].mxu0
      %v7081 = vpop.f32.mrb[0].mxu0
      %v7082 = vadd.f32 0.0, %v7081
      %v7083 = vpop.f32.mrb[0].mxu0
      %7084 = vmatprep.mubr.bf16.mxu0 %v6686
      %7085 = vmatmul.mubr.bf16.gmra.mrb[0].mxu0 %v6683
      %v7086 = vpop.f32.mrb[0].mxu0
      %v7087 = vadd.f32 0.0, %v7086
      %v7088 = vpop.f32.mrb[0].mxu0
      %v7089 = vpop.f32.mrb[0].mxu0
      %v7090 = vadd.f32 0.0, %v7089
      %v7091 = vpop.f32.mrb[0].mxu0
      %7092 = vmatprep.mubr.bf16.mxu0 %v6695
      %7093 = vmatmul.mubr.bf16.gmra.mrb[0].mxu0 %v6692
      %v7094 = vpop.f32.mrb[0].mxu0
      %v7095 = vadd.f32 0.0, %v7094
      %v7096 = vpop.f32.mrb[0].mxu0
      %v7097 = vpop.f32.mrb[0].mxu0
      %v7098 = vadd.f32 0.0, %v7097
      %v7099 = vpop.f32.mrb[0].mxu0
      %7100 = vdwg.mxu0
      %7101 = vmatprep.subr.bf16.mxu0 0
      %7102 = vmatpush1.bf16.msra.mxu0 %v6908
      %7103 = vmatprep.subr.bf16.mxu0 0
      %7104 = vmatpush1.bf16.msra.mxu0 %v6909
      %7105 = vmatprep.subr.bf16.mxu0 0
      %7106 = vmatpush1.bf16.msra.mxu0 %v6910
      %7107 = vmatprep.subr.bf16.mxu0 0
      %7108 = vmatpush1.bf16.msra.mxu0 %v6911
      %7109 = vmatprep.subr.bf16.mxu0 0
      %7110 = vmatpush1.bf16.msra.mxu0 %v6912
      %7111 = vmatprep.subr.bf16.mxu0 0
      %7112 = vmatpush1.bf16.msra.mxu0 %v6913
      %7113 = vmatprep.subr.bf16.mxu0 0
      %7114 = vmatpush1.bf16.msra.mxu0 %v6914
      %7115 = vmatprep.subr.bf16.mxu0 0
      %7116 = vmatpush1.bf16.msra.mxu0 %v6915
      %7117 = vmatprep.subr.bf16.mxu0 0
      %7118 = vmatpush1.bf16.msra.mxu0 0
      %7119 = vmatprep.subr.bf16.mxu0 0
      %7120 = vmatpush1.bf16.msra.mxu0 0
      %7121 = vmatprep.subr.bf16.mxu0 0
      %7122 = vmatpush1.bf16.msra.mxu0 0
      %7123 = vmatprep.subr.bf16.mxu0 0
      %7124 = vmatpush1.bf16.msra.mxu0 0
      %7125 = vmatprep.subr.bf16.mxu0 0
      %7126 = vmatpush1.bf16.msra.mxu0 0
      %7127 = vmatprep.subr.bf16.mxu0 0
      %7128 = vmatpush1.bf16.msra.mxu0 0
      %7129 = vmatprep.subr.bf16.mxu0 0
      %7130 = vmatpush1.bf16.msra.mxu0 0
      %7131 = vmatprep.subr.bf16.mxu0 0
      %7132 = vmatpush1.bf16.msra.mxu0 0
      %7133 = vmatprep.mubr.bf16.mxu0 0
      %7134 = vmatmul.mubr.bf16.gmra.mrb[0].mxu0 %v6563
      %v7135 = vpop.f32.mrb[0].mxu0
      %v7136 = vadd.f32 %v6975, %v7135
      %v7137 = vpop.f32.mrb[0].mxu0
      %v7138 = vpop.f32.mrb[0].mxu0
      %v7139 = vadd.f32 %v6978, %v7138
      %v7140 = vpop.f32.mrb[0].mxu0
      %7141 = vmatprep.mubr.bf16.mxu0 0
      %7142 = vmatmul.mubr.bf16.gmra.mrb[0].mxu0 %v6572
      %v7143 = vpop.f32.mrb[0].mxu0
      %v7144 = vadd.f32 %v6983, %v7143
      %v7145 = vpop.f32.mrb[0].mxu0
      %v7146 = vpop.f32.mrb[0].mxu0
      %v7147 = vadd.f32 %v6986, %v7146
      %v7148 = vpop.f32.mrb[0].mxu0
      %7149 = vmatprep.mubr.bf16.mxu0 0
      %7150 = vmatmul.mubr.bf16.gmra.mrb[0].mxu0 %v6581
      %v7151 = vpop.f32.mrb[0].mxu0
      %v7152 = vadd.f32 %v6991, %v7151
      %v7153 = vpop.f32.mrb[0].mxu0
      %v7154 = vpop.f32.mrb[0].mxu0
      %v7155 = vadd.f32 %v6994, %v7154
      %v7156 = vpop.f32.mrb[0].mxu0
      %7157 = vmatprep.mubr.bf16.mxu0 0
      %7158 = vmatmul.mubr.bf16.gmra.mrb[0].mxu0 %v6590
      %v7159 = vpop.f32.mrb[0].mxu0
      %v7160 = vadd.f32 %v6999, %v7159
      %v7161 = vpop.f32.mrb[0].mxu0
      %v7162 = vpop.f32.mrb[0].mxu0
      %v7163 = vadd.f32 %v7002, %v7162
      %v7164 = vpop.f32.mrb[0].mxu0
      %7165 = vmatprep.mubr.bf16.mxu0 0
      %7166 = vmatmul.mubr.bf16.gmra.mrb[0].mxu0 %v6599
      %v7167 = vpop.f32.mrb[0].mxu0
      %v7168 = vadd.f32 %v7007, %v7167
      %v7169 = vpop.f32.mrb[0].mxu0
      %v7170 = vpop.f32.mrb[0].mxu0
      %v7171 = vadd.f32 %v7010, %v7170
      %v7172 = vpop.f32.mrb[0].mxu0
      %7173 = vmatprep.mubr.bf16.mxu0 0
      %7174 = vmatmul.mubr.bf16.gmra.mrb[0].mxu0 %v6608
      %v7175 = vpop.f32.mrb[0].mxu0
      %v7176 = vadd.f32 %v7015, %v7175
      %v7177 = vpop.f32.mrb[0].mxu0
      %v7178 = vpop.f32.mrb[0].mxu0
      %v7179 = vadd.f32 %v7018, %v7178
      %v7180 = vpop.f32.mrb[0].mxu0
      %7181 = vmatprep.mubr.bf16.mxu0 0
      %7182 = vmatmul.mubr.bf16.gmra.mrb[0].mxu0 %v6617
      %v7183 = vpop.f32.mrb[0].mxu0
      %v7184 = vadd.f32 %v7023, %v7183
      %v7185 = vpop.f32.mrb[0].mxu0
      %v7186 = vpop.f32.mrb[0].mxu0
      %v7187 = vadd.f32 %v7026, %v7186
      %v7188 = vpop.f32.mrb[0].mxu0
      %7189 = vmatprep.mubr.bf16.mxu0 0
      %7190 = vmatmul.mubr.bf16.gmra.mrb[0].mxu0 %v6626
      %v7191 = vpop.f32.mrb[0].mxu0
      %v7192 = vadd.f32 %v7031, %v7191
      %v7193 = vpop.f32.mrb[0].mxu0
      %v7194 = vpop.f32.mrb[0].mxu0
      %v7195 = vadd.f32 %v7034, %v7194
      %v7196 = vpop.f32.mrb[0].mxu0
      %7197 = vmatprep.mubr.bf16.mxu0 0
      %7198 = vmatmul.mubr.bf16.gmra.mrb[0].mxu0 %v6635
      %v7199 = vpop.f32.mrb[0].mxu0
      %v7200 = vadd.f32 %v7039, %v7199
      %v7201 = vpop.f32.mrb[0].mxu0
      %v7202 = vpop.f32.mrb[0].mxu0
      %v7203 = vadd.f32 %v7042, %v7202
      %v7204 = vpop.f32.mrb[0].mxu0
      %7205 = vmatprep.mubr.bf16.mxu0 0
      %7206 = vmatmul.mubr.bf16.gmra.mrb[0].mxu0 %v6644
      %v7207 = vpop.f32.mrb[0].mxu0
      %v7208 = vadd.f32 %v7047, %v7207
      %v7209 = vpop.f32.mrb[0].mxu0
      %v7210 = vpop.f32.mrb[0].mxu0
      %v7211 = vadd.f32 %v7050, %v7210
      %v7212 = vpop.f32.mrb[0].mxu0
      %7213 = vmatprep.mubr.bf16.mxu0 0
      %7214 = vmatmul.mubr.bf16.gmra.mrb[0].mxu0 %v6653
      %v7215 = vpop.f32.mrb[0].mxu0
      %v7216 = vadd.f32 %v7055, %v7215
      %v7217 = vpop.f32.mrb[0].mxu0
      %v7218 = vpop.f32.mrb[0].mxu0
      %v7219 = vadd.f32 %v7058, %v7218
      %v7220 = vpop.f32.mrb[0].mxu0
      %7221 = vmatprep.mubr.bf16.mxu0 0
      %7222 = vmatmul.mubr.bf16.gmra.mrb[0].mxu0 %v6662
      %v7223 = vpop.f32.mrb[0].mxu0
      %v7224 = vadd.f32 %v7063, %v7223
      %v7225 = vpop.f32.mrb[0].mxu0
      %v7226 = vpop.f32.mrb[0].mxu0
      %v7227 = vadd.f32 %v7066, %v7226
      %v7228 = vpop.f32.mrb[0].mxu0
      %7229 = vmatprep.mubr.bf16.mxu0 0
      %7230 = vmatmul.mubr.bf16.gmra.mrb[0].mxu0 %v6671
      %v7231 = vpop.f32.mrb[0].mxu0
      %v7232 = vadd.f32 %v7071, %v7231
      %v7233 = vpop.f32.mrb[0].mxu0
      %v7234 = vpop.f32.mrb[0].mxu0
      %v7235 = vadd.f32 %v7074, %v7234
      %v7236 = vpop.f32.mrb[0].mxu0
      %7237 = vmatprep.mubr.bf16.mxu0 0
      %7238 = vmatmul.mubr.bf16.gmra.mrb[0].mxu0 %v6680
      %v7239 = vpop.f32.mrb[0].mxu0
      %v7240 = vadd.f32 %v7079, %v7239
      %v7241 = vpop.f32.mrb[0].mxu0
      %v7242 = vpop.f32.mrb[0].mxu0
      %v7243 = vadd.f32 %v7082, %v7242
      %v7244 = vpop.f32.mrb[0].mxu0
      %7245 = vmatprep.mubr.bf16.mxu0 0
      %7246 = vmatmul.mubr.bf16.gmra.mrb[0].mxu0 %v6689
      %v7247 = vpop.f32.mrb[0].mxu0
      %v7248 = vadd.f32 %v7087, %v7247
      %v7249 = vpop.f32.mrb[0].mxu0
      %v7250 = vpop.f32.mrb[0].mxu0
      %v7251 = vadd.f32 %v7090, %v7250
      %v7252 = vpop.f32.mrb[0].mxu0
      %7253 = vmatprep.mubr.bf16.mxu0 0
      %7254 = vmatmul.mubr.bf16.gmra.mrb[0].mxu0 %v6698
      %v7255 = vpop.f32.mrb[0].mxu0
      %v7256 = vadd.f32 %v7095, %v7255
      %v7257 = vpop.f32.mrb[0].mxu0
      %v7258 = vpop.f32.mrb[0].mxu0
      %v7259 = vadd.f32 %v7098, %v7258
      %v7260 = vpop.f32.mrb[0].mxu0
      %7261 = vdwg.mxu0
      %v7262 = vadd.f32 %v6429, %v7136
      %v7263 = vadd.f32 %v6432, %v7139
      %v7264 = vadd.f32 %v6437, %v7144
      %v7265 = vadd.f32 %v6440, %v7147
      %v7266 = vadd.f32 %v6445, %v7152
      %v7267 = vadd.f32 %v6448, %v7155
      %v7268 = vadd.f32 %v6453, %v7160
      %v7269 = vadd.f32 %v6456, %v7163
      %v7270 = vadd.f32 %v6461, %v7168
      %v7271 = vadd.f32 %v6464, %v7171
      %v7272 = vadd.f32 %v6469, %v7176
      %v7273 = vadd.f32 %v6472, %v7179
      %v7274 = vadd.f32 %v6477, %v7184
      %v7275 = vadd.f32 %v6480, %v7187
      %v7276 = vadd.f32 %v6485, %v7192
      %v7277 = vadd.f32 %v6488, %v7195
      %v7278 = vadd.f32 %v6493, %v7200
      %v7279 = vadd.f32 %v6496, %v7203
      %v7280 = vadd.f32 %v6501, %v7208
      %v7281 = vadd.f32 %v6504, %v7211
      %v7282 = vadd.f32 %v6509, %v7216
      %v7283 = vadd.f32 %v6512, %v7219
      %v7284 = vadd.f32 %v6517, %v7224
      %v7285 = vadd.f32 %v6520, %v7227
      %v7286 = vadd.f32 %v6525, %v7232
      %v7287 = vadd.f32 %v6528, %v7235
      %v7288 = vadd.f32 %v6533, %v7240
      %v7289 = vadd.f32 %v6536, %v7243
      %v7290 = vadd.f32 %v6541, %v7248
      %v7291 = vadd.f32 %v6544, %v7251
      %v7292 = vadd.f32 %v6549, %v7256
      %v7293 = vadd.f32 %v6552, %v7259
      %s7294 = scalar_lea.vmem %s2, 1
      %v7295 = vld [vmem:[%s7294] sm:$0x1]
      %v7297 = vlaneseq
      %v7298 = vshrl.u32 %v7297, 7
      %v7299 = vsub.s32 0, %v7298
      %v7300 = vrot.slane %v7295, %v7299
      %v7302 = vadd.f32 %v7262, %v7300
      %v7303 = vadd.f32 %v7263, %v7300
      %v7304 = vadd.f32 %v7264, %v7300
      %v7305 = vadd.f32 %v7265, %v7300
      %v7306 = vadd.f32 %v7266, %v7300
      %v7307 = vadd.f32 %v7267, %v7300
      %v7308 = vadd.f32 %v7268, %v7300
      %v7309 = vadd.f32 %v7269, %v7300
      %v7310 = vadd.f32 %v7270, %v7300
      %v7311 = vadd.f32 %v7271, %v7300
      %v7312 = vadd.f32 %v7272, %v7300
      %v7313 = vadd.f32 %v7273, %v7300
      %v7314 = vadd.f32 %v7274, %v7300
      %v7315 = vadd.f32 %v7275, %v7300
      %v7316 = vadd.f32 %v7276, %v7300
      %v7317 = vadd.f32 %v7277, %v7300
      %v7318 = vadd.f32 %v7278, %v7300
      %v7319 = vadd.f32 %v7279, %v7300
      %v7320 = vadd.f32 %v7280, %v7300
      %v7321 = vadd.f32 %v7281, %v7300
      %v7322 = vadd.f32 %v7282, %v7300
      %v7323 = vadd.f32 %v7283, %v7300
      %v7324 = vadd.f32 %v7284, %v7300
      %v7325 = vadd.f32 %v7285, %v7300
      %v7326 = vadd.f32 %v7286, %v7300
      %v7327 = vadd.f32 %v7287, %v7300
      %v7328 = vadd.f32 %v7288, %v7300
      %v7329 = vadd.f32 %v7289, %v7300
      %v7330 = vadd.f32 %v7290, %v7300
      %v7331 = vadd.f32 %v7291, %v7300
      %v7332 = vadd.f32 %v7292, %v7300
      %v7333 = vadd.f32 %v7293, %v7300
      %v7334 = vmax.f32 %v7302, 0.0
      %v7335 = vmax.f32 %v7303, 0.0
      %v7336 = vmax.f32 %v7304, 0.0
      %v7337 = vmax.f32 %v7305, 0.0
      %v7338 = vmax.f32 %v7306, 0.0
      %v7339 = vmax.f32 %v7307, 0.0
      %v7340 = vmax.f32 %v7308, 0.0
      %v7341 = vmax.f32 %v7309, 0.0
      %v7342 = vmax.f32 %v7310, 0.0
      %v7343 = vmax.f32 %v7311, 0.0
      %v7344 = vmax.f32 %v7312, 0.0
      %v7345 = vmax.f32 %v7313, 0.0
      %v7346 = vmax.f32 %v7314, 0.0
      %v7347 = vmax.f32 %v7315, 0.0
      %v7348 = vmax.f32 %v7316, 0.0
      %v7349 = vmax.f32 %v7317, 0.0
      %v7350 = vmax.f32 %v7318, 0.0
      %v7351 = vmax.f32 %v7319, 0.0
      %v7352 = vmax.f32 %v7320, 0.0
      %v7353 = vmax.f32 %v7321, 0.0
      %v7354 = vmax.f32 %v7322, 0.0
      %v7355 = vmax.f32 %v7323, 0.0
      %v7356 = vmax.f32 %v7324, 0.0
      %v7357 = vmax.f32 %v7325, 0.0
      %v7358 = vmax.f32 %v7326, 0.0
      %v7359 = vmax.f32 %v7327, 0.0
      %v7360 = vmax.f32 %v7328, 0.0
      %v7361 = vmax.f32 %v7329, 0.0
      %v7362 = vmax.f32 %v7330, 0.0
      %v7363 = vmax.f32 %v7331, 0.0
      %v7364 = vmax.f32 %v7332, 0.0
      %v7365 = vmax.f32 %v7333, 0.0
      %7366 = vst [vmem:[%s170] sm:$0xff] %v7334
      %7367 = vst [vmem:[%s170 + $0x8] sm:$0xff] %v7335
      %7368 = vst [vmem:[%s170 + $0x10] sm:$0xff] %v7336
      %7369 = vst [vmem:[%s170 + $0x18] sm:$0xff] %v7337
      %7370 = vst [vmem:[%s170 + $0x20] sm:$0xff] %v7338
      %7371 = vst [vmem:[%s170 + $0x28] sm:$0xff] %v7339
      %7372 = vst [vmem:[%s170 + $0x30] sm:$0xff] %v7340
      %7373 = vst [vmem:[%s170 + $0x38] sm:$0xff] %v7341
      %7374 = vst [vmem:[%s170 + $0x40] sm:$0xff] %v7342
      %7375 = vst [vmem:[%s170 + $0x48] sm:$0xff] %v7343
      %7376 = vst [vmem:[%s170 + $0x50] sm:$0xff] %v7344
      %7377 = vst [vmem:[%s170 + $0x58] sm:$0xff] %v7345
      %7378 = vst [vmem:[%s170 + $0x60] sm:$0xff] %v7346
      %7379 = vst [vmem:[%s170 + $0x68] sm:$0xff] %v7347
      %7380 = vst [vmem:[%s170 + $0x70] sm:$0xff] %v7348
      %7381 = vst [vmem:[%s170 + $0x78] sm:$0xff] %v7349
      %7382 = vst [vmem:[%s170 + $0x80] sm:$0xff] %v7350
      %7383 = vst [vmem:[%s170 + $0x88] sm:$0xff] %v7351
      %7384 = vst [vmem:[%s170 + $0x90] sm:$0xff] %v7352
      %7385 = vst [vmem:[%s170 + $0x98] sm:$0xff] %v7353
      %7386 = vst [vmem:[%s170 + $0xa0] sm:$0xff] %v7354
      %7387 = vst [vmem:[%s170 + $0xa8] sm:$0xff] %v7355
      %7388 = vst [vmem:[%s170 + $0xb0] sm:$0xff] %v7356
      %7389 = vst [vmem:[%s170 + $0xb8] sm:$0xff] %v7357
      %7390 = vst [vmem:[%s170 + $0xc0] sm:$0xff] %v7358
      %7391 = vst [vmem:[%s170 + $0xc8] sm:$0xff] %v7359
      %7392 = vst [vmem:[%s170 + $0xd0] sm:$0xff] %v7360
      %7393 = vst [vmem:[%s170 + $0xd8] sm:$0xff] %v7361
      %7394 = vst [vmem:[%s170 + $0xe0] sm:$0xff] %v7362
      %7395 = vst [vmem:[%s170 + $0xe8] sm:$0xff] %v7363
      %7396 = vst [vmem:[%s170 + $0xf0] sm:$0xff] %v7364
      %7397 = vst [vmem:[%s170 + $0xf8] sm:$0xff] %v7365
      %p7398 = scmp.lt.s32.totalorder %s14, 1
      %s7399 = scalar_select %p7398, %s14, 1
      %s7400 = smul.addr %s7399, 32
      %s7401 = smul.addr %s7400, 8
      %s7402 = scalar_lea.vmem %s3, %s7401
      // Predicated region
      $region33: #{conv_block.1} parent=31 // pred_check
        %p7403 = pneg %p100
      $region34: #{conv_block.1} parent=31 // pred_check_branch
        %7405 = sbr.rel (%p7403) target = $region36
      $region35: #{conv_block.1} parent=31 // pred_region
        _
      $region36: #{conv_block.1} parent=31 // pred_fallthru
        _
    $region32: #{conv_block.1} parent=5 // pred_fallthru
      _
    %p7406 = scmp.le.s32.totalorder 2, %s9
    // Predicated region
    $region37: #{conv_block.1} parent=5 // pred_check
      %p7407 = pneg %p7406
    $region38: #{conv_block.1} parent=5 // pred_check_branch
      %7409 = sbr.rel (%p7407) target = $region40
    $region39: #{conv_block.1} parent=5 // pred_region
      %s7410 = ssub.s32 %s9, 2
      // Predicated region
      $region41: #{conv_block.1} parent=39 // pred_check
        %p7411 = pneg %p106
      $region42: #{conv_block.1} parent=39 // pred_check_branch
        %7413 = sbr.rel (%p7411) target = $region44
      $region43: #{conv_block.1} parent=39 // pred_region
        %p7414 = scmp.lt.s32.totalorder %s15, 1
        %s7415 = scalar_select %p7414, %s15, 1
        %s7416 = smul.addr %s7415, 32
        %s7417 = smul.addr %s7416, 8
        %s7418 = scalar_lea.vmem %s3, %s7417
      $region44: #{conv_block.1} parent=39 // pred_fallthru
        _
    $region40: #{conv_block.1} parent=5 // pred_fallthru
      _
  $region6: #{conv_block.1} parent=0 // loop_footer
    %s13 = sadd.s32 1, %s9
  $region7: #{conv_block.1} parent=0 // loop_footer_branch
    %8 = sbr.rel target = $region3
  $region8: #{conv_block.1} parent=0 // loop_exit
    _

</llo_original>
